<compile_context>
chip_gen: v6e
topology: v6e:2x2x1
jax: 0.10.0
libtpu: 0.0.40
codegen_flags: <defaults>
</compile_context>

<pallas_src>
import functools

import jax
import jax.numpy as jnp
from jax.experimental import pallas as pl
from jax.experimental.pallas import tpu as pltpu


MXU_DTYPE = jnp.bfloat16   # MXU operand dtype; accumulation stays float32.


def _round_up(x, m):
    return (x + m - 1) // m * m


# ----------------------------------------------------------------------------
# Fused matmul-chain kernel: y = relu?(x @ W0 + b0); y = relu?(y @ W1 + b1); ...
# Tiled over rows (M); all weights/biases stay VMEM-resident across the grid.
# ----------------------------------------------------------------------------
def _mlp_kernel(*refs, relus):
    x_ref = refs[0]
    o_ref = refs[-1]
    y = x_ref[...]
    for li, relu in enumerate(relus):
        w = refs[1 + 2 * li][...]
        b = refs[2 + 2 * li][...]
        y = jnp.dot(y.astype(w.dtype), w, preferred_element_type=jnp.float32)
        y = y + b                              # bias / ReLU epilogue in f32
        if relu:
            y = jnp.maximum(y, 0.0)
    o_ref[...] = y.astype(o_ref.dtype)


def pallas_mlp(x, layers, *, out_dtype=jnp.float32, lane_pad=False, block_m=256):
    """Chain of linear layers fused into one Pallas kernel, tiled over rows.

    x        : (M, K0) array (cast to MXU_DTYPE on entry).
    layers   : sequence of (w (K, N) f32, b (N,) f32, relu: bool).
    lane_pad : zero-pad the LAST layer's output width up to a multiple of 128
               so the HBM store is lane-dense; caller slices / ignores the pad.
    Returns (M, N_last[_padded]) in out_dtype.
    """
    M, K0 = x.shape
    relus = tuple(bool(r) for _, _, r in layers)

    ws, bs = [], []
    n_layers = len(layers)
    for li, (w, b, _) in enumerate(layers):
        w = jnp.asarray(w, jnp.float32)
        b = jnp.asarray(b, jnp.float32).reshape(1, -1)
        if lane_pad and li == n_layers - 1:
            n = w.shape[1]
            n_pad = _round_up(max(n, 128), 128)
            if n_pad != n:
                w = jnp.pad(w, ((0, 0), (0, n_pad - n)))
                b = jnp.pad(b, ((0, 0), (0, n_pad - n)))
        ws.append(w.astype(MXU_DTYPE))
        bs.append(b)                            # biases stay f32
    n_out = ws[-1].shape[1]

    # Row tiling: single full block for small M, else 256-row pipelined tiles.
    bm = M if M <= block_m else block_m
    grid = (pl.cdiv(M, bm),)

    in_specs = [pl.BlockSpec((bm, K0), lambda i: (i, 0))]
    operands = [x.astype(MXU_DTYPE)]
    for w, b in zip(ws, bs):
        in_specs.append(pl.BlockSpec(w.shape, lambda i: (0, 0)))   # resident
        in_specs.append(pl.BlockSpec(b.shape, lambda i: (0, 0)))   # resident
        operands.append(w)
        operands.append(b)

    flops = 0
    bytes_accessed = M * K0 * 2 + M * n_out * jnp.dtype(out_dtype).itemsize
    for w, b in zip(ws, bs):
        flops += 2 * M * w.shape[0] * w.shape[1]
        bytes_accessed += w.size * 2 + b.size * 4

    return pl.pallas_call(
        functools.partial(_mlp_kernel, relus=relus),
        out_shape=jax.ShapeDtypeStruct((M, n_out), out_dtype),
        grid=grid,
        in_specs=in_specs,
        out_specs=pl.BlockSpec((bm, n_out), lambda i: (i, 0)),
        compiler_params=pltpu.CompilerParams(
            dimension_semantics=("parallel",),
            vmem_limit_bytes=32 * 1024 * 1024),
        cost_estimate=pl.CostEstimate(flops=int(flops), transcendentals=0,
                                      bytes_accessed=int(bytes_accessed)),
    )(*operands)


# ----------------------------------------------------------------------------
# GRU: whole recurrence in one kernel invocation (fori_loop over time),
# recurrent gates computed with a single fused (dr, 3*dr) matmul per step.
# ----------------------------------------------------------------------------
def _gru_kernel(xg_ref, whh_ref, bhh_ref, hs_ref):
    """xg_ref : (T, B, Gp) f32  precomputed x_t @ W_ih^T + b_ih, cols [r|z|n]
                                (Gp may be lane-padded beyond 3*dr with zeros)
       whh_ref: (dr, 3*dr) f32  W_hh^T, columns [r|z|n]
       bhh_ref: (1, 3*dr)  f32
       hs_ref : (T, B, dr) f32  every h_t
    """
    T, B = xg_ref.shape[0], xg_ref.shape[1]
    dr = whh_ref.shape[0]

    def step(t, h_prev):
        xg_t = xg_ref[t]                                           # (B, Gp)
        g = jnp.dot(h_prev, whh_ref[...],
                    preferred_element_type=jnp.float32) + bhh_ref[...]
        r = jax.nn.sigmoid(xg_t[:, 0 * dr:1 * dr] + g[:, 0 * dr:1 * dr])
        z = jax.nn.sigmoid(xg_t[:, 1 * dr:2 * dr] + g[:, 1 * dr:2 * dr])
        n = jnp.tanh(xg_t[:, 2 * dr:3 * dr] + r * g[:, 2 * dr:3 * dr])
        h = (1.0 - z) * n + z * h_prev
        hs_ref[t] = h
        return h

    h0 = jnp.zeros((B, dr), jnp.float32)
    jax.lax.fori_loop(0, T, step, h0)


def pallas_gru(xg, w_hh_t, b_hh):
    """xg: (T, B, Gp) f32, w_hh_t: (dr, 3*dr), b_hh: (1, 3*dr) -> (T, B, dr)."""
    T, B, Gp = xg.shape
    dr = w_hh_t.shape[0]
    return pl.pallas_call(
        _gru_kernel,
        out_shape=jax.ShapeDtypeStruct((T, B, dr), jnp.float32),
        grid=(1,),
        in_specs=[
            pl.BlockSpec((T, B, Gp), lambda i: (0, 0, 0)),
            pl.BlockSpec((dr, 3 * dr), lambda i: (0, 0)),
            pl.BlockSpec((1, 3 * dr), lambda i: (0, 0)),
        ],
        out_specs=pl.BlockSpec((T, B, dr), lambda i: (0, 0, 0)),
        compiler_params=pltpu.CompilerParams(
            dimension_semantics=("arbitrary",)),
    )(xg.astype(jnp.float32), w_hh_t.astype(jnp.float32),
      b_hh.astype(jnp.float32))


# ----------------------------------------------------------------------------
# Conv2d (PyTorch-equivalent) = single patches op + fused Pallas matmul (NHWC)
# ----------------------------------------------------------------------------
def conv2d_nhwc(x, w, b, *, stride, pad, relu, out_dtype):
    """x: (N, H, W, C); w: PyTorch (out_c, C, kh, kw); returns (N, OH, OW, out_c)."""
    x = x.astype(MXU_DTYPE)                       # halves patch-matrix HBM bytes
    N, H, W, C = x.shape
    out_c, _, kh, kw = w.shape
    # One XLA op producing the im2col matrix; its feature ordering is
    # (C, KH, KW) — exactly PyTorch's Conv2d weight-flatten order.
    patches = jax.lax.conv_general_dilated_patches(
        x, (kh, kw), (stride, stride),
        padding=((pad, pad), (pad, pad)),
        dimension_numbers=("NHWC", "HWIO", "NHWC"))
    oh, ow = patches.shape[1], patches.shape[2]
    pmat = patches.reshape(N * oh * ow, C * kh * kw)
    wmat = w.reshape(out_c, C * kh * kw).T        # (C*kh*kw, out_c)
    y = pallas_mlp(pmat, [(wmat, b, relu)], out_dtype=out_dtype, lane_pad=False)
    return y.reshape(N, oh, ow, out_c)


# ----------------------------------------------------------------------------
# Parameter initialization (deterministic, PyTorch-like uniform fan-in init)
# ----------------------------------------------------------------------------
def _uniform(key, shape, fan_in):
    bound = 1.0 / jnp.sqrt(jnp.float32(fan_in))
    return jax.random.uniform(key, shape, jnp.float32, -bound, bound)


def init_params(key, settings):
    c, d1, d2 = settings["channels"], settings["d1"], settings["d2"]
    dl, dr, out_a = settings["dl"], settings["dr"], settings["output_a"]
    feat = settings["feat_shape"]
    ks = jax.random.split(key, 16)
    p = {}
    p["conv1_w"] = _uniform(ks[0], (d1, c, 8, 8), c * 64)
    p["conv1_b"] = _uniform(ks[1], (d1,), c * 64)
    p["conv2_w"] = _uniform(ks[2], (d2, d1, 4, 4), d1 * 16)
    p["conv2_b"] = _uniform(ks[3], (d2,), d1 * 16)
    p["lin_w"] = _uniform(ks[4], (dl, feat), feat)
    p["lin_b"] = _uniform(ks[5], (dl,), feat)
    p["gru_w_ih"] = _uniform(ks[6], (3 * dr, dl), dr)
    p["gru_w_hh"] = _uniform(ks[7], (3 * dr, dr), dr)
    p["gru_b_ih"] = _uniform(ks[8], (3 * dr,), dr)
    p["gru_b_hh"] = _uniform(ks[9], (3 * dr,), dr)
    p["h1_w"] = _uniform(ks[10], (128, dr), dr)
    p["h1_b"] = _uniform(ks[11], (128,), dr)
    p["h2_w"] = _uniform(ks[12], (64, 128), 128)
    p["h2_b"] = _uniform(ks[13], (64,), 128)
    p["out_w"] = _uniform(ks[14], (out_a, 64), 64)
    p["out_b"] = _uniform(ks[15], (out_a,), 64)
    return p


# ----------------------------------------------------------------------------
# ActorIMPALA forward
# ----------------------------------------------------------------------------
def actor_impala_forward(params, rgb, settings):
    """rgb: (T, B, 3, 84, 84) f32 -> (logits (T, B, output_a), hn (1, B, dr))."""
    d2 = settings["d2"]
    dl, dr, out_a = settings["dl"], settings["dr"], settings["output_a"]
    feat = settings["feat_shape"]
    T, B = rgb.shape[0], rgb.shape[1]
    N = T * B

    # Single layout change: NCHW -> NHWC on the (smallest) raw input; every
    # later activation stays row-major (rows, channels).
    inp = rgb.reshape(N, 3, 84, 84).transpose(0, 2, 3, 1)            # (N,84,84,3)

    # --- FeaturesExtractorIMPALA ---
    x1 = conv2d_nhwc(inp, params["conv1_w"], params["conv1_b"],
                     stride=4, pad=0, relu=True,
                     out_dtype=jnp.bfloat16)                         # (N,20,20,d1)
    # ReLU fused into conv2 (ReLU o maxpool == maxpool o ReLU, both max ops).
    x2 = conv2d_nhwc(x1, params["conv2_w"], params["conv2_b"],
                     stride=2, pad=1, relu=True,
                     out_dtype=jnp.bfloat16)                         # (N,10,10,d2)
    xp = x2.reshape(N, 5, 2, 5, 2, d2).max(axis=(2, 4))              # maxpool 2x2
    features = xp.reshape(N, feat)                                   # (H,W,C) flatten

    # lin's columns reordered ONCE from PyTorch (C,H,W) to our (H,W,C) flatten.
    side = 5
    lin_w_hwc = (params["lin_w"].reshape(dl, d2, side, side)
                 .transpose(0, 2, 3, 1).reshape(dl, feat))

    # --- Actor head ---
    # Fused lin+ReLU -> GRU input-gate matmul; final width lane-padded to 128.
    xg = pallas_mlp(
        features,
        [(lin_w_hwc.T, params["lin_b"], True),
         (params["gru_w_ih"].T, params["gru_b_ih"], False)],
        out_dtype=jnp.float32, lane_pad=True)                        # (N, >=96)
    xg = xg.reshape(T, B, xg.shape[1])                               # no transpose

    w_hh_t = params["gru_w_hh"].T                                    # (dr, 3*dr) [r|z|n]
    b_hh = params["gru_b_hh"].reshape(1, 3 * dr)
    hs = pallas_gru(xg, w_hh_t, b_hh)                                # (T, B, dr)
    hn = hs[-1:, :, :]                                               # (1, B, dr)

    # Fused hidden1+ReLU -> hidden2+ReLU -> output (intermediates never hit HBM).
    logits = pallas_mlp(
        hs.reshape(N, dr),
        [(params["h1_w"].T, params["h1_b"], True),
         (params["h2_w"].T, params["h2_b"], True),
         (params["out_w"].T, params["out_b"], False)],
        out_dtype=jnp.float32, lane_pad=True)                        # (N, 128)
    logits = logits[:, :out_a].reshape(T, B, out_a)
    return logits, hn


# ----------------------------------------------------------------------------
if __name__ == "__main__":
    settings = {
        "RGB_state_space": [84, 84],
        "channels": 3,
        "d1": 8,
        "d2": 16,
        "dl": 32,
        "dr": 32,
        "output_a": 4,
    }
    # Derived geometry (matches the PyTorch __init__ arithmetic):
    w1 = (settings["RGB_state_space"][0] - 8) // 4 + 1    # 20
    w2 = (w1 - 4 + 2) // 2 + 1                            # 10
    wm = (w2 - 2) // 2 + 1                                # 5
    settings["feat_shape"] = wm * wm * settings["d2"]     # 400

    key = jax.random.PRNGKey(0)
    k_param, k_input = jax.random.split(key)
    params = init_params(k_param, settings)

    T, B = 2, 2
    rgb = jax.random.uniform(k_input, (T, B, 3, 84, 84), jnp.float32)

    fwd = jax.jit(functools.partial(actor_impala_forward, settings=settings))
    logits, hn = fwd(params, rgb)
    jax.block_until_ready((logits, hn))

    assert logits.shape == (T, B, settings["output_a"]), logits.shape
    assert hn.shape == (1, B, settings["dr"]), hn.shape
    assert bool(jnp.all(jnp.isfinite(logits))) and bool(jnp.all(jnp.isfinite(hn)))
    print("KERNEL_OK")
</pallas_src>

<mosaic_0001>
module attributes {stable_mosaic.version = 11 : i64} {
  func.func @_mlp_kernel(%arg0: i32, %arg1: memref<256x192xbf16, #tpu.memory_space<vmem>>, %arg2: memref<192x8xbf16, #tpu.memory_space<vmem>>, %arg3: memref<1x8xf32, #tpu.memory_space<vmem>>, %arg4: memref<256x8xbf16, #tpu.memory_space<vmem>>) attributes {dimension_semantics = [#tpu.dimension_semantics<parallel>], iteration_bounds = array<i64: 7>, scalar_prefetch = 0 : i64, scratch_operands = 0 : i64, tpu.core_type = #tpu.core_type<tc>, window_params = [{transform_indices = @transform_0, window_bounds = array<i64: 256, 192>}, {pipeline_mode = #tpu.pipeline_mode<synchronous>, transform_indices = @transform_1, window_bounds = array<i64: 192, 8>}, {pipeline_mode = #tpu.pipeline_mode<synchronous>, transform_indices = @transform_2, window_bounds = array<i64: 1, 8>}, {transform_indices = @transform_3, window_bounds = array<i64: 256, 8>}]} {
    %c0 = arith.constant 0 : index
    %c0_0 = arith.constant 0 : index
    %0 = vector.load %arg1[%c0, %c0_0] : memref<256x192xbf16, #tpu.memory_space<vmem>>, vector<256x192xbf16>
    %c0_1 = arith.constant 0 : index
    %c0_2 = arith.constant 0 : index
    %1 = vector.load %arg2[%c0_1, %c0_2] : memref<192x8xbf16, #tpu.memory_space<vmem>>, vector<192x8xbf16>
    %c0_3 = arith.constant 0 : index
    %c0_4 = arith.constant 0 : index
    %2 = vector.load %arg3[%c0_3, %c0_4] : memref<1x8xf32, #tpu.memory_space<vmem>>, vector<1x8xf32>
    %cst = arith.constant dense<0.000000e+00> : vector<256x8xf32>
    %3 = tpu.matmul %0, %1, %cst {dimension_numbers = #tpu.dot_dimension_numbers<[1], [0], [0], [1], [0, 0, 1, 1], [], []>} : vector<256x192xbf16>, vector<192x8xbf16>, vector<256x8xf32> -> vector<256x8xf32>
    %4 = vector.broadcast %2 : vector<1x8xf32> to vector<256x8xf32>
    %5 = arith.addf %3, %4 : vector<256x8xf32>
    %cst_5 = arith.constant 0.000000e+00 : f32
    %6 = vector.broadcast %cst_5 : f32 to vector<256x8xf32>
    %7 = arith.maximumf %5, %6 : vector<256x8xf32>
    %8 = arith.truncf %7 : vector<256x8xf32> to vector<256x8xbf16>
    %c0_6 = arith.constant 0 : index
    %c0_7 = arith.constant 0 : index
    %9 = vector.load %arg4[%c0_6, %c0_7] : memref<256x8xbf16, #tpu.memory_space<vmem>>, vector<256x8xbf16>
    tpu.vector_store %arg4[%c0_6, %c0_7], %8 {strides = array<i32>} : memref<256x8xbf16, #tpu.memory_space<vmem>>, vector<256x8xbf16>,
    return
  }
  func.func @transform_0(%arg0: i32) -> (i32, i32) {
    %c0_i32 = arith.constant 0 : i32
    %c0_i32_0 = arith.constant 0 : i32
    return %arg0, %c0_i32 : i32, i32
  }
  func.func @transform_1(%arg0: i32) -> (i32, i32) {
    %c0_i32 = arith.constant 0 : i32
    %c0_i32_0 = arith.constant 0 : i32
    %c0_i32_1 = arith.constant 0 : i32
    return %c0_i32, %c0_i32_0 : i32, i32
  }
  func.func @transform_2(%arg0: i32) -> (i32, i32) {
    %c0_i32 = arith.constant 0 : i32
    %c0_i32_0 = arith.constant 0 : i32
    %c0_i32_1 = arith.constant 0 : i32
    return %c0_i32, %c0_i32_0 : i32, i32
  }
  func.func @transform_3(%arg0: i32) -> (i32, i32) {
    %c0_i32 = arith.constant 0 : i32
    %c0_i32_0 = arith.constant 0 : i32
    return %arg0, %c0_i32 : i32, i32
  }
}

module attributes {stable_mosaic.version = 11 : i64} {
  func.func @_mlp_kernel(%arg0: i32, %arg1: memref<256x128xbf16, #tpu.memory_space<vmem>>, %arg2: memref<128x16xbf16, #tpu.memory_space<vmem>>, %arg3: memref<1x16xf32, #tpu.memory_space<vmem>>, %arg4: memref<256x16xbf16, #tpu.memory_space<vmem>>) attributes {dimension_semantics = [#tpu.dimension_semantics<parallel>], iteration_bounds = array<i64: 2>, scalar_prefetch = 0 : i64, scratch_operands = 0 : i64, tpu.core_type = #tpu.core_type<tc>, window_params = [{transform_indices = @transform_0, window_bounds = array<i64: 256, 128>}, {pipeline_mode = #tpu.pipeline_mode<synchronous>, transform_indices = @transform_1, window_bounds = array<i64: 128, 16>}, {pipeline_mode = #tpu.pipeline_mode<synchronous>, transform_indices = @transform_2, window_bounds = array<i64: 1, 16>}, {transform_indices = @transform_3, window_bounds = array<i64: 256, 16>}]} {
    %c0 = arith.constant 0 : index
    %c0_0 = arith.constant 0 : index
    %0 = vector.load %arg1[%c0, %c0_0] : memref<256x128xbf16, #tpu.memory_space<vmem>>, vector<256x128xbf16>
    %c0_1 = arith.constant 0 : index
    %c0_2 = arith.constant 0 : index
    %1 = vector.load %arg2[%c0_1, %c0_2] : memref<128x16xbf16, #tpu.memory_space<vmem>>, vector<128x16xbf16>
    %c0_3 = arith.constant 0 : index
    %c0_4 = arith.constant 0 : index
    %2 = vector.load %arg3[%c0_3, %c0_4] : memref<1x16xf32, #tpu.memory_space<vmem>>, vector<1x16xf32>
    %cst = arith.constant dense<0.000000e+00> : vector<256x16xf32>
    %3 = tpu.matmul %0, %1, %cst {dimension_numbers = #tpu.dot_dimension_numbers<[1], [0], [0], [1], [0, 0, 1, 1], [], []>} : vector<256x128xbf16>, vector<128x16xbf16>, vector<256x16xf32> -> vector<256x16xf32>
    %4 = vector.broadcast %2 : vector<1x16xf32> to vector<256x16xf32>
    %5 = arith.addf %3, %4 : vector<256x16xf32>
    %cst_5 = arith.constant 0.000000e+00 : f32
    %6 = vector.broadcast %cst_5 : f32 to vector<256x16xf32>
    %7 = arith.maximumf %5, %6 : vector<256x16xf32>
    %8 = arith.truncf %7 : vector<256x16xf32> to vector<256x16xbf16>
    %c0_6 = arith.constant 0 : index
    %c0_7 = arith.constant 0 : index
    %9 = vector.load %arg4[%c0_6, %c0_7] : memref<256x16xbf16, #tpu.memory_space<vmem>>, vector<256x16xbf16>
    tpu.vector_store %arg4[%c0_6, %c0_7], %8 {strides = array<i32>} : memref<256x16xbf16, #tpu.memory_space<vmem>>, vector<256x16xbf16>,
    return
  }
  func.func @transform_0(%arg0: i32) -> (i32, i32) {
    %c0_i32 = arith.constant 0 : i32
    %c0_i32_0 = arith.constant 0 : i32
    return %arg0, %c0_i32 : i32, i32
  }
  func.func @transform_1(%arg0: i32) -> (i32, i32) {
    %c0_i32 = arith.constant 0 : i32
    %c0_i32_0 = arith.constant 0 : i32
    %c0_i32_1 = arith.constant 0 : i32
    return %c0_i32, %c0_i32_0 : i32, i32
  }
  func.func @transform_2(%arg0: i32) -> (i32, i32) {
    %c0_i32 = arith.constant 0 : i32
    %c0_i32_0 = arith.constant 0 : i32
    %c0_i32_1 = arith.constant 0 : i32
    return %c0_i32, %c0_i32_0 : i32, i32
  }
  func.func @transform_3(%arg0: i32) -> (i32, i32) {
    %c0_i32 = arith.constant 0 : i32
    %c0_i32_0 = arith.constant 0 : i32
    return %arg0, %c0_i32 : i32, i32
  }
}

module attributes {stable_mosaic.version = 11 : i64} {
  func.func @_gru_kernel(%arg0: i32, %arg1: memref<2x2x128xf32, #tpu.memory_space<vmem>>, %arg2: memref<32x96xf32, #tpu.memory_space<vmem>>, %arg3: memref<1x96xf32, #tpu.memory_space<vmem>>, %arg4: memref<2x2x32xf32, #tpu.memory_space<vmem>>) attributes {dimension_semantics = [#tpu.dimension_semantics<arbitrary>], iteration_bounds = array<i64: 1>, scalar_prefetch = 0 : i64, scratch_operands = 0 : i64, tpu.core_type = #tpu.core_type<tc>, window_params = [{pipeline_mode = #tpu.pipeline_mode<synchronous>, transform_indices = @transform_0, window_bounds = array<i64: 2, 2, 128>}, {pipeline_mode = #tpu.pipeline_mode<synchronous>, transform_indices = @transform_1, window_bounds = array<i64: 32, 96>}, {pipeline_mode = #tpu.pipeline_mode<synchronous>, transform_indices = @transform_2, window_bounds = array<i64: 1, 96>}, {pipeline_mode = #tpu.pipeline_mode<synchronous>, transform_indices = @transform_3, window_bounds = array<i64: 2, 2, 32>}]} {
    %cst = arith.constant 0.000000e+00 : f32
    %0 = vector.broadcast %cst : f32 to vector<2x32xf32>
    %c0_i32 = arith.constant 0 : i32
    %c2_i32 = arith.constant 2 : i32
    %1 = arith.addi %c0_i32, %c2_i32 : i32
    %c1_i32 = arith.constant 1 : i32
    %2 = scf.for %arg5 = %c0_i32 to %1 step %c1_i32 iter_args(%arg6 = %0) -> (vector<2x32xf32>)  : i32 {
      %3 = arith.index_cast %arg5 : i32 to index
      %c0 = arith.constant 0 : index
      %c0_1 = arith.constant 0 : index
      %4 = vector.load %arg1[%3, %c0, %c0_1] : memref<2x2x128xf32, #tpu.memory_space<vmem>>, vector<1x2x128xf32>
      %5 = vector.shape_cast %4 : vector<1x2x128xf32> to vector<2x128xf32>
      %c0_2 = arith.constant 0 : index
      %c0_3 = arith.constant 0 : index
      %6 = vector.load %arg2[%c0_2, %c0_3] : memref<32x96xf32, #tpu.memory_space<vmem>>, vector<32x96xf32>
      %cst_4 = arith.constant dense<0.000000e+00> : vector<2x96xf32>
      %7 = tpu.matmul %arg6, %6, %cst_4 {dimension_numbers = #tpu.dot_dimension_numbers<[1], [0], [0], [1], [0, 0, 1, 1], [], []>} : vector<2x32xf32>, vector<32x96xf32>, vector<2x96xf32> -> vector<2x96xf32>
      %c0_5 = arith.constant 0 : index
      %c0_6 = arith.constant 0 : index
      %8 = vector.load %arg3[%c0_5, %c0_6] : memref<1x96xf32, #tpu.memory_space<vmem>>, vector<1x96xf32>
      %9 = vector.broadcast %8 : vector<1x96xf32> to vector<2x96xf32>
      %10 = arith.addf %7, %9 : vector<2x96xf32>
      %11 = vector.extract_strided_slice %5 {offsets = [0, 0], sizes = [2, 32], strides = [1, 1]} : vector<2x128xf32> to vector<2x32xf32>
      %12 = vector.extract_strided_slice %10 {offsets = [0, 0], sizes = [2, 32], strides = [1, 1]} : vector<2x96xf32> to vector<2x32xf32>
      %13 = arith.addf %11, %12 : vector<2x32xf32>
      %14 = arith.negf %13 : vector<2x32xf32>
      %15 = math.exp %14 : vector<2x32xf32>
      %cst_7 = arith.constant 1.000000e+00 : f32
      %16 = vector.broadcast %cst_7 : f32 to vector<2x32xf32>
      %17 = arith.addf %16, %15 : vector<2x32xf32>
      %18 = arith.divf %16, %17 : vector<2x32xf32>
      %19 = vector.extract_strided_slice %5 {offsets = [0, 32], sizes = [2, 32], strides = [1, 1]} : vector<2x128xf32> to vector<2x32xf32>
      %20 = vector.extract_strided_slice %10 {offsets = [0, 32], sizes = [2, 32], strides = [1, 1]} : vector<2x96xf32> to vector<2x32xf32>
      %21 = arith.addf %19, %20 : vector<2x32xf32>
      %22 = arith.negf %21 : vector<2x32xf32>
      %23 = math.exp %22 : vector<2x32xf32>
      %cst_8 = arith.constant 1.000000e+00 : f32
      %24 = vector.broadcast %cst_8 : f32 to vector<2x32xf32>
      %25 = arith.addf %24, %23 : vector<2x32xf32>
      %26 = arith.divf %24, %25 : vector<2x32xf32>
      %27 = vector.extract_strided_slice %5 {offsets = [0, 64], sizes = [2, 32], strides = [1, 1]} : vector<2x128xf32> to vector<2x32xf32>
      %28 = vector.extract_strided_slice %10 {offsets = [0, 64], sizes = [2, 32], strides = [1, 1]} : vector<2x96xf32> to vector<2x32xf32>
      %29 = arith.mulf %18, %28 : vector<2x32xf32>
      %30 = arith.addf %27, %29 : vector<2x32xf32>
      %31 = math.tanh %30 : vector<2x32xf32>
      %cst_9 = arith.constant 1.000000e+00 : f32
      %32 = vector.broadcast %cst_9 : f32 to vector<2x32xf32>
      %33 = arith.subf %32, %26 : vector<2x32xf32>
      %34 = arith.mulf %33, %31 : vector<2x32xf32>
      %35 = arith.mulf %26, %arg6 : vector<2x32xf32>
      %36 = arith.addf %34, %35 : vector<2x32xf32>
      %37 = arith.index_cast %arg5 : i32 to index
      %c0_10 = arith.constant 0 : index
      %c0_11 = arith.constant 0 : index
      %38 = vector.load %arg4[%37, %c0_10, %c0_11] : memref<2x2x32xf32, #tpu.memory_space<vmem>>, vector<1x2x32xf32>
      %39 = vector.shape_cast %38 : vector<1x2x32xf32> to vector<2x32xf32>
      %40 = vector.shape_cast %36 : vector<2x32xf32> to vector<1x2x32xf32>
      tpu.vector_store %arg4[%37, %c0_10, %c0_11], %40 {strides = array<i32>} : memref<2x2x32xf32, #tpu.memory_space<vmem>>, vector<1x2x32xf32>,
      scf.yield %36 : vector<2x32xf32>
    }
    %c2_i32_0 = arith.constant 2 : i32
    return
  }
  func.func @transform_0(%arg0: i32) -> (i32, i32, i32) {
    %c0_i32 = arith.constant 0 : i32
    %c0_i32_0 = arith.constant 0 : i32
    %c0_i32_1 = arith.constant 0 : i32
    %c0_i32_2 = arith.constant 0 : i32
    return %c0_i32, %c0_i32_0, %c0_i32_1 : i32, i32, i32
  }
  func.func @transform_1(%arg0: i32) -> (i32, i32) {
    %c0_i32 = arith.constant 0 : i32
    %c0_i32_0 = arith.constant 0 : i32
    %c0_i32_1 = arith.constant 0 : i32
    return %c0_i32, %c0_i32_0 : i32, i32
  }
  func.func @transform_2(%arg0: i32) -> (i32, i32) {
    %c0_i32 = arith.constant 0 : i32
    %c0_i32_0 = arith.constant 0 : i32
    %c0_i32_1 = arith.constant 0 : i32
    return %c0_i32, %c0_i32_0 : i32, i32
  }
  func.func @transform_3(%arg0: i32) -> (i32, i32, i32) {
    %c0_i32 = arith.constant 0 : i32
    %c0_i32_0 = arith.constant 0 : i32
    %c0_i32_1 = arith.constant 0 : i32
    %c0_i32_2 = arith.constant 0 : i32
    return %c0_i32, %c0_i32_0, %c0_i32_1 : i32, i32, i32
  }
}

module attributes {stable_mosaic.version = 11 : i64} {
  func.func @_mlp_kernel(%arg0: i32, %arg1: memref<4x400xbf16, #tpu.memory_space<vmem>>, %arg2: memref<400x32xbf16, #tpu.memory_space<vmem>>, %arg3: memref<1x32xf32, #tpu.memory_space<vmem>>, %arg4: memref<32x128xbf16, #tpu.memory_space<vmem>>, %arg5: memref<1x128xf32, #tpu.memory_space<vmem>>, %arg6: memref<4x128xf32, #tpu.memory_space<vmem>>) attributes {dimension_semantics = [#tpu.dimension_semantics<parallel>], iteration_bounds = array<i64: 1>, scalar_prefetch = 0 : i64, scratch_operands = 0 : i64, tpu.core_type = #tpu.core_type<tc>, window_params = [{transform_indices = @transform_0, window_bounds = array<i64: 4, 400>}, {pipeline_mode = #tpu.pipeline_mode<synchronous>, transform_indices = @transform_1, window_bounds = array<i64: 400, 32>}, {pipeline_mode = #tpu.pipeline_mode<synchronous>, transform_indices = @transform_2, window_bounds = array<i64: 1, 32>}, {pipeline_mode = #tpu.pipeline_mode<synchronous>, transform_indices = @transform_3, window_bounds = array<i64: 32, 128>}, {pipeline_mode = #tpu.pipeline_mode<synchronous>, transform_indices = @transform_4, window_bounds = array<i64: 1, 128>}, {transform_indices = @transform_5, window_bounds = array<i64: 4, 128>}]} {
    %c0 = arith.constant 0 : index
    %c0_0 = arith.constant 0 : index
    %0 = vector.load %arg1[%c0, %c0_0] : memref<4x400xbf16, #tpu.memory_space<vmem>>, vector<4x400xbf16>
    %c0_1 = arith.constant 0 : index
    %c0_2 = arith.constant 0 : index
    %1 = vector.load %arg2[%c0_1, %c0_2] : memref<400x32xbf16, #tpu.memory_space<vmem>>, vector<400x32xbf16>
    %c0_3 = arith.constant 0 : index
    %c0_4 = arith.constant 0 : index
    %2 = vector.load %arg3[%c0_3, %c0_4] : memref<1x32xf32, #tpu.memory_space<vmem>>, vector<1x32xf32>
    %cst = arith.constant dense<0.000000e+00> : vector<4x32xf32>
    %3 = tpu.matmul %0, %1, %cst {dimension_numbers = #tpu.dot_dimension_numbers<[1], [0], [0], [1], [0, 0, 1, 1], [], []>} : vector<4x400xbf16>, vector<400x32xbf16>, vector<4x32xf32> -> vector<4x32xf32>
    %4 = vector.broadcast %2 : vector<1x32xf32> to vector<4x32xf32>
    %5 = arith.addf %3, %4 : vector<4x32xf32>
    %cst_5 = arith.constant 0.000000e+00 : f32
    %6 = vector.broadcast %cst_5 : f32 to vector<4x32xf32>
    %7 = arith.maximumf %5, %6 : vector<4x32xf32>
    %c0_6 = arith.constant 0 : index
    %c0_7 = arith.constant 0 : index
    %8 = vector.load %arg4[%c0_6, %c0_7] : memref<32x128xbf16, #tpu.memory_space<vmem>>, vector<32x128xbf16>
    %c0_8 = arith.constant 0 : index
    %c0_9 = arith.constant 0 : index
    %9 = vector.load %arg5[%c0_8, %c0_9] : memref<1x128xf32, #tpu.memory_space<vmem>>, vector<1x128xf32>
    %10 = arith.truncf %7 : vector<4x32xf32> to vector<4x32xbf16>
    %cst_10 = arith.constant dense<0.000000e+00> : vector<4x128xf32>
    %11 = tpu.matmul %10, %8, %cst_10 {dimension_numbers = #tpu.dot_dimension_numbers<[1], [0], [0], [1], [0, 0, 1, 1], [], []>} : vector<4x32xbf16>, vector<32x128xbf16>, vector<4x128xf32> -> vector<4x128xf32>
    %12 = vector.broadcast %9 : vector<1x128xf32> to vector<4x128xf32>
    %13 = arith.addf %11, %12 : vector<4x128xf32>
    %c0_11 = arith.constant 0 : index
    %c0_12 = arith.constant 0 : index
    %14 = vector.load %arg6[%c0_11, %c0_12] : memref<4x128xf32, #tpu.memory_space<vmem>>, vector<4x128xf32>
    tpu.vector_store %arg6[%c0_11, %c0_12], %13 {strides = array<i32>} : memref<4x128xf32, #tpu.memory_space<vmem>>, vector<4x128xf32>,
    return
  }
  func.func @transform_0(%arg0: i32) -> (i32, i32) {
    %c0_i32 = arith.constant 0 : i32
    %c0_i32_0 = arith.constant 0 : i32
    return %arg0, %c0_i32 : i32, i32
  }
  func.func @transform_1(%arg0: i32) -> (i32, i32) {
    %c0_i32 = arith.constant 0 : i32
    %c0_i32_0 = arith.constant 0 : i32
    %c0_i32_1 = arith.constant 0 : i32
    return %c0_i32, %c0_i32_0 : i32, i32
  }
  func.func @transform_2(%arg0: i32) -> (i32, i32) {
    %c0_i32 = arith.constant 0 : i32
    %c0_i32_0 = arith.constant 0 : i32
    %c0_i32_1 = arith.constant 0 : i32
    return %c0_i32, %c0_i32_0 : i32, i32
  }
  func.func @transform_3(%arg0: i32) -> (i32, i32) {
    %c0_i32 = arith.constant 0 : i32
    %c0_i32_0 = arith.constant 0 : i32
    %c0_i32_1 = arith.constant 0 : i32
    return %c0_i32, %c0_i32_0 : i32, i32
  }
  func.func @transform_4(%arg0: i32) -> (i32, i32) {
    %c0_i32 = arith.constant 0 : i32
    %c0_i32_0 = arith.constant 0 : i32
    %c0_i32_1 = arith.constant 0 : i32
    return %c0_i32, %c0_i32_0 : i32, i32
  }
  func.func @transform_5(%arg0: i32) -> (i32, i32) {
    %c0_i32 = arith.constant 0 : i32
    %c0_i32_0 = arith.constant 0 : i32
    return %arg0, %c0_i32 : i32, i32
  }
}

module attributes {stable_mosaic.version = 11 : i64} {
  func.func @_mlp_kernel(%arg0: i32, %arg1: memref<4x32xbf16, #tpu.memory_space<vmem>>, %arg2: memref<32x128xbf16, #tpu.memory_space<vmem>>, %arg3: memref<1x128xf32, #tpu.memory_space<vmem>>, %arg4: memref<128x64xbf16, #tpu.memory_space<vmem>>, %arg5: memref<1x64xf32, #tpu.memory_space<vmem>>, %arg6: memref<64x128xbf16, #tpu.memory_space<vmem>>, %arg7: memref<1x128xf32, #tpu.memory_space<vmem>>, %arg8: memref<4x128xf32, #tpu.memory_space<vmem>>) attributes {dimension_semantics = [#tpu.dimension_semantics<parallel>], iteration_bounds = array<i64: 1>, scalar_prefetch = 0 : i64, scratch_operands = 0 : i64, tpu.core_type = #tpu.core_type<tc>, window_params = [{transform_indices = @transform_0, window_bounds = array<i64: 4, 32>}, {pipeline_mode = #tpu.pipeline_mode<synchronous>, transform_indices = @transform_1, window_bounds = array<i64: 32, 128>}, {pipeline_mode = #tpu.pipeline_mode<synchronous>, transform_indices = @transform_2, window_bounds = array<i64: 1, 128>}, {pipeline_mode = #tpu.pipeline_mode<synchronous>, transform_indices = @transform_3, window_bounds = array<i64: 128, 64>}, {pipeline_mode = #tpu.pipeline_mode<synchronous>, transform_indices = @transform_4, window_bounds = array<i64: 1, 64>}, {pipeline_mode = #tpu.pipeline_mode<synchronous>, transform_indices = @transform_5, window_bounds = array<i64: 64, 128>}, {pipeline_mode = #tpu.pipeline_mode<synchronous>, transform_indices = @transform_6, window_bounds = array<i64: 1, 128>}, {transform_indices = @transform_7, window_bounds = array<i64: 4, 128>}]} {
    %c0 = arith.constant 0 : index
    %c0_0 = arith.constant 0 : index
    %0 = vector.load %arg1[%c0, %c0_0] : memref<4x32xbf16, #tpu.memory_space<vmem>>, vector<4x32xbf16>
    %c0_1 = arith.constant 0 : index
    %c0_2 = arith.constant 0 : index
    %1 = vector.load %arg2[%c0_1, %c0_2] : memref<32x128xbf16, #tpu.memory_space<vmem>>, vector<32x128xbf16>
    %c0_3 = arith.constant 0 : index
    %c0_4 = arith.constant 0 : index
    %2 = vector.load %arg3[%c0_3, %c0_4] : memref<1x128xf32, #tpu.memory_space<vmem>>, vector<1x128xf32>
    %cst = arith.constant dense<0.000000e+00> : vector<4x128xf32>
    %3 = tpu.matmul %0, %1, %cst {dimension_numbers = #tpu.dot_dimension_numbers<[1], [0], [0], [1], [0, 0, 1, 1], [], []>} : vector<4x32xbf16>, vector<32x128xbf16>, vector<4x128xf32> -> vector<4x128xf32>
    %4 = vector.broadcast %2 : vector<1x128xf32> to vector<4x128xf32>
    %5 = arith.addf %3, %4 : vector<4x128xf32>
    %cst_5 = arith.constant 0.000000e+00 : f32
    %6 = vector.broadcast %cst_5 : f32 to vector<4x128xf32>
    %7 = arith.maximumf %5, %6 : vector<4x128xf32>
    %c0_6 = arith.constant 0 : index
    %c0_7 = arith.constant 0 : index
    %8 = vector.load %arg4[%c0_6, %c0_7] : memref<128x64xbf16, #tpu.memory_space<vmem>>, vector<128x64xbf16>
    %c0_8 = arith.constant 0 : index
    %c0_9 = arith.constant 0 : index
    %9 = vector.load %arg5[%c0_8, %c0_9] : memref<1x64xf32, #tpu.memory_space<vmem>>, vector<1x64xf32>
    %10 = arith.truncf %7 : vector<4x128xf32> to vector<4x128xbf16>
    %cst_10 = arith.constant dense<0.000000e+00> : vector<4x64xf32>
    %11 = tpu.matmul %10, %8, %cst_10 {dimension_numbers = #tpu.dot_dimension_numbers<[1], [0], [0], [1], [0, 0, 1, 1], [], []>} : vector<4x128xbf16>, vector<128x64xbf16>, vector<4x64xf32> -> vector<4x64xf32>
    %12 = vector.broadcast %9 : vector<1x64xf32> to vector<4x64xf32>
    %13 = arith.addf %11, %12 : vector<4x64xf32>
    %cst_11 = arith.constant 0.000000e+00 : f32
    %14 = vector.broadcast %cst_11 : f32 to vector<4x64xf32>
    %15 = arith.maximumf %13, %14 : vector<4x64xf32>
    %c0_12 = arith.constant 0 : index
    %c0_13 = arith.constant 0 : index
    %16 = vector.load %arg6[%c0_12, %c0_13] : memref<64x128xbf16, #tpu.memory_space<vmem>>, vector<64x128xbf16>
    %c0_14 = arith.constant 0 : index
    %c0_15 = arith.constant 0 : index
    %17 = vector.load %arg7[%c0_14, %c0_15] : memref<1x128xf32, #tpu.memory_space<vmem>>, vector<1x128xf32>
    %18 = arith.truncf %15 : vector<4x64xf32> to vector<4x64xbf16>
    %cst_16 = arith.constant dense<0.000000e+00> : vector<4x128xf32>
    %19 = tpu.matmul %18, %16, %cst_16 {dimension_numbers = #tpu.dot_dimension_numbers<[1], [0], [0], [1], [0, 0, 1, 1], [], []>} : vector<4x64xbf16>, vector<64x128xbf16>, vector<4x128xf32> -> vector<4x128xf32>
    %20 = vector.broadcast %17 : vector<1x128xf32> to vector<4x128xf32>
    %21 = arith.addf %19, %20 : vector<4x128xf32>
    %c0_17 = arith.constant 0 : index
    %c0_18 = arith.constant 0 : index
    %22 = vector.load %arg8[%c0_17, %c0_18] : memref<4x128xf32, #tpu.memory_space<vmem>>, vector<4x128xf32>
    tpu.vector_store %arg8[%c0_17, %c0_18], %21 {strides = array<i32>} : memref<4x128xf32, #tpu.memory_space<vmem>>, vector<4x128xf32>,
    return
  }
  func.func @transform_0(%arg0: i32) -> (i32, i32) {
    %c0_i32 = arith.constant 0 : i32
    %c0_i32_0 = arith.constant 0 : i32
    return %arg0, %c0_i32 : i32, i32
  }
  func.func @transform_1(%arg0: i32) -> (i32, i32) {
    %c0_i32 = arith.constant 0 : i32
    %c0_i32_0 = arith.constant 0 : i32
    %c0_i32_1 = arith.constant 0 : i32
    return %c0_i32, %c0_i32_0 : i32, i32
  }
  func.func @transform_2(%arg0: i32) -> (i32, i32) {
    %c0_i32 = arith.constant 0 : i32
    %c0_i32_0 = arith.constant 0 : i32
    %c0_i32_1 = arith.constant 0 : i32
    return %c0_i32, %c0_i32_0 : i32, i32
  }
  func.func @transform_3(%arg0: i32) -> (i32, i32) {
    %c0_i32 = arith.constant 0 : i32
    %c0_i32_0 = arith.constant 0 : i32
    %c0_i32_1 = arith.constant 0 : i32
    return %c0_i32, %c0_i32_0 : i32, i32
  }
  func.func @transform_4(%arg0: i32) -> (i32, i32) {
    %c0_i32 = arith.constant 0 : i32
    %c0_i32_0 = arith.constant 0 : i32
    %c0_i32_1 = arith.constant 0 : i32
    return %c0_i32, %c0_i32_0 : i32, i32
  }
  func.func @transform_5(%arg0: i32) -> (i32, i32) {
    %c0_i32 = arith.constant 0 : i32
    %c0_i32_0 = arith.constant 0 : i32
    %c0_i32_1 = arith.constant 0 : i32
    return %c0_i32, %c0_i32_0 : i32, i32
  }
  func.func @transform_6(%arg0: i32) -> (i32, i32) {
    %c0_i32 = arith.constant 0 : i32
    %c0_i32_0 = arith.constant 0 : i32
    %c0_i32_1 = arith.constant 0 : i32
    return %c0_i32, %c0_i32_0 : i32, i32
  }
  func.func @transform_7(%arg0: i32) -> (i32, i32) {
    %c0_i32 = arith.constant 0 : i32
    %c0_i32_0 = arith.constant 0 : i32
    return %arg0, %c0_i32 : i32, i32
  }
}

</mosaic_0001>

<llo_original>
// kernel: actor_impala_forward.5
$region0: #{actor_impala_forward.5}
  #allocation0 [shape = 'u32[]', space=smem, size = 0x4, offset = 0x4, fixed_abs, tag = 'smem constant byte address 0x4 - core index']
  #allocation1 [shape = 'u32[144,128]{1,0:T(1,128)}', space=vmem, size = 0x12000, scoped, tag = 'internal scratch']
  %s0 = inlined_call_operand.vmem [shape: bf16[1600,192], index: 0, kind: input, shape index: {}]
  %s1 = inlined_call_operand.vmem [shape: bf16[192,8], index: 1, kind: input, shape index: {}]
  %s2 = inlined_call_operand.vmem [shape: f32[1,8], index: 2, kind: input, shape index: {}]
  %s3 = inlined_call_operand.vmem [shape: bf16[1600,8], index: 3, kind: output, shape index: {}]
  %s4 = sld [smem:[#allocation0]]
  $region89: #{actor_impala_forward.5} parent=0
    _
  %s6 = ssub.s32 1, %s4
  %s7 = scalar_select 0, %s6, %s4
  $region1: #{actor_impala_forward.5} parent=0
    #allocation2 [shape = 'u8[131072]{0}', space=vmem, size = 0x20000, scoped, tag = 'output window, operand 0']
    loop: start=0, step=1, limit=9
    $region2: #{actor_impala_forward.5} parent=1 // loop_pre_header
      _
    $region3: #{actor_impala_forward.5} parent=1 // loop_header
      %s9 = sphi 0, %s13
      %p10 = scmp.ge.s32.totalorder %s9, 9
      %s19 = sphi 0, %s21
      %s22 = sphi 0, %s19
      %s23 = sphi 0, %s22
      %s39 = sphi 0, %s23
      %s43 = sphi 0, %s43
      %s45 = sphi 0, %s43
      %s46 = sphi 0, %s45
      %s60 = sphi 0, %s46
      %s64 = sphi 0, %s64
      %s66 = sphi 0, %s64
      %s67 = sphi 0, %s66
      %s81 = sphi 0, %s67
      %s87 = sphi 0, %s89
      %s90 = sphi 0, %s87
      %s91 = sphi 0, %s90
      %s107 = sphi 0, %s91
    $region4: #{actor_impala_forward.5} parent=1 // loop_header_branch
      %12 = sbr.rel (%p10) target = $region8
    $region5: #{actor_impala_forward.5} parent=1 // loop_body
      %s14 = ssub.s32 %s9, 1
      %s15 = ssub.s32 %s9, 2
      %s16 = sadd.s32 %s9, 1
      %s17 = ssub.s32 %s9, %s16
      %p18 = scmp.eq.s32.totalorder %s17, 0
      %s20 = sadd.s32 %s19, 1
      %s21 = scalar_select %p18, %s19, %s20
      %p24 = pneg %p18
      %p25 = scmp.eq.s32.totalorder %s9, 6
      %p26 = por %p24, %p25
      %p27 = scmp.ne.s32.totalorder %s19, %s22
      %p28 = scmp.eq.s32.totalorder %s9, 0
      %p29 = por %p27, %p28
      %p30 = scmp.ne.s32.totalorder %s19, %s22
      %p31 = scmp.eq.s32.totalorder %s14, 6
      %p32 = por %p30, %p31
      %p33 = scmp.ne.s32.totalorder %s22, %s23
      %p34 = scmp.eq.s32.totalorder %s14, 0
      %p35 = por %p33, %p34
      %p36 = scmp.ne.s32.totalorder %s22, %s23
      %p37 = scmp.eq.s32.totalorder %s15, 6
      %p38 = por %p36, %p37
      %p40 = scmp.ne.s32.totalorder %s23, %s39
      %p41 = scmp.eq.s32.totalorder %s15, 0
      %p42 = por %p40, %p41
      %s44 = sadd.s32 %s43, 1
      %p47 = scmp.eq.s32.totalorder %s9, 6
      %p48 = scmp.ne.s32.totalorder %s43, %s45
      %p49 = scmp.eq.s32.totalorder %s9, 0
      %p50 = por %p48, %p49
      %p51 = scmp.ne.s32.totalorder %s43, %s45
      %p52 = scmp.eq.s32.totalorder %s14, 6
      %p53 = por %p51, %p52
      %p54 = scmp.ne.s32.totalorder %s45, %s46
      %p55 = scmp.eq.s32.totalorder %s14, 0
      %p56 = por %p54, %p55
      %p57 = scmp.ne.s32.totalorder %s45, %s46
      %p58 = scmp.eq.s32.totalorder %s15, 6
      %p59 = por %p57, %p58
      %p61 = scmp.ne.s32.totalorder %s46, %s60
      %p62 = scmp.eq.s32.totalorder %s15, 0
      %p63 = por %p61, %p62
      %s65 = sadd.s32 %s64, 1
      %p68 = scmp.eq.s32.totalorder %s9, 6
      %p69 = scmp.ne.s32.totalorder %s64, %s66
      %p70 = scmp.eq.s32.totalorder %s9, 0
      %p71 = por %p69, %p70
      %p72 = scmp.ne.s32.totalorder %s64, %s66
      %p73 = scmp.eq.s32.totalorder %s14, 6
      %p74 = por %p72, %p73
      %p75 = scmp.ne.s32.totalorder %s66, %s67
      %p76 = scmp.eq.s32.totalorder %s14, 0
      %p77 = por %p75, %p76
      %p78 = scmp.ne.s32.totalorder %s66, %s67
      %p79 = scmp.eq.s32.totalorder %s15, 6
      %p80 = por %p78, %p79
      %p82 = scmp.ne.s32.totalorder %s67, %s81
      %p83 = scmp.eq.s32.totalorder %s15, 0
      %p84 = por %p82, %p83
      %s85 = ssub.s32 %s9, %s16
      %p86 = scmp.eq.s32.totalorder %s85, 0
      %s88 = sadd.s32 %s87, 1
      %s89 = scalar_select %p86, %s87, %s88
      %p92 = pneg %p86
      %p93 = scmp.eq.s32.totalorder %s9, 6
      %p94 = por %p92, %p93
      %p95 = scmp.ne.s32.totalorder %s87, %s90
      %p96 = scmp.eq.s32.totalorder %s9, 0
      %p97 = por %p95, %p96
      %p98 = scmp.ne.s32.totalorder %s87, %s90
      %p99 = scmp.eq.s32.totalorder %s14, 6
      %p100 = por %p98, %p99
      %p101 = scmp.ne.s32.totalorder %s90, %s91
      %p102 = scmp.eq.s32.totalorder %s14, 0
      %p103 = por %p101, %p102
      %p104 = scmp.ne.s32.totalorder %s90, %s91
      %p105 = scmp.eq.s32.totalorder %s15, 6
      %p106 = por %p104, %p105
      %p108 = scmp.ne.s32.totalorder %s91, %s107
      %p109 = scmp.eq.s32.totalorder %s15, 0
      %p110 = por %p108, %p109
      %p111 = scmp.le.s32.totalorder 1, %s9
      %p112 = scmp.lt.s32.totalorder %s9, 8
      %p113 = pnand %p111, %p112
      %p114 = pneg %p113
      // Predicated region
      $region9: #{actor_impala_forward.5} parent=5 // pred_check
        _
      $region10: #{actor_impala_forward.5} parent=5 // pred_check_branch
        %116 = sbr.rel (%p113) target = $region12
      $region11: #{actor_impala_forward.5} parent=5 // pred_region
        %s117 = ssub.s32 %s9, 1
        // Predicated region
        $region13: #{actor_impala_forward.5} parent=11 // pred_check
          %p118 = pneg %p56
        $region14: #{actor_impala_forward.5} parent=11 // pred_check_branch
          %120 = sbr.rel (%p118) target = $region16
        $region15: #{actor_impala_forward.5} parent=11 // pred_region
          _
        $region16: #{actor_impala_forward.5} parent=11 // pred_fallthru
          _
        // Predicated region
        $region17: #{actor_impala_forward.5} parent=11 // pred_check
          %p121 = pneg %p77
        $region18: #{actor_impala_forward.5} parent=11 // pred_check_branch
          %123 = sbr.rel (%p121) target = $region20
        $region19: #{actor_impala_forward.5} parent=11 // pred_region
          _
        $region20: #{actor_impala_forward.5} parent=11 // pred_fallthru
          _
      $region12: #{actor_impala_forward.5} parent=5 // pred_fallthru
        _
      %p124 = scmp.lt.s32.totalorder %s9, 7
      // Predicated region
      $region21: #{actor_impala_forward.5} parent=5 // pred_check
        %p125 = pneg %p124
      $region22: #{actor_impala_forward.5} parent=5 // pred_check_branch
        %127 = sbr.rel (%p125) target = $region24
      $region23: #{actor_impala_forward.5} parent=5 // pred_region
        // Predicated region
        $region25: #{actor_impala_forward.5} parent=23 // pred_check
          %p128 = pneg %p29
        $region26: #{actor_impala_forward.5} parent=23 // pred_check_branch
          %130 = sbr.rel (%p128) target = $region28
        $region27: #{actor_impala_forward.5} parent=23 // pred_region
          %s131 = smul.u32 32, %s9
          %s132 = ssub.s32 200, %s131
          %p133 = scmp.lt.s32.totalorder %s132, 32
          %s134 = scalar_select %p133, %s132, 32
          %s135 = smul.u32 64, %s134
          %s136 = smul.u32 %s135, 2
          %p137 = scmp.lt.s32.totalorder %s131, 199
          %s138 = scalar_select %p137, %s131, 199
          %s139 = smul.addr %s138, 2
          %s140 = smul.addr %s139, 4
          %s141 = scalar_lea.vmem %s0, %s140
          %s142 = smul.u32 32, %s9
          %s143 = ssub.s32 200, %s142
          %p144 = scmp.lt.s32.totalorder %s143, 32
          %s145 = scalar_select %p144, %s143, 32
          %s146 = smul.u32 64, %s145
          %s147 = smul.u32 %s146, 2
        $region28: #{actor_impala_forward.5} parent=23 // pred_fallthru
          _
      $region24: #{actor_impala_forward.5} parent=5 // pred_fallthru
        _
      %p148 = scmp.le.s32.totalorder 1, %s9
      %p149 = scmp.lt.s32.totalorder %s9, 8
      %p150 = pnand %p148, %p149
      %p151 = pneg %p150
      // Predicated region
      $region29: #{actor_impala_forward.5} parent=5 // pred_check
        _
      $region30: #{actor_impala_forward.5} parent=5 // pred_check_branch
        %153 = sbr.rel (%p150) target = $region32
      $region31: #{actor_impala_forward.5} parent=5 // pred_region
        %s154 = ssub.s32 %s9, 1
        %s155 = smul.u32 32, %s14
        %s156 = ssub.s32 200, %s155
        %p157 = scmp.lt.s32.totalorder %s156, 32
        %s158 = scalar_select %p157, %s156, 32
        %s159 = smul.u32 64, %s158
        %s160 = smul.u32 %s159, 2
        %p161 = scmp.lt.s32.totalorder %s155, 199
        %s162 = scalar_select %p161, %s155, 199
        %s163 = smul.addr %s162, 2
        %s164 = smul.addr %s163, 4
        %s165 = scalar_lea.vmem %s0, %s164
        %p166 = pneg %p35
        %p167 = pneg %p32
        %p168 = pneg %p56
        %p169 = pneg %p53
        %p170 = pneg %p77
        %p171 = pneg %p74
        %p172 = pneg %p103
        %p173 = pneg %p100
        %s174 = sand.u32 %s90, 1
        %s175 = sand.u32 %s90, 1
        %s176 = smul.addr %s175, 128
        %s177 = scalar_lea.vmem [#allocation2], %s176
        %s178 = smul.u32 32, %s14
        %s179 = ssub.s32 200, %s178
        %p180 = scmp.lt.s32.totalorder %s179, 32
        %s181 = scalar_select %p180, %s179, 32
        %s182 = smul.u32 64, %s181
        %s183 = smul.u32 %s182, 2
        %p184 = scmp.lt.s32.totalorder %s178, 199
        %s185 = scalar_select %p184, %s178, 199
        %s186 = smul.addr %s185, 2
        %s187 = smul.addr %s186, 4
        %s188 = scalar_lea.vmem %s0, %s187
        %s189 = smul.u32 32, %s14
        %s190 = ssub.s32 200, %s189
        %p191 = scmp.lt.s32.totalorder %s190, 32
        %s192 = scalar_select %p191, %s190, 32
        %s193 = smul.u32 64, %s192
        %s194 = smul.u32 %s193, 2
        %s195 = smul.u32 32, %s14
        %s196 = ssub.s32 200, %s195
        %p197 = scmp.lt.s32.totalorder %s196, 32
        %s198 = scalar_select %p197, %s196, 32
        %s199 = smul.u32 64, %s198
        %v201 = vld [vmem:[%s188] sm:$0xff]
        %v202 = vld [vmem:[%s188 + $0x8] sm:$0xff]
        %v203 = vld [vmem:[%s188 + $0x10] sm:$0xff]
        %v204 = vld [vmem:[%s188 + $0x18] sm:$0xff]
        %v205 = vld [vmem:[%s188 + $0x20] sm:$0xff]
        %v206 = vld [vmem:[%s188 + $0x28] sm:$0xff]
        %v207 = vld [vmem:[%s188 + $0x30] sm:$0xff]
        %v208 = vld [vmem:[%s188 + $0x38] sm:$0xff]
        %v209 = vld [vmem:[%s188 + $0x40] sm:$0xff]
        %v210 = vld [vmem:[%s188 + $0x48] sm:$0xff]
        %v211 = vld [vmem:[%s188 + $0x50] sm:$0xff]
        %v212 = vld [vmem:[%s188 + $0x58] sm:$0xff]
        %v213 = vld [vmem:[%s188 + $0x60] sm:$0xff]
        %v214 = vld [vmem:[%s188 + $0x68] sm:$0xff]
        %v215 = vld [vmem:[%s188 + $0x70] sm:$0xff]
        %v216 = vld [vmem:[%s188 + $0x78] sm:$0xff]
        %v217 = vld [vmem:[%s188 + $0x80] sm:$0xff]
        %v218 = vld [vmem:[%s188 + $0x88] sm:$0xff]
        %v219 = vld [vmem:[%s188 + $0x90] sm:$0xff]
        %v220 = vld [vmem:[%s188 + $0x98] sm:$0xff]
        %v221 = vld [vmem:[%s188 + $0xa0] sm:$0xff]
        %v222 = vld [vmem:[%s188 + $0xa8] sm:$0xff]
        %v223 = vld [vmem:[%s188 + $0xb0] sm:$0xff]
        %v224 = vld [vmem:[%s188 + $0xb8] sm:$0xff]
        %v225 = vld [vmem:[%s188 + $0xc0] sm:$0xff]
        %v226 = vld [vmem:[%s188 + $0xc8] sm:$0xff]
        %v227 = vld [vmem:[%s188 + $0xd0] sm:$0xff]
        %v228 = vld [vmem:[%s188 + $0xd8] sm:$0xff]
        %v229 = vld [vmem:[%s188 + $0xe0] sm:$0xff]
        %v230 = vld [vmem:[%s188 + $0xe8] sm:$0xff]
        %v231 = vld [vmem:[%s188 + $0xf0] sm:$0xff]
        %v232 = vld [vmem:[%s188 + $0xf8] sm:$0xff]
        %v233 = vld [vmem:[%s1] sm:$0xf]
        %v234 = vld [vmem:[%s1 + $0x4] sm:$0xf]
        %v235 = vld [vmem:[%s1 + $0x8] sm:$0xf]
        %v236 = vld [vmem:[%s1 + $0xc] sm:$0xf]
        %v237 = vld [vmem:[%s1 + $0x10] sm:$0xf]
        %v238 = vld [vmem:[%s1 + $0x14] sm:$0xf]
        %v239 = vld [vmem:[%s1 + $0x18] sm:$0xf]
        %v240 = vld [vmem:[%s1 + $0x1c] sm:$0xf]
        %v241 = vld [vmem:[%s1 + $0x20] sm:$0xf]
        %v242 = vld [vmem:[%s1 + $0x24] sm:$0xf]
        %v243 = vld [vmem:[%s1 + $0x28] sm:$0xf]
        %v244 = vld [vmem:[%s1 + $0x2c] sm:$0xf]
        %v245 = vld [vmem:[%s1 + $0x30] sm:$0xf]
        %v246 = vld [vmem:[%s1 + $0x34] sm:$0xf]
        %v247 = vld [vmem:[%s1 + $0x38] sm:$0xf]
        %v248 = vld [vmem:[%s1 + $0x3c] sm:$0xf]
        %v249 = vld [vmem:[%s1 + $0x40] sm:$0xf]
        %v250 = vld [vmem:[%s1 + $0x44] sm:$0xf]
        %v251 = vld [vmem:[%s1 + $0x48] sm:$0xf]
        %v252 = vld [vmem:[%s1 + $0x4c] sm:$0xf]
        %v253 = vld [vmem:[%s1 + $0x50] sm:$0xf]
        %v254 = vld [vmem:[%s1 + $0x54] sm:$0xf]
        %v255 = vld [vmem:[%s1 + $0x58] sm:$0xf]
        %v256 = vld [vmem:[%s1 + $0x5c] sm:$0xf]
        %v257 = vld [vmem:[%s2] sm:$0x1]
        %v259 = vlaneseq
        %v260 = vshrl.u32 %v259, 7
        %v261 = vsub.s32 0, %v260
        %v262 = vrot.slane %v257, %v261
        %v296 = vunpack.c.l.b16 %v201
        %v297 = vunpack.c.h.b16 %v201
        %v298 = vunpack.c.l.b16 %v202
        %v299 = vunpack.c.h.b16 %v202
        %v300 = vunpack.c.l.b16 %v203
        %v301 = vunpack.c.h.b16 %v203
        %v302 = vunpack.c.l.b16 %v204
        %v303 = vunpack.c.h.b16 %v204
        %v304 = vunpack.c.l.b16 %v205
        %v305 = vunpack.c.h.b16 %v205
        %v306 = vunpack.c.l.b16 %v206
        %v307 = vunpack.c.h.b16 %v206
        %v308 = vunpack.c.l.b16 %v207
        %v309 = vunpack.c.h.b16 %v207
        %v310 = vunpack.c.l.b16 %v208
        %v311 = vunpack.c.h.b16 %v208
        %v312 = vunpack.c.l.b16 %v209
        %v313 = vunpack.c.h.b16 %v209
        %v314 = vunpack.c.l.b16 %v210
        %v315 = vunpack.c.h.b16 %v210
        %v316 = vunpack.c.l.b16 %v211
        %v317 = vunpack.c.h.b16 %v211
        %v318 = vunpack.c.l.b16 %v212
        %v319 = vunpack.c.h.b16 %v212
        %v320 = vunpack.c.l.b16 %v213
        %v321 = vunpack.c.h.b16 %v213
        %v322 = vunpack.c.l.b16 %v214
        %v323 = vunpack.c.h.b16 %v214
        %v324 = vunpack.c.l.b16 %v215
        %v325 = vunpack.c.h.b16 %v215
        %v326 = vunpack.c.l.b16 %v216
        %v327 = vunpack.c.h.b16 %v216
        %v328 = vunpack.c.l.b16 %v217
        %v329 = vunpack.c.h.b16 %v217
        %v330 = vunpack.c.l.b16 %v218
        %v331 = vunpack.c.h.b16 %v218
        %v332 = vunpack.c.l.b16 %v219
        %v333 = vunpack.c.h.b16 %v219
        %v334 = vunpack.c.l.b16 %v220
        %v335 = vunpack.c.h.b16 %v220
        %v336 = vunpack.c.l.b16 %v221
        %v337 = vunpack.c.h.b16 %v221
        %v338 = vunpack.c.l.b16 %v222
        %v339 = vunpack.c.h.b16 %v222
        %v340 = vunpack.c.l.b16 %v223
        %v341 = vunpack.c.h.b16 %v223
        %v342 = vunpack.c.l.b16 %v224
        %v343 = vunpack.c.h.b16 %v224
        %v344 = vunpack.c.l.b16 %v225
        %v345 = vunpack.c.h.b16 %v225
        %v346 = vunpack.c.l.b16 %v226
        %v347 = vunpack.c.h.b16 %v226
        %v348 = vunpack.c.l.b16 %v227
        %v349 = vunpack.c.h.b16 %v227
        %v350 = vunpack.c.l.b16 %v228
        %v351 = vunpack.c.h.b16 %v228
        %v352 = vunpack.c.l.b16 %v229
        %v353 = vunpack.c.h.b16 %v229
        %v354 = vunpack.c.l.b16 %v230
        %v355 = vunpack.c.h.b16 %v230
        %v356 = vunpack.c.l.b16 %v231
        %v357 = vunpack.c.h.b16 %v231
        %v358 = vunpack.c.l.b16 %v232
        %v359 = vunpack.c.h.b16 %v232
        %v360 = vpack.c.b16 %v298, %v296
        %v361 = vpack.c.b16 %v299, %v297
        %v362 = vpack.c.b16 %v302, %v300
        %v363 = vpack.c.b16 %v303, %v301
        %v364 = vpack.c.b16 %v306, %v304
        %v365 = vpack.c.b16 %v307, %v305
        %v366 = vpack.c.b16 %v310, %v308
        %v367 = vpack.c.b16 %v311, %v309
        %v368 = vpack.c.b16 %v314, %v312
        %v369 = vpack.c.b16 %v315, %v313
        %v370 = vpack.c.b16 %v318, %v316
        %v371 = vpack.c.b16 %v319, %v317
        %v372 = vpack.c.b16 %v322, %v320
        %v373 = vpack.c.b16 %v323, %v321
        %v374 = vpack.c.b16 %v326, %v324
        %v375 = vpack.c.b16 %v327, %v325
        %v376 = vpack.c.b16 %v330, %v328
        %v377 = vpack.c.b16 %v331, %v329
        %v378 = vpack.c.b16 %v334, %v332
        %v379 = vpack.c.b16 %v335, %v333
        %v380 = vpack.c.b16 %v338, %v336
        %v381 = vpack.c.b16 %v339, %v337
        %v382 = vpack.c.b16 %v342, %v340
        %v383 = vpack.c.b16 %v343, %v341
        %v384 = vpack.c.b16 %v346, %v344
        %v385 = vpack.c.b16 %v347, %v345
        %v386 = vpack.c.b16 %v350, %v348
        %v387 = vpack.c.b16 %v351, %v349
        %v388 = vpack.c.b16 %v354, %v352
        %v389 = vpack.c.b16 %v355, %v353
        %v390 = vpack.c.b16 %v358, %v356
        %v391 = vpack.c.b16 %v359, %v357
        %v432 = vunpack.c.l.b16 %v233
        %v433 = vunpack.c.l.b16 %v234
        %v434 = vunpack.c.l.b16 %v235
        %v435 = vunpack.c.l.b16 %v236
        %v436 = vunpack.c.l.b16 %v237
        %v437 = vunpack.c.l.b16 %v238
        %v438 = vunpack.c.l.b16 %v239
        %v439 = vunpack.c.l.b16 %v240
        %v440 = vunpack.c.l.b16 %v241
        %v441 = vunpack.c.l.b16 %v242
        %v442 = vunpack.c.l.b16 %v243
        %v443 = vunpack.c.l.b16 %v244
        %v444 = vunpack.c.l.b16 %v245
        %v445 = vunpack.c.l.b16 %v246
        %v446 = vunpack.c.l.b16 %v247
        %v447 = vunpack.c.l.b16 %v248
        %v448 = vunpack.c.l.b16 %v249
        %v449 = vunpack.c.l.b16 %v250
        %v450 = vunpack.c.l.b16 %v251
        %v451 = vunpack.c.l.b16 %v252
        %v452 = vunpack.c.l.b16 %v253
        %v453 = vunpack.c.l.b16 %v254
        %v454 = vunpack.c.l.b16 %v255
        %v455 = vunpack.c.l.b16 %v256
        %v456 = vpack.c.b16 %v433, %v432
        %v457 = vpack.c.b16 %v435, %v434
        %v458 = vpack.c.b16 %v437, %v436
        %v459 = vpack.c.b16 %v439, %v438
        %v460 = vpack.c.b16 %v441, %v440
        %v461 = vpack.c.b16 %v443, %v442
        %v462 = vpack.c.b16 %v445, %v444
        %v463 = vpack.c.b16 %v447, %v446
        %v464 = vpack.c.b16 %v449, %v448
        %v465 = vpack.c.b16 %v451, %v450
        %v466 = vpack.c.b16 %v453, %v452
        %v467 = vpack.c.b16 %v455, %v454
        %vm480 = vcmask 523264
        %v482 = vsel %vm480, %v361, 0
        %v485 = vsel %vm480, %v363, 0
        %v488 = vsel %vm480, %v365, 0
        %v491 = vsel %vm480, %v367, 0
        %v494 = vsel %vm480, %v369, 0
        %v497 = vsel %vm480, %v371, 0
        %v500 = vsel %vm480, %v373, 0
        %v503 = vsel %vm480, %v375, 0
        %v506 = vsel %vm480, %v377, 0
        %v509 = vsel %vm480, %v379, 0
        %v512 = vsel %vm480, %v381, 0
        %v515 = vsel %vm480, %v383, 0
        %v518 = vsel %vm480, %v385, 0
        %v521 = vsel %vm480, %v387, 0
        %v524 = vsel %vm480, %v389, 0
        %v527 = vsel %vm480, %v391, 0
        %529 = vmatprep.subr.bf16.mxu0 0
        %530 = vmatpush1.bf16.msra.mxu0 %v463
        %531 = vmatprep.subr.bf16.mxu0 0
        %532 = vmatpush1.bf16.msra.mxu0 %v462
        %533 = vmatprep.subr.bf16.mxu0 0
        %534 = vmatpush1.bf16.msra.mxu0 %v461
        %535 = vmatprep.subr.bf16.mxu0 0
        %536 = vmatpush1.bf16.msra.mxu0 %v460
        %537 = vmatprep.subr.bf16.mxu0 0
        %538 = vmatpush1.bf16.msra.mxu0 %v459
        %539 = vmatprep.subr.bf16.mxu0 0
        %540 = vmatpush1.bf16.msra.mxu0 %v458
        %541 = vmatprep.subr.bf16.mxu0 0
        %542 = vmatpush1.bf16.msra.mxu0 %v457
        %543 = vmatprep.subr.bf16.mxu0 0
        %544 = vmatpush1.bf16.msra.mxu0 %v456
        %545 = vmatprep.subr.bf16.mxu0 0
        %546 = vmatpush2.bf16.msra.mxu0 0
        %547 = vmatprep.subr.bf16.mxu0 0
        %548 = vmatpush2.bf16.msra.mxu0 0
        %549 = vmatprep.subr.bf16.mxu0 0
        %550 = vmatpush2.bf16.msra.mxu0 0
        %551 = vmatprep.subr.bf16.mxu0 0
        %552 = vmatpush2.bf16.msra.mxu0 0
        %553 = vmatprep.subr.bf16.mxu0 0
        %554 = vmatpush2.bf16.msra.mxu0 %v467
        %555 = vmatprep.subr.bf16.mxu0 0
        %556 = vmatpush2.bf16.msra.mxu0 %v466
        %557 = vmatprep.subr.bf16.mxu0 0
        %558 = vmatpush2.bf16.msra.mxu0 %v465
        %559 = vmatprep.subr.bf16.mxu0 0
        %560 = vmatpush2.bf16.msra.mxu0 %v464
        %561 = vmatprep.mubr.bf16.mxu0 %v482
        %562 = vmatmul.mubr.bf16.gmra.mxu0 %v360
        %v563 = vpop.f32.mrf.mxu0
        %v564 = vadd.f32 %v262, %v563
        %v565 = vpop.f32.mrf.mxu0
        %v566 = vpop.f32.mrf.mxu0
        %v567 = vadd.f32 %v262, %v566
        %v568 = vpop.f32.mrf.mxu0
        %569 = vmatprep.mubr.bf16.mxu0 %v485
        %570 = vmatmul.mubr.bf16.gmra.mxu0 %v362
        %v571 = vpop.f32.mrf.mxu0
        %v572 = vadd.f32 %v262, %v571
        %v573 = vpop.f32.mrf.mxu0
        %v574 = vpop.f32.mrf.mxu0
        %v575 = vadd.f32 %v262, %v574
        %v576 = vpop.f32.mrf.mxu0
        %577 = vmatprep.mubr.bf16.mxu0 %v488
        %578 = vmatmul.mubr.bf16.gmra.mxu0 %v364
        %v579 = vpop.f32.mrf.mxu0
        %v580 = vadd.f32 %v262, %v579
        %v581 = vpop.f32.mrf.mxu0
        %v582 = vpop.f32.mrf.mxu0
        %v583 = vadd.f32 %v262, %v582
        %v584 = vpop.f32.mrf.mxu0
        %585 = vmatprep.mubr.bf16.mxu0 %v491
        %586 = vmatmul.mubr.bf16.gmra.mxu0 %v366
        %v587 = vpop.f32.mrf.mxu0
        %v588 = vadd.f32 %v262, %v587
        %v589 = vpop.f32.mrf.mxu0
        %v590 = vpop.f32.mrf.mxu0
        %v591 = vadd.f32 %v262, %v590
        %v592 = vpop.f32.mrf.mxu0
        %593 = vmatprep.mubr.bf16.mxu0 %v494
        %594 = vmatmul.mubr.bf16.gmra.mxu0 %v368
        %v595 = vpop.f32.mrf.mxu0
        %v596 = vadd.f32 %v262, %v595
        %v597 = vpop.f32.mrf.mxu0
        %v598 = vpop.f32.mrf.mxu0
        %v599 = vadd.f32 %v262, %v598
        %v600 = vpop.f32.mrf.mxu0
        %601 = vmatprep.mubr.bf16.mxu0 %v497
        %602 = vmatmul.mubr.bf16.gmra.mxu0 %v370
        %v603 = vpop.f32.mrf.mxu0
        %v604 = vadd.f32 %v262, %v603
        %v605 = vpop.f32.mrf.mxu0
        %v606 = vpop.f32.mrf.mxu0
        %v607 = vadd.f32 %v262, %v606
        %v608 = vpop.f32.mrf.mxu0
        %609 = vmatprep.mubr.bf16.mxu0 %v500
        %610 = vmatmul.mubr.bf16.gmra.mxu0 %v372
        %v611 = vpop.f32.mrf.mxu0
        %v612 = vadd.f32 %v262, %v611
        %v613 = vpop.f32.mrf.mxu0
        %v614 = vpop.f32.mrf.mxu0
        %v615 = vadd.f32 %v262, %v614
        %v616 = vpop.f32.mrf.mxu0
        %617 = vmatprep.mubr.bf16.mxu0 %v503
        %618 = vmatmul.mubr.bf16.gmra.mxu0 %v374
        %v619 = vpop.f32.mrf.mxu0
        %v620 = vadd.f32 %v262, %v619
        %v621 = vpop.f32.mrf.mxu0
        %v622 = vpop.f32.mrf.mxu0
        %v623 = vadd.f32 %v262, %v622
        %v624 = vpop.f32.mrf.mxu0
        %625 = vmatprep.mubr.bf16.mxu0 %v506
        %626 = vmatmul.mubr.bf16.gmra.mxu0 %v376
        %v627 = vpop.f32.mrf.mxu0
        %v628 = vadd.f32 %v262, %v627
        %v629 = vpop.f32.mrf.mxu0
        %v630 = vpop.f32.mrf.mxu0
        %v631 = vadd.f32 %v262, %v630
        %v632 = vpop.f32.mrf.mxu0
        %633 = vmatprep.mubr.bf16.mxu0 %v509
        %634 = vmatmul.mubr.bf16.gmra.mxu0 %v378
        %v635 = vpop.f32.mrf.mxu0
        %v636 = vadd.f32 %v262, %v635
        %v637 = vpop.f32.mrf.mxu0
        %v638 = vpop.f32.mrf.mxu0
        %v639 = vadd.f32 %v262, %v638
        %v640 = vpop.f32.mrf.mxu0
        %641 = vmatprep.mubr.bf16.mxu0 %v512
        %642 = vmatmul.mubr.bf16.gmra.mxu0 %v380
        %v643 = vpop.f32.mrf.mxu0
        %v644 = vadd.f32 %v262, %v643
        %v645 = vpop.f32.mrf.mxu0
        %v646 = vpop.f32.mrf.mxu0
        %v647 = vadd.f32 %v262, %v646
        %v648 = vpop.f32.mrf.mxu0
        %649 = vmatprep.mubr.bf16.mxu0 %v515
        %650 = vmatmul.mubr.bf16.gmra.mxu0 %v382
        %v651 = vpop.f32.mrf.mxu0
        %v652 = vadd.f32 %v262, %v651
        %v653 = vpop.f32.mrf.mxu0
        %v654 = vpop.f32.mrf.mxu0
        %v655 = vadd.f32 %v262, %v654
        %v656 = vpop.f32.mrf.mxu0
        %657 = vmatprep.mubr.bf16.mxu0 %v518
        %658 = vmatmul.mubr.bf16.gmra.mxu0 %v384
        %v659 = vpop.f32.mrf.mxu0
        %v660 = vadd.f32 %v262, %v659
        %v661 = vpop.f32.mrf.mxu0
        %v662 = vpop.f32.mrf.mxu0
        %v663 = vadd.f32 %v262, %v662
        %v664 = vpop.f32.mrf.mxu0
        %665 = vmatprep.mubr.bf16.mxu0 %v521
        %666 = vmatmul.mubr.bf16.gmra.mxu0 %v386
        %v667 = vpop.f32.mrf.mxu0
        %v668 = vadd.f32 %v262, %v667
        %v669 = vpop.f32.mrf.mxu0
        %v670 = vpop.f32.mrf.mxu0
        %v671 = vadd.f32 %v262, %v670
        %v672 = vpop.f32.mrf.mxu0
        %673 = vmatprep.mubr.bf16.mxu0 %v524
        %674 = vmatmul.mubr.bf16.gmra.mxu0 %v388
        %v675 = vpop.f32.mrf.mxu0
        %v676 = vadd.f32 %v262, %v675
        %v677 = vpop.f32.mrf.mxu0
        %v678 = vpop.f32.mrf.mxu0
        %v679 = vadd.f32 %v262, %v678
        %v680 = vpop.f32.mrf.mxu0
        %681 = vmatprep.mubr.bf16.mxu0 %v527
        %682 = vmatmul.mubr.bf16.gmra.mxu0 %v390
        %v683 = vpop.f32.mrf.mxu0
        %v684 = vadd.f32 %v262, %v683
        %v685 = vpop.f32.mrf.mxu0
        %v686 = vpop.f32.mrf.mxu0
        %v687 = vadd.f32 %v262, %v686
        %v688 = vpop.f32.mrf.mxu0
        %689 = vdwg.mxu0
        %v690 = vmax.f32 %v564, 0.0
        %v691 = vmax.f32 %v567, 0.0
        %v692 = vmax.f32 %v572, 0.0
        %v693 = vmax.f32 %v575, 0.0
        %v694 = vmax.f32 %v580, 0.0
        %v695 = vmax.f32 %v583, 0.0
        %v696 = vmax.f32 %v588, 0.0
        %v697 = vmax.f32 %v591, 0.0
        %v698 = vmax.f32 %v596, 0.0
        %v699 = vmax.f32 %v599, 0.0
        %v700 = vmax.f32 %v604, 0.0
        %v701 = vmax.f32 %v607, 0.0
        %v702 = vmax.f32 %v612, 0.0
        %v703 = vmax.f32 %v615, 0.0
        %v704 = vmax.f32 %v620, 0.0
        %v705 = vmax.f32 %v623, 0.0
        %v706 = vmax.f32 %v628, 0.0
        %v707 = vmax.f32 %v631, 0.0
        %v708 = vmax.f32 %v636, 0.0
        %v709 = vmax.f32 %v639, 0.0
        %v710 = vmax.f32 %v644, 0.0
        %v711 = vmax.f32 %v647, 0.0
        %v712 = vmax.f32 %v652, 0.0
        %v713 = vmax.f32 %v655, 0.0
        %v714 = vmax.f32 %v660, 0.0
        %v715 = vmax.f32 %v663, 0.0
        %v716 = vmax.f32 %v668, 0.0
        %v717 = vmax.f32 %v671, 0.0
        %v718 = vmax.f32 %v676, 0.0
        %v719 = vmax.f32 %v679, 0.0
        %v720 = vmax.f32 %v684, 0.0
        %v721 = vmax.f32 %v687, 0.0
        %v722 = vpack.c.bf16 %v691, %v690
        %v723 = vpack.c.bf16 %v693, %v692
        %v724 = vpack.c.bf16 %v695, %v694
        %v725 = vpack.c.bf16 %v697, %v696
        %v726 = vpack.c.bf16 %v699, %v698
        %v727 = vpack.c.bf16 %v701, %v700
        %v728 = vpack.c.bf16 %v703, %v702
        %v729 = vpack.c.bf16 %v705, %v704
        %v730 = vpack.c.bf16 %v707, %v706
        %v731 = vpack.c.bf16 %v709, %v708
        %v732 = vpack.c.bf16 %v711, %v710
        %v733 = vpack.c.bf16 %v713, %v712
        %v734 = vpack.c.bf16 %v715, %v714
        %v735 = vpack.c.bf16 %v717, %v716
        %v736 = vpack.c.bf16 %v719, %v718
        %v737 = vpack.c.bf16 %v721, %v720
        %v754 = vunpack.c.l.b16 %v722
        %v755 = vunpack.c.h.b16 %v722
        %v756 = vunpack.c.l.b16 %v723
        %v757 = vunpack.c.h.b16 %v723
        %v758 = vunpack.c.l.b16 %v724
        %v759 = vunpack.c.h.b16 %v724
        %v760 = vunpack.c.l.b16 %v725
        %v761 = vunpack.c.h.b16 %v725
        %v762 = vunpack.c.l.b16 %v726
        %v763 = vunpack.c.h.b16 %v726
        %v764 = vunpack.c.l.b16 %v727
        %v765 = vunpack.c.h.b16 %v727
        %v766 = vunpack.c.l.b16 %v728
        %v767 = vunpack.c.h.b16 %v728
        %v768 = vunpack.c.l.b16 %v729
        %v769 = vunpack.c.h.b16 %v729
        %v770 = vunpack.c.l.b16 %v730
        %v771 = vunpack.c.h.b16 %v730
        %v772 = vunpack.c.l.b16 %v731
        %v773 = vunpack.c.h.b16 %v731
        %v774 = vunpack.c.l.b16 %v732
        %v775 = vunpack.c.h.b16 %v732
        %v776 = vunpack.c.l.b16 %v733
        %v777 = vunpack.c.h.b16 %v733
        %v778 = vunpack.c.l.b16 %v734
        %v779 = vunpack.c.h.b16 %v734
        %v780 = vunpack.c.l.b16 %v735
        %v781 = vunpack.c.h.b16 %v735
        %v782 = vunpack.c.l.b16 %v736
        %v783 = vunpack.c.h.b16 %v736
        %v784 = vunpack.c.l.b16 %v737
        %v785 = vunpack.c.h.b16 %v737
        %v786 = vpack.c.b16 %v754, %v754
        %v787 = vpack.c.b16 %v755, %v755
        %v788 = vpack.c.b16 %v756, %v756
        %v789 = vpack.c.b16 %v757, %v757
        %v790 = vpack.c.b16 %v758, %v758
        %v791 = vpack.c.b16 %v759, %v759
        %v792 = vpack.c.b16 %v760, %v760
        %v793 = vpack.c.b16 %v761, %v761
        %v794 = vpack.c.b16 %v762, %v762
        %v795 = vpack.c.b16 %v763, %v763
        %v796 = vpack.c.b16 %v764, %v764
        %v797 = vpack.c.b16 %v765, %v765
        %v798 = vpack.c.b16 %v766, %v766
        %v799 = vpack.c.b16 %v767, %v767
        %v800 = vpack.c.b16 %v768, %v768
        %v801 = vpack.c.b16 %v769, %v769
        %v802 = vpack.c.b16 %v770, %v770
        %v803 = vpack.c.b16 %v771, %v771
        %v804 = vpack.c.b16 %v772, %v772
        %v805 = vpack.c.b16 %v773, %v773
        %v806 = vpack.c.b16 %v774, %v774
        %v807 = vpack.c.b16 %v775, %v775
        %v808 = vpack.c.b16 %v776, %v776
        %v809 = vpack.c.b16 %v777, %v777
        %v810 = vpack.c.b16 %v778, %v778
        %v811 = vpack.c.b16 %v779, %v779
        %v812 = vpack.c.b16 %v780, %v780
        %v813 = vpack.c.b16 %v781, %v781
        %v814 = vpack.c.b16 %v782, %v782
        %v815 = vpack.c.b16 %v783, %v783
        %v816 = vpack.c.b16 %v784, %v784
        %v817 = vpack.c.b16 %v785, %v785
        %vm850 = vcmask 60416
        %851 = vst.msk [vmem:[%s177] sm:$0xf] %vm850, %v786
        %852 = vst.msk [vmem:[%s177 + $0x4] sm:$0xf] %vm850, %v787
        %853 = vst.msk [vmem:[%s177 + $0x8] sm:$0xf] %vm850, %v788
        %854 = vst.msk [vmem:[%s177 + $0xc] sm:$0xf] %vm850, %v789
        %855 = vst.msk [vmem:[%s177 + $0x10] sm:$0xf] %vm850, %v790
        %856 = vst.msk [vmem:[%s177 + $0x14] sm:$0xf] %vm850, %v791
        %857 = vst.msk [vmem:[%s177 + $0x18] sm:$0xf] %vm850, %v792
        %858 = vst.msk [vmem:[%s177 + $0x1c] sm:$0xf] %vm850, %v793
        %859 = vst.msk [vmem:[%s177 + $0x20] sm:$0xf] %vm850, %v794
        %860 = vst.msk [vmem:[%s177 + $0x24] sm:$0xf] %vm850, %v795
        %861 = vst.msk [vmem:[%s177 + $0x28] sm:$0xf] %vm850, %v796
        %862 = vst.msk [vmem:[%s177 + $0x2c] sm:$0xf] %vm850, %v797
        %863 = vst.msk [vmem:[%s177 + $0x30] sm:$0xf] %vm850, %v798
        %864 = vst.msk [vmem:[%s177 + $0x34] sm:$0xf] %vm850, %v799
        %865 = vst.msk [vmem:[%s177 + $0x38] sm:$0xf] %vm850, %v800
        %866 = vst.msk [vmem:[%s177 + $0x3c] sm:$0xf] %vm850, %v801
        %867 = vst.msk [vmem:[%s177 + $0x40] sm:$0xf] %vm850, %v802
        %868 = vst.msk [vmem:[%s177 + $0x44] sm:$0xf] %vm850, %v803
        %869 = vst.msk [vmem:[%s177 + $0x48] sm:$0xf] %vm850, %v804
        %870 = vst.msk [vmem:[%s177 + $0x4c] sm:$0xf] %vm850, %v805
        %871 = vst.msk [vmem:[%s177 + $0x50] sm:$0xf] %vm850, %v806
        %872 = vst.msk [vmem:[%s177 + $0x54] sm:$0xf] %vm850, %v807
        %873 = vst.msk [vmem:[%s177 + $0x58] sm:$0xf] %vm850, %v808
        %874 = vst.msk [vmem:[%s177 + $0x5c] sm:$0xf] %vm850, %v809
        %875 = vst.msk [vmem:[%s177 + $0x60] sm:$0xf] %vm850, %v810
        %876 = vst.msk [vmem:[%s177 + $0x64] sm:$0xf] %vm850, %v811
        %877 = vst.msk [vmem:[%s177 + $0x68] sm:$0xf] %vm850, %v812
        %878 = vst.msk [vmem:[%s177 + $0x6c] sm:$0xf] %vm850, %v813
        %879 = vst.msk [vmem:[%s177 + $0x70] sm:$0xf] %vm850, %v814
        %880 = vst.msk [vmem:[%s177 + $0x74] sm:$0xf] %vm850, %v815
        %881 = vst.msk [vmem:[%s177 + $0x78] sm:$0xf] %vm850, %v816
        %882 = vst.msk [vmem:[%s177 + $0x7c] sm:$0xf] %vm850, %v817
        %s883 = sand.u32 %s90, 1
        %s884 = sand.u32 %s90, 1
        %s885 = smul.addr %s884, 128
        %s886 = scalar_lea.vmem [#allocation2], %s885
        // Predicated region
        $region33: #{actor_impala_forward.5} parent=31 // pred_check
          %p887 = pneg %p100
        $region34: #{actor_impala_forward.5} parent=31 // pred_check_branch
          %889 = sbr.rel (%p887) target = $region36
        $region35: #{actor_impala_forward.5} parent=31 // pred_region
          %s890 = smul.u32 32, %s14
          %s891 = ssub.s32 200, %s890
          %p892 = scmp.lt.s32.totalorder %s891, 32
          %s893 = scalar_select %p892, %s891, 32
          %s894 = smul.u32 64, %s893
          %p895 = scmp.ne.s32.totalorder 0, %s894
          %s896 = smul.addr %s890, 4
          %s897 = scalar_lea.vmem %s3, %s896
          // Predicated region
          $region37: #{actor_impala_forward.5} parent=35 // pred_check
            %p898 = pneg %p895
          $region38: #{actor_impala_forward.5} parent=35 // pred_check_branch
            %900 = sbr.rel (%p898) target = $region40
          $region39: #{actor_impala_forward.5} parent=35 // pred_region
            // Predicated region
            $region41: #{actor_impala_forward.5} parent=39 // pred_check
              _
            $region42: #{actor_impala_forward.5} parent=39 // pred_check_branch
              %902 = sbr.rel target = $region44
            $region43: #{actor_impala_forward.5} parent=39 // pred_region
              // Predicated region
              $region63: #{actor_impala_forward.5} parent=43 // pred_check
                _
              $region64: #{actor_impala_forward.5} parent=43 // pred_check_branch
                %1014 = sbr.rel (0) target = $region66
              $region65: #{actor_impala_forward.5} parent=43 // pred_region
                %s1016 = ssub.s32 16, 1
                %s1017 = sshrl.u32 %s893, 5
                // While loop
                $region67: #{actor_impala_forward.5} parent=65 // loop_pre_header
                  _
                $region68: #{actor_impala_forward.5} parent=65 // loop_header
                  %s1019 = sphi 0, %s1021
                  %p1020 = scmp.ge.s32.totalorder %s1019, %s1017
                  %s1024 = sphi 0, %s1093
                  %s1025 = sphi %s886, %s1096
                  %s1026 = sphi %s897, %s1097
                $region69: #{actor_impala_forward.5} parent=65 // loop_header_branch
                  %1023 = sbr.rel (%p1020) target = $region73
                $region70: #{actor_impala_forward.5} parent=65 // loop_body
                  %v1027 = vld [vmem:[%s1025] sm:%s1016]
                  %1028 = vst [vmem:[%s1026] sm:%s1016] %v1027
                  %v1029 = vld [vmem:[%s1025 + $0x4] sm:%s1016]
                  %1030 = vst [vmem:[%s1026 + $0x4] sm:%s1016] %v1029
                  %v1031 = vld [vmem:[%s1025 + $0x8] sm:%s1016]
                  %1032 = vst [vmem:[%s1026 + $0x8] sm:%s1016] %v1031
                  %v1033 = vld [vmem:[%s1025 + $0xc] sm:%s1016]
                  %1034 = vst [vmem:[%s1026 + $0xc] sm:%s1016] %v1033
                  %v1035 = vld [vmem:[%s1025 + $0x10] sm:%s1016]
                  %1036 = vst [vmem:[%s1026 + $0x10] sm:%s1016] %v1035
                  %v1037 = vld [vmem:[%s1025 + $0x14] sm:%s1016]
                  %1038 = vst [vmem:[%s1026 + $0x14] sm:%s1016] %v1037
                  %v1039 = vld [vmem:[%s1025 + $0x18] sm:%s1016]
                  %1040 = vst [vmem:[%s1026 + $0x18] sm:%s1016] %v1039
                  %v1041 = vld [vmem:[%s1025 + $0x1c] sm:%s1016]
                  %1042 = vst [vmem:[%s1026 + $0x1c] sm:%s1016] %v1041
                  %v1043 = vld [vmem:[%s1025 + $0x20] sm:%s1016]
                  %1044 = vst [vmem:[%s1026 + $0x20] sm:%s1016] %v1043
                  %v1045 = vld [vmem:[%s1025 + $0x24] sm:%s1016]
                  %1046 = vst [vmem:[%s1026 + $0x24] sm:%s1016] %v1045
                  %v1047 = vld [vmem:[%s1025 + $0x28] sm:%s1016]
                  %1048 = vst [vmem:[%s1026 + $0x28] sm:%s1016] %v1047
                  %v1049 = vld [vmem:[%s1025 + $0x2c] sm:%s1016]
                  %1050 = vst [vmem:[%s1026 + $0x2c] sm:%s1016] %v1049
                  %v1051 = vld [vmem:[%s1025 + $0x30] sm:%s1016]
                  %1052 = vst [vmem:[%s1026 + $0x30] sm:%s1016] %v1051
                  %v1053 = vld [vmem:[%s1025 + $0x34] sm:%s1016]
                  %1054 = vst [vmem:[%s1026 + $0x34] sm:%s1016] %v1053
                  %v1055 = vld [vmem:[%s1025 + $0x38] sm:%s1016]
                  %1056 = vst [vmem:[%s1026 + $0x38] sm:%s1016] %v1055
                  %v1057 = vld [vmem:[%s1025 + $0x3c] sm:%s1016]
                  %1058 = vst [vmem:[%s1026 + $0x3c] sm:%s1016] %v1057
                  %v1059 = vld [vmem:[%s1025 + $0x40] sm:%s1016]
                  %1060 = vst [vmem:[%s1026 + $0x40] sm:%s1016] %v1059
                  %v1061 = vld [vmem:[%s1025 + $0x44] sm:%s1016]
                  %1062 = vst [vmem:[%s1026 + $0x44] sm:%s1016] %v1061
                  %v1063 = vld [vmem:[%s1025 + $0x48] sm:%s1016]
                  %1064 = vst [vmem:[%s1026 + $0x48] sm:%s1016] %v1063
                  %v1065 = vld [vmem:[%s1025 + $0x4c] sm:%s1016]
                  %1066 = vst [vmem:[%s1026 + $0x4c] sm:%s1016] %v1065
                  %v1067 = vld [vmem:[%s1025 + $0x50] sm:%s1016]
                  %1068 = vst [vmem:[%s1026 + $0x50] sm:%s1016] %v1067
                  %v1069 = vld [vmem:[%s1025 + $0x54] sm:%s1016]
                  %1070 = vst [vmem:[%s1026 + $0x54] sm:%s1016] %v1069
                  %v1071 = vld [vmem:[%s1025 + $0x58] sm:%s1016]
                  %1072 = vst [vmem:[%s1026 + $0x58] sm:%s1016] %v1071
                  %v1073 = vld [vmem:[%s1025 + $0x5c] sm:%s1016]
                  %1074 = vst [vmem:[%s1026 + $0x5c] sm:%s1016] %v1073
                  %v1075 = vld [vmem:[%s1025 + $0x60] sm:%s1016]
                  %1076 = vst [vmem:[%s1026 + $0x60] sm:%s1016] %v1075
                  %v1077 = vld [vmem:[%s1025 + $0x64] sm:%s1016]
                  %1078 = vst [vmem:[%s1026 + $0x64] sm:%s1016] %v1077
                  %v1079 = vld [vmem:[%s1025 + $0x68] sm:%s1016]
                  %1080 = vst [vmem:[%s1026 + $0x68] sm:%s1016] %v1079
                  %v1081 = vld [vmem:[%s1025 + $0x6c] sm:%s1016]
                  %1082 = vst [vmem:[%s1026 + $0x6c] sm:%s1016] %v1081
                  %v1083 = vld [vmem:[%s1025 + $0x70] sm:%s1016]
                  %1084 = vst [vmem:[%s1026 + $0x70] sm:%s1016] %v1083
                  %v1085 = vld [vmem:[%s1025 + $0x74] sm:%s1016]
                  %1086 = vst [vmem:[%s1026 + $0x74] sm:%s1016] %v1085
                  %v1087 = vld [vmem:[%s1025 + $0x78] sm:%s1016]
                  %1088 = vst [vmem:[%s1026 + $0x78] sm:%s1016] %v1087
                  %v1089 = vld [vmem:[%s1025 + $0x7c] sm:%s1016]
                  %1090 = vst [vmem:[%s1026 + $0x7c] sm:%s1016] %v1089
                  %s1091 = sadd.s32 1, %s1024
                  %p1092 = scmp.ge.s32.totalorder %s1091, %s1017
                  %s1093 = scalar_select %p1092, 0, %s1091
                  %s1094 = smul.u32 %s1093, 128
                  %s1095 = smul.u32 %s1093, 128
                  %s1096 = scalar_lea.vmem %s886, %s1094 [#allocation2]
                  %s1097 = scalar_lea.vmem %s897, %s1095
                $region71: #{actor_impala_forward.5} parent=65 // loop_footer
                  %s1021 = sadd.s32 %s1019, 1
                $region72: #{actor_impala_forward.5} parent=65 // loop_footer_branch
                  %1018 = sbr.rel target = $region68
                $region73: #{actor_impala_forward.5} parent=65 // loop_exit
                  _
                %s1098 = sshrl.u32 %s893, 5
                %s1099 = sand.u32 %s893, 31
                %s1100 = smul.u32 %s1098, 32
                %s1101 = smul.u32 4, %s1100
                %s1102 = scalar_lea.vmem %s886, %s1101 [#allocation2]
                %s1103 = smul.u32 4, %s1100
                %s1104 = scalar_lea.vmem %s897, %s1103
                // While loop
                $region74: #{actor_impala_forward.5} parent=65 // loop_pre_header
                  _
                $region75: #{actor_impala_forward.5} parent=65 // loop_header
                  %s1106 = sphi 0, %s1108
                  %p1107 = scmp.ge.s32.totalorder %s1106, %s1099
                  %s1111 = sphi 0, %s1118
                  %s1112 = sphi %s1102, %s1121
                  %s1113 = sphi %s1104, %s1122
                $region76: #{actor_impala_forward.5} parent=65 // loop_header_branch
                  %1110 = sbr.rel (%p1107) target = $region80
                $region77: #{actor_impala_forward.5} parent=65 // loop_body
                  %v1114 = vld [vmem:[%s1112] sm:%s1016]
                  %1115 = vst [vmem:[%s1113] sm:%s1016] %v1114
                  %s1116 = sadd.s32 1, %s1111
                  %p1117 = scmp.ge.s32.totalorder %s1116, %s1099
                  %s1118 = scalar_select %p1117, 0, %s1116
                  %s1119 = smul.u32 %s1118, 4
                  %s1120 = smul.u32 %s1118, 4
                  %s1121 = scalar_lea.vmem %s1102, %s1119 [#allocation2]
                  %s1122 = scalar_lea.vmem %s1104, %s1120
                $region78: #{actor_impala_forward.5} parent=65 // loop_footer
                  %s1108 = sadd.s32 %s1106, 1
                $region79: #{actor_impala_forward.5} parent=65 // loop_footer_branch
                  %1105 = sbr.rel target = $region75
                $region80: #{actor_impala_forward.5} parent=65 // loop_exit
                  _
              $region66: #{actor_impala_forward.5} parent=43 // pred_fallthru
                _
            $region44: #{actor_impala_forward.5} parent=39 // pred_fallthru
              _
            // Predicated region
            $region45: #{actor_impala_forward.5} parent=39 // pred_check
              _
            $region46: #{actor_impala_forward.5} parent=39 // pred_check_branch
              %904 = sbr.rel (0) target = $region48
            $region47: #{actor_impala_forward.5} parent=39 // pred_region
              %s906 = ssub.s32 16, 1
              %s907 = sshrl.u32 %s893, 5
              // While loop
              $region49: #{actor_impala_forward.5} parent=47 // loop_pre_header
                _
              $region50: #{actor_impala_forward.5} parent=47 // loop_header
                %s909 = sphi 0, %s911
                %p910 = scmp.ge.s32.totalorder %s909, %s907
                %s914 = sphi 0, %s983
                %s915 = sphi %s886, %s986
                %s916 = sphi %s897, %s987
              $region51: #{actor_impala_forward.5} parent=47 // loop_header_branch
                %913 = sbr.rel (%p910) target = $region55
              $region52: #{actor_impala_forward.5} parent=47 // loop_body
                %v917 = vld [vmem:[%s915] sm:%s906]
                %918 = vst [vmem:[%s916] sm:%s906] %v917
                %v919 = vld [vmem:[%s915 + $0x4] sm:%s906]
                %920 = vst [vmem:[%s916 + $0x4] sm:%s906] %v919
                %v921 = vld [vmem:[%s915 + $0x8] sm:%s906]
                %922 = vst [vmem:[%s916 + $0x8] sm:%s906] %v921
                %v923 = vld [vmem:[%s915 + $0xc] sm:%s906]
                %924 = vst [vmem:[%s916 + $0xc] sm:%s906] %v923
                %v925 = vld [vmem:[%s915 + $0x10] sm:%s906]
                %926 = vst [vmem:[%s916 + $0x10] sm:%s906] %v925
                %v927 = vld [vmem:[%s915 + $0x14] sm:%s906]
                %928 = vst [vmem:[%s916 + $0x14] sm:%s906] %v927
                %v929 = vld [vmem:[%s915 + $0x18] sm:%s906]
                %930 = vst [vmem:[%s916 + $0x18] sm:%s906] %v929
                %v931 = vld [vmem:[%s915 + $0x1c] sm:%s906]
                %932 = vst [vmem:[%s916 + $0x1c] sm:%s906] %v931
                %v933 = vld [vmem:[%s915 + $0x20] sm:%s906]
                %934 = vst [vmem:[%s916 + $0x20] sm:%s906] %v933
                %v935 = vld [vmem:[%s915 + $0x24] sm:%s906]
                %936 = vst [vmem:[%s916 + $0x24] sm:%s906] %v935
                %v937 = vld [vmem:[%s915 + $0x28] sm:%s906]
                %938 = vst [vmem:[%s916 + $0x28] sm:%s906] %v937
                %v939 = vld [vmem:[%s915 + $0x2c] sm:%s906]
                %940 = vst [vmem:[%s916 + $0x2c] sm:%s906] %v939
                %v941 = vld [vmem:[%s915 + $0x30] sm:%s906]
                %942 = vst [vmem:[%s916 + $0x30] sm:%s906] %v941
                %v943 = vld [vmem:[%s915 + $0x34] sm:%s906]
                %944 = vst [vmem:[%s916 + $0x34] sm:%s906] %v943
                %v945 = vld [vmem:[%s915 + $0x38] sm:%s906]
                %946 = vst [vmem:[%s916 + $0x38] sm:%s906] %v945
                %v947 = vld [vmem:[%s915 + $0x3c] sm:%s906]
                %948 = vst [vmem:[%s916 + $0x3c] sm:%s906] %v947
                %v949 = vld [vmem:[%s915 + $0x40] sm:%s906]
                %950 = vst [vmem:[%s916 + $0x40] sm:%s906] %v949
                %v951 = vld [vmem:[%s915 + $0x44] sm:%s906]
                %952 = vst [vmem:[%s916 + $0x44] sm:%s906] %v951
                %v953 = vld [vmem:[%s915 + $0x48] sm:%s906]
                %954 = vst [vmem:[%s916 + $0x48] sm:%s906] %v953
                %v955 = vld [vmem:[%s915 + $0x4c] sm:%s906]
                %956 = vst [vmem:[%s916 + $0x4c] sm:%s906] %v955
                %v957 = vld [vmem:[%s915 + $0x50] sm:%s906]
                %958 = vst [vmem:[%s916 + $0x50] sm:%s906] %v957
                %v959 = vld [vmem:[%s915 + $0x54] sm:%s906]
                %960 = vst [vmem:[%s916 + $0x54] sm:%s906] %v959
                %v961 = vld [vmem:[%s915 + $0x58] sm:%s906]
                %962 = vst [vmem:[%s916 + $0x58] sm:%s906] %v961
                %v963 = vld [vmem:[%s915 + $0x5c] sm:%s906]
                %964 = vst [vmem:[%s916 + $0x5c] sm:%s906] %v963
                %v965 = vld [vmem:[%s915 + $0x60] sm:%s906]
                %966 = vst [vmem:[%s916 + $0x60] sm:%s906] %v965
                %v967 = vld [vmem:[%s915 + $0x64] sm:%s906]
                %968 = vst [vmem:[%s916 + $0x64] sm:%s906] %v967
                %v969 = vld [vmem:[%s915 + $0x68] sm:%s906]
                %970 = vst [vmem:[%s916 + $0x68] sm:%s906] %v969
                %v971 = vld [vmem:[%s915 + $0x6c] sm:%s906]
                %972 = vst [vmem:[%s916 + $0x6c] sm:%s906] %v971
                %v973 = vld [vmem:[%s915 + $0x70] sm:%s906]
                %974 = vst [vmem:[%s916 + $0x70] sm:%s906] %v973
                %v975 = vld [vmem:[%s915 + $0x74] sm:%s906]
                %976 = vst [vmem:[%s916 + $0x74] sm:%s906] %v975
                %v977 = vld [vmem:[%s915 + $0x78] sm:%s906]
                %978 = vst [vmem:[%s916 + $0x78] sm:%s906] %v977
                %v979 = vld [vmem:[%s915 + $0x7c] sm:%s906]
                %980 = vst [vmem:[%s916 + $0x7c] sm:%s906] %v979
                %s981 = sadd.s32 1, %s914
                %p982 = scmp.ge.s32.totalorder %s981, %s907
                %s983 = scalar_select %p982, 0, %s981
                %s984 = smul.u32 %s983, 128
                %s985 = smul.u32 %s983, 128
                %s986 = scalar_lea.vmem %s886, %s984 [#allocation2]
                %s987 = scalar_lea.vmem %s897, %s985
              $region53: #{actor_impala_forward.5} parent=47 // loop_footer
                %s911 = sadd.s32 %s909, 1
              $region54: #{actor_impala_forward.5} parent=47 // loop_footer_branch
                %908 = sbr.rel target = $region50
              $region55: #{actor_impala_forward.5} parent=47 // loop_exit
                _
              %s988 = sshrl.u32 %s893, 5
              %s989 = sand.u32 %s893, 31
              %s990 = smul.u32 %s988, 32
              %s991 = smul.u32 4, %s990
              %s992 = scalar_lea.vmem %s886, %s991 [#allocation2]
              %s993 = smul.u32 4, %s990
              %s994 = scalar_lea.vmem %s897, %s993
              // While loop
              $region56: #{actor_impala_forward.5} parent=47 // loop_pre_header
                _
              $region57: #{actor_impala_forward.5} parent=47 // loop_header
                %s996 = sphi 0, %s998
                %p997 = scmp.ge.s32.totalorder %s996, %s989
                %s1001 = sphi 0, %s1008
                %s1002 = sphi %s992, %s1011
                %s1003 = sphi %s994, %s1012
              $region58: #{actor_impala_forward.5} parent=47 // loop_header_branch
                %1000 = sbr.rel (%p997) target = $region62
              $region59: #{actor_impala_forward.5} parent=47 // loop_body
                %v1004 = vld [vmem:[%s1002] sm:%s906]
                %1005 = vst [vmem:[%s1003] sm:%s906] %v1004
                %s1006 = sadd.s32 1, %s1001
                %p1007 = scmp.ge.s32.totalorder %s1006, %s989
                %s1008 = scalar_select %p1007, 0, %s1006
                %s1009 = smul.u32 %s1008, 4
                %s1010 = smul.u32 %s1008, 4
                %s1011 = scalar_lea.vmem %s992, %s1009 [#allocation2]
                %s1012 = scalar_lea.vmem %s994, %s1010
              $region60: #{actor_impala_forward.5} parent=47 // loop_footer
                %s998 = sadd.s32 %s996, 1
              $region61: #{actor_impala_forward.5} parent=47 // loop_footer_branch
                %995 = sbr.rel target = $region57
              $region62: #{actor_impala_forward.5} parent=47 // loop_exit
                _
            $region48: #{actor_impala_forward.5} parent=39 // pred_fallthru
              _
          $region40: #{actor_impala_forward.5} parent=35 // pred_fallthru
            _
          %1123 = vnop
        $region36: #{actor_impala_forward.5} parent=31 // pred_fallthru
          _
      $region32: #{actor_impala_forward.5} parent=5 // pred_fallthru
        _
      %p1124 = scmp.le.s32.totalorder 2, %s9
      // Predicated region
      $region81: #{actor_impala_forward.5} parent=5 // pred_check
        %p1125 = pneg %p1124
      $region82: #{actor_impala_forward.5} parent=5 // pred_check_branch
        %1127 = sbr.rel (%p1125) target = $region84
      $region83: #{actor_impala_forward.5} parent=5 // pred_region
        %s1128 = ssub.s32 %s9, 2
        // Predicated region
        $region85: #{actor_impala_forward.5} parent=83 // pred_check
          %p1129 = pneg %p106
        $region86: #{actor_impala_forward.5} parent=83 // pred_check_branch
          %1131 = sbr.rel (%p1129) target = $region88
        $region87: #{actor_impala_forward.5} parent=83 // pred_region
          %s1132 = sand.u32 %s91, 1
          %s1133 = sand.u32 %s91, 1
          %s1134 = smul.addr %s1133, 128
          %s1135 = scalar_lea.vmem [#allocation2], %s1134
        $region88: #{actor_impala_forward.5} parent=83 // pred_fallthru
          _
      $region84: #{actor_impala_forward.5} parent=5 // pred_fallthru
        _
    $region6: #{actor_impala_forward.5} parent=1 // loop_footer
      %s13 = sadd.s32 1, %s9
    $region7: #{actor_impala_forward.5} parent=1 // loop_footer_branch
      %8 = sbr.rel target = $region3
    $region8: #{actor_impala_forward.5} parent=1 // loop_exit
      _

// kernel: actor_impala_forward.6
$region0: #{actor_impala_forward.6}
  #allocation0 [shape = 'u32[]', space=smem, size = 0x4, offset = 0x4, fixed_abs, tag = 'smem constant byte address 0x4 - core index']
  #allocation1 [shape = 'u32[144,128]{1,0:T(1,128)}', space=vmem, size = 0x12000, scoped, tag = 'internal scratch']
  %s0 = inlined_call_operand.vmem [shape: bf16[400,128], index: 0, kind: input, shape index: {}]
  %s1 = inlined_call_operand.vmem [shape: bf16[128,16], index: 1, kind: input, shape index: {}]
  %s2 = inlined_call_operand.vmem [shape: f32[1,16], index: 2, kind: input, shape index: {}]
  %s3 = inlined_call_operand.vmem [shape: bf16[400,16], index: 3, kind: output, shape index: {}]
  %s4 = sld [smem:[#allocation0]]
  $region89: #{actor_impala_forward.6} parent=0
    _
  %s6 = ssub.s32 1, %s4
  %s7 = scalar_select 0, %s6, %s4
  $region1: #{actor_impala_forward.6} parent=0
    #allocation2 [shape = 'u8[131072]{0}', space=vmem, size = 0x20000, scoped, tag = 'output window, operand 0']
    loop: start=0, step=1, limit=4
    $region2: #{actor_impala_forward.6} parent=1 // loop_pre_header
      _
    $region3: #{actor_impala_forward.6} parent=1 // loop_header
      %s9 = sphi 0, %s13
      %p10 = scmp.ge.s32.totalorder %s9, 4
      %s19 = sphi 0, %s21
      %s22 = sphi 0, %s19
      %s23 = sphi 0, %s22
      %s39 = sphi 0, %s23
      %s43 = sphi 0, %s43
      %s45 = sphi 0, %s43
      %s46 = sphi 0, %s45
      %s60 = sphi 0, %s46
      %s64 = sphi 0, %s64
      %s66 = sphi 0, %s64
      %s67 = sphi 0, %s66
      %s81 = sphi 0, %s67
      %s87 = sphi 0, %s89
      %s90 = sphi 0, %s87
      %s91 = sphi 0, %s90
      %s107 = sphi 0, %s91
    $region4: #{actor_impala_forward.6} parent=1 // loop_header_branch
      %12 = sbr.rel (%p10) target = $region8
    $region5: #{actor_impala_forward.6} parent=1 // loop_body
      %s14 = ssub.s32 %s9, 1
      %s15 = ssub.s32 %s9, 2
      %s16 = sadd.s32 %s9, 1
      %s17 = ssub.s32 %s9, %s16
      %p18 = scmp.eq.s32.totalorder %s17, 0
      %s20 = sadd.s32 %s19, 1
      %s21 = scalar_select %p18, %s19, %s20
      %p24 = pneg %p18
      %p25 = scmp.eq.s32.totalorder %s9, 1
      %p26 = por %p24, %p25
      %p27 = scmp.ne.s32.totalorder %s19, %s22
      %p28 = scmp.eq.s32.totalorder %s9, 0
      %p29 = por %p27, %p28
      %p30 = scmp.ne.s32.totalorder %s19, %s22
      %p31 = scmp.eq.s32.totalorder %s14, 1
      %p32 = por %p30, %p31
      %p33 = scmp.ne.s32.totalorder %s22, %s23
      %p34 = scmp.eq.s32.totalorder %s14, 0
      %p35 = por %p33, %p34
      %p36 = scmp.ne.s32.totalorder %s22, %s23
      %p37 = scmp.eq.s32.totalorder %s15, 1
      %p38 = por %p36, %p37
      %p40 = scmp.ne.s32.totalorder %s23, %s39
      %p41 = scmp.eq.s32.totalorder %s15, 0
      %p42 = por %p40, %p41
      %s44 = sadd.s32 %s43, 1
      %p47 = scmp.eq.s32.totalorder %s9, 1
      %p48 = scmp.ne.s32.totalorder %s43, %s45
      %p49 = scmp.eq.s32.totalorder %s9, 0
      %p50 = por %p48, %p49
      %p51 = scmp.ne.s32.totalorder %s43, %s45
      %p52 = scmp.eq.s32.totalorder %s14, 1
      %p53 = por %p51, %p52
      %p54 = scmp.ne.s32.totalorder %s45, %s46
      %p55 = scmp.eq.s32.totalorder %s14, 0
      %p56 = por %p54, %p55
      %p57 = scmp.ne.s32.totalorder %s45, %s46
      %p58 = scmp.eq.s32.totalorder %s15, 1
      %p59 = por %p57, %p58
      %p61 = scmp.ne.s32.totalorder %s46, %s60
      %p62 = scmp.eq.s32.totalorder %s15, 0
      %p63 = por %p61, %p62
      %s65 = sadd.s32 %s64, 1
      %p68 = scmp.eq.s32.totalorder %s9, 1
      %p69 = scmp.ne.s32.totalorder %s64, %s66
      %p70 = scmp.eq.s32.totalorder %s9, 0
      %p71 = por %p69, %p70
      %p72 = scmp.ne.s32.totalorder %s64, %s66
      %p73 = scmp.eq.s32.totalorder %s14, 1
      %p74 = por %p72, %p73
      %p75 = scmp.ne.s32.totalorder %s66, %s67
      %p76 = scmp.eq.s32.totalorder %s14, 0
      %p77 = por %p75, %p76
      %p78 = scmp.ne.s32.totalorder %s66, %s67
      %p79 = scmp.eq.s32.totalorder %s15, 1
      %p80 = por %p78, %p79
      %p82 = scmp.ne.s32.totalorder %s67, %s81
      %p83 = scmp.eq.s32.totalorder %s15, 0
      %p84 = por %p82, %p83
      %s85 = ssub.s32 %s9, %s16
      %p86 = scmp.eq.s32.totalorder %s85, 0
      %s88 = sadd.s32 %s87, 1
      %s89 = scalar_select %p86, %s87, %s88
      %p92 = pneg %p86
      %p93 = scmp.eq.s32.totalorder %s9, 1
      %p94 = por %p92, %p93
      %p95 = scmp.ne.s32.totalorder %s87, %s90
      %p96 = scmp.eq.s32.totalorder %s9, 0
      %p97 = por %p95, %p96
      %p98 = scmp.ne.s32.totalorder %s87, %s90
      %p99 = scmp.eq.s32.totalorder %s14, 1
      %p100 = por %p98, %p99
      %p101 = scmp.ne.s32.totalorder %s90, %s91
      %p102 = scmp.eq.s32.totalorder %s14, 0
      %p103 = por %p101, %p102
      %p104 = scmp.ne.s32.totalorder %s90, %s91
      %p105 = scmp.eq.s32.totalorder %s15, 1
      %p106 = por %p104, %p105
      %p108 = scmp.ne.s32.totalorder %s91, %s107
      %p109 = scmp.eq.s32.totalorder %s15, 0
      %p110 = por %p108, %p109
      %p111 = scmp.le.s32.totalorder 1, %s9
      %p112 = scmp.lt.s32.totalorder %s9, 3
      %p113 = pnand %p111, %p112
      %p114 = pneg %p113
      // Predicated region
      $region9: #{actor_impala_forward.6} parent=5 // pred_check
        _
      $region10: #{actor_impala_forward.6} parent=5 // pred_check_branch
        %116 = sbr.rel (%p113) target = $region12
      $region11: #{actor_impala_forward.6} parent=5 // pred_region
        %s117 = ssub.s32 %s9, 1
        // Predicated region
        $region13: #{actor_impala_forward.6} parent=11 // pred_check
          %p118 = pneg %p56
        $region14: #{actor_impala_forward.6} parent=11 // pred_check_branch
          %120 = sbr.rel (%p118) target = $region16
        $region15: #{actor_impala_forward.6} parent=11 // pred_region
          _
        $region16: #{actor_impala_forward.6} parent=11 // pred_fallthru
          _
        // Predicated region
        $region17: #{actor_impala_forward.6} parent=11 // pred_check
          %p121 = pneg %p77
        $region18: #{actor_impala_forward.6} parent=11 // pred_check_branch
          %123 = sbr.rel (%p121) target = $region20
        $region19: #{actor_impala_forward.6} parent=11 // pred_region
          _
        $region20: #{actor_impala_forward.6} parent=11 // pred_fallthru
          _
      $region12: #{actor_impala_forward.6} parent=5 // pred_fallthru
        _
      %p124 = scmp.lt.s32.totalorder %s9, 2
      // Predicated region
      $region21: #{actor_impala_forward.6} parent=5 // pred_check
        %p125 = pneg %p124
      $region22: #{actor_impala_forward.6} parent=5 // pred_check_branch
        %127 = sbr.rel (%p125) target = $region24
      $region23: #{actor_impala_forward.6} parent=5 // pred_region
        // Predicated region
        $region25: #{actor_impala_forward.6} parent=23 // pred_check
          %p128 = pneg %p29
        $region26: #{actor_impala_forward.6} parent=23 // pred_check_branch
          %130 = sbr.rel (%p128) target = $region28
        $region27: #{actor_impala_forward.6} parent=23 // pred_region
          %s131 = smul.u32 32, %s9
          %s132 = ssub.s32 50, %s131
          %p133 = scmp.lt.s32.totalorder %s132, 32
          %s134 = scalar_select %p133, %s132, 32
          %s135 = smul.u32 64, %s134
          %p136 = scmp.lt.s32.totalorder %s131, 49
          %s137 = scalar_select %p136, %s131, 49
          %s138 = smul.addr %s137, 4
          %s139 = scalar_lea.vmem %s0, %s138
          %s140 = smul.u32 32, %s9
          %s141 = ssub.s32 50, %s140
          %p142 = scmp.lt.s32.totalorder %s141, 32
          %s143 = scalar_select %p142, %s141, 32
          %s144 = smul.u32 64, %s143
        $region28: #{actor_impala_forward.6} parent=23 // pred_fallthru
          _
      $region24: #{actor_impala_forward.6} parent=5 // pred_fallthru
        _
      %p145 = scmp.le.s32.totalorder 1, %s9
      %p146 = scmp.lt.s32.totalorder %s9, 3
      %p147 = pnand %p145, %p146
      %p148 = pneg %p147
      // Predicated region
      $region29: #{actor_impala_forward.6} parent=5 // pred_check
        _
      $region30: #{actor_impala_forward.6} parent=5 // pred_check_branch
        %150 = sbr.rel (%p147) target = $region32
      $region31: #{actor_impala_forward.6} parent=5 // pred_region
        %s151 = ssub.s32 %s9, 1
        %s152 = smul.u32 32, %s14
        %s153 = ssub.s32 50, %s152
        %p154 = scmp.lt.s32.totalorder %s153, 32
        %s155 = scalar_select %p154, %s153, 32
        %s156 = smul.u32 64, %s155
        %p157 = scmp.lt.s32.totalorder %s152, 49
        %s158 = scalar_select %p157, %s152, 49
        %s159 = smul.addr %s158, 4
        %s160 = scalar_lea.vmem %s0, %s159
        %p161 = pneg %p35
        %p162 = pneg %p32
        %p163 = pneg %p56
        %p164 = pneg %p53
        %p165 = pneg %p77
        %p166 = pneg %p74
        %p167 = pneg %p103
        %p168 = pneg %p100
        %s169 = sand.u32 %s90, 1
        %s170 = sand.u32 %s90, 1
        %s171 = smul.addr %s170, 128
        %s172 = scalar_lea.vmem [#allocation2], %s171
        %s173 = smul.u32 32, %s14
        %s174 = ssub.s32 50, %s173
        %p175 = scmp.lt.s32.totalorder %s174, 32
        %s176 = scalar_select %p175, %s174, 32
        %s177 = smul.u32 64, %s176
        %p178 = scmp.lt.s32.totalorder %s173, 49
        %s179 = scalar_select %p178, %s173, 49
        %s180 = smul.addr %s179, 4
        %s181 = scalar_lea.vmem %s0, %s180
        %s182 = smul.u32 32, %s14
        %s183 = ssub.s32 50, %s182
        %p184 = scmp.lt.s32.totalorder %s183, 32
        %s185 = scalar_select %p184, %s183, 32
        %s186 = smul.u32 64, %s185
        %s187 = smul.u32 32, %s14
        %s188 = ssub.s32 50, %s187
        %p189 = scmp.lt.s32.totalorder %s188, 32
        %s190 = scalar_select %p189, %s188, 32
        %s191 = smul.u32 64, %s190
        %v193 = vld [vmem:[%s181] sm:$0xf]
        %v194 = vld [vmem:[%s181 + $0x4] sm:$0xf]
        %v195 = vld [vmem:[%s181 + $0x8] sm:$0xf]
        %v196 = vld [vmem:[%s181 + $0xc] sm:$0xf]
        %v197 = vld [vmem:[%s181 + $0x10] sm:$0xf]
        %v198 = vld [vmem:[%s181 + $0x14] sm:$0xf]
        %v199 = vld [vmem:[%s181 + $0x18] sm:$0xf]
        %v200 = vld [vmem:[%s181 + $0x1c] sm:$0xf]
        %v201 = vld [vmem:[%s181 + $0x20] sm:$0xf]
        %v202 = vld [vmem:[%s181 + $0x24] sm:$0xf]
        %v203 = vld [vmem:[%s181 + $0x28] sm:$0xf]
        %v204 = vld [vmem:[%s181 + $0x2c] sm:$0xf]
        %v205 = vld [vmem:[%s181 + $0x30] sm:$0xf]
        %v206 = vld [vmem:[%s181 + $0x34] sm:$0xf]
        %v207 = vld [vmem:[%s181 + $0x38] sm:$0xf]
        %v208 = vld [vmem:[%s181 + $0x3c] sm:$0xf]
        %v209 = vld [vmem:[%s181 + $0x40] sm:$0xf]
        %v210 = vld [vmem:[%s181 + $0x44] sm:$0xf]
        %v211 = vld [vmem:[%s181 + $0x48] sm:$0xf]
        %v212 = vld [vmem:[%s181 + $0x4c] sm:$0xf]
        %v213 = vld [vmem:[%s181 + $0x50] sm:$0xf]
        %v214 = vld [vmem:[%s181 + $0x54] sm:$0xf]
        %v215 = vld [vmem:[%s181 + $0x58] sm:$0xf]
        %v216 = vld [vmem:[%s181 + $0x5c] sm:$0xf]
        %v217 = vld [vmem:[%s181 + $0x60] sm:$0xf]
        %v218 = vld [vmem:[%s181 + $0x64] sm:$0xf]
        %v219 = vld [vmem:[%s181 + $0x68] sm:$0xf]
        %v220 = vld [vmem:[%s181 + $0x6c] sm:$0xf]
        %v221 = vld [vmem:[%s181 + $0x70] sm:$0xf]
        %v222 = vld [vmem:[%s181 + $0x74] sm:$0xf]
        %v223 = vld [vmem:[%s181 + $0x78] sm:$0xf]
        %v224 = vld [vmem:[%s181 + $0x7c] sm:$0xf]
        %v225 = vld [vmem:[%s1] sm:$0xf]
        %v226 = vld [vmem:[%s1 + $0x4] sm:$0xf]
        %v227 = vld [vmem:[%s1 + $0x8] sm:$0xf]
        %v228 = vld [vmem:[%s1 + $0xc] sm:$0xf]
        %v229 = vld [vmem:[%s1 + $0x10] sm:$0xf]
        %v230 = vld [vmem:[%s1 + $0x14] sm:$0xf]
        %v231 = vld [vmem:[%s1 + $0x18] sm:$0xf]
        %v232 = vld [vmem:[%s1 + $0x1c] sm:$0xf]
        %v233 = vld [vmem:[%s1 + $0x20] sm:$0xf]
        %v234 = vld [vmem:[%s1 + $0x24] sm:$0xf]
        %v235 = vld [vmem:[%s1 + $0x28] sm:$0xf]
        %v236 = vld [vmem:[%s1 + $0x2c] sm:$0xf]
        %v237 = vld [vmem:[%s1 + $0x30] sm:$0xf]
        %v238 = vld [vmem:[%s1 + $0x34] sm:$0xf]
        %v239 = vld [vmem:[%s1 + $0x38] sm:$0xf]
        %v240 = vld [vmem:[%s1 + $0x3c] sm:$0xf]
        %v241 = vld [vmem:[%s2] sm:$0x1]
        %v243 = vlaneseq
        %v244 = vshrl.u32 %v243, 7
        %v245 = vsub.s32 0, %v244
        %v246 = vrot.slane %v241, %v245
        %v280 = vunpack.c.l.b16 %v193
        %v281 = vunpack.c.l.b16 %v194
        %v282 = vunpack.c.l.b16 %v195
        %v283 = vunpack.c.l.b16 %v196
        %v284 = vunpack.c.l.b16 %v197
        %v285 = vunpack.c.l.b16 %v198
        %v286 = vunpack.c.l.b16 %v199
        %v287 = vunpack.c.l.b16 %v200
        %v288 = vunpack.c.l.b16 %v201
        %v289 = vunpack.c.l.b16 %v202
        %v290 = vunpack.c.l.b16 %v203
        %v291 = vunpack.c.l.b16 %v204
        %v292 = vunpack.c.l.b16 %v205
        %v293 = vunpack.c.l.b16 %v206
        %v294 = vunpack.c.l.b16 %v207
        %v295 = vunpack.c.l.b16 %v208
        %v296 = vunpack.c.l.b16 %v209
        %v297 = vunpack.c.l.b16 %v210
        %v298 = vunpack.c.l.b16 %v211
        %v299 = vunpack.c.l.b16 %v212
        %v300 = vunpack.c.l.b16 %v213
        %v301 = vunpack.c.l.b16 %v214
        %v302 = vunpack.c.l.b16 %v215
        %v303 = vunpack.c.l.b16 %v216
        %v304 = vunpack.c.l.b16 %v217
        %v305 = vunpack.c.l.b16 %v218
        %v306 = vunpack.c.l.b16 %v219
        %v307 = vunpack.c.l.b16 %v220
        %v308 = vunpack.c.l.b16 %v221
        %v309 = vunpack.c.l.b16 %v222
        %v310 = vunpack.c.l.b16 %v223
        %v311 = vunpack.c.l.b16 %v224
        %v312 = vpack.c.b16 %v281, %v280
        %v313 = vpack.c.b16 %v283, %v282
        %v314 = vpack.c.b16 %v285, %v284
        %v315 = vpack.c.b16 %v287, %v286
        %v316 = vpack.c.b16 %v289, %v288
        %v317 = vpack.c.b16 %v291, %v290
        %v318 = vpack.c.b16 %v293, %v292
        %v319 = vpack.c.b16 %v295, %v294
        %v320 = vpack.c.b16 %v297, %v296
        %v321 = vpack.c.b16 %v299, %v298
        %v322 = vpack.c.b16 %v301, %v300
        %v323 = vpack.c.b16 %v303, %v302
        %v324 = vpack.c.b16 %v305, %v304
        %v325 = vpack.c.b16 %v307, %v306
        %v326 = vpack.c.b16 %v309, %v308
        %v327 = vpack.c.b16 %v311, %v310
        %v360 = vunpack.c.l.b16 %v225
        %v361 = vunpack.c.l.b16 %v226
        %v362 = vunpack.c.l.b16 %v227
        %v363 = vunpack.c.l.b16 %v228
        %v364 = vunpack.c.l.b16 %v229
        %v365 = vunpack.c.l.b16 %v230
        %v366 = vunpack.c.l.b16 %v231
        %v367 = vunpack.c.l.b16 %v232
        %v368 = vunpack.c.l.b16 %v233
        %v369 = vunpack.c.l.b16 %v234
        %v370 = vunpack.c.l.b16 %v235
        %v371 = vunpack.c.l.b16 %v236
        %v372 = vunpack.c.l.b16 %v237
        %v373 = vunpack.c.l.b16 %v238
        %v374 = vunpack.c.l.b16 %v239
        %v375 = vunpack.c.l.b16 %v240
        %v376 = vpack.c.b16 %v361, %v360
        %v377 = vpack.c.b16 %v363, %v362
        %v378 = vpack.c.b16 %v365, %v364
        %v379 = vpack.c.b16 %v367, %v366
        %v380 = vpack.c.b16 %v369, %v368
        %v381 = vpack.c.b16 %v371, %v370
        %v382 = vpack.c.b16 %v373, %v372
        %v383 = vpack.c.b16 %v375, %v374
        %392 = vmatprep.subr.bf16.mxu0 0
        %393 = vmatpush1.bf16.msra.mxu0 %v383
        %394 = vmatprep.subr.bf16.mxu0 0
        %395 = vmatpush1.bf16.msra.mxu0 %v382
        %396 = vmatprep.subr.bf16.mxu0 0
        %397 = vmatpush1.bf16.msra.mxu0 %v381
        %398 = vmatprep.subr.bf16.mxu0 0
        %399 = vmatpush1.bf16.msra.mxu0 %v380
        %400 = vmatprep.subr.bf16.mxu0 0
        %401 = vmatpush1.bf16.msra.mxu0 %v379
        %402 = vmatprep.subr.bf16.mxu0 0
        %403 = vmatpush1.bf16.msra.mxu0 %v378
        %404 = vmatprep.subr.bf16.mxu0 0
        %405 = vmatpush1.bf16.msra.mxu0 %v377
        %406 = vmatprep.subr.bf16.mxu0 0
        %407 = vmatpush1.bf16.msra.mxu0 %v376
        %408 = vmatprep.subr.bf16.mxu0 0
        %409 = vmatpush2.bf16.msra.mxu0 0
        %410 = vmatprep.subr.bf16.mxu0 0
        %411 = vmatpush2.bf16.msra.mxu0 0
        %412 = vmatprep.subr.bf16.mxu0 0
        %413 = vmatpush2.bf16.msra.mxu0 0
        %414 = vmatprep.subr.bf16.mxu0 0
        %415 = vmatpush2.bf16.msra.mxu0 0
        %416 = vmatprep.subr.bf16.mxu0 0
        %417 = vmatpush2.bf16.msra.mxu0 0
        %418 = vmatprep.subr.bf16.mxu0 0
        %419 = vmatpush2.bf16.msra.mxu0 0
        %420 = vmatprep.subr.bf16.mxu0 0
        %421 = vmatpush2.bf16.msra.mxu0 0
        %422 = vmatprep.subr.bf16.mxu0 0
        %423 = vmatpush2.bf16.msra.mxu0 0
        %424 = vmatprep.mubr.bf16.mxu0 0
        %425 = vmatmul.mubr.bf16.gmra.mxu0 %v312
        %v426 = vpop.f32.mrf.mxu0
        %v427 = vadd.f32 %v246, %v426
        %v428 = vpop.f32.mrf.mxu0
        %v429 = vpop.f32.mrf.mxu0
        %v430 = vadd.f32 %v246, %v429
        %v431 = vpop.f32.mrf.mxu0
        %432 = vmatprep.mubr.bf16.mxu0 0
        %433 = vmatmul.mubr.bf16.gmra.mxu0 %v313
        %v434 = vpop.f32.mrf.mxu0
        %v435 = vadd.f32 %v246, %v434
        %v436 = vpop.f32.mrf.mxu0
        %v437 = vpop.f32.mrf.mxu0
        %v438 = vadd.f32 %v246, %v437
        %v439 = vpop.f32.mrf.mxu0
        %440 = vmatprep.mubr.bf16.mxu0 0
        %441 = vmatmul.mubr.bf16.gmra.mxu0 %v314
        %v442 = vpop.f32.mrf.mxu0
        %v443 = vadd.f32 %v246, %v442
        %v444 = vpop.f32.mrf.mxu0
        %v445 = vpop.f32.mrf.mxu0
        %v446 = vadd.f32 %v246, %v445
        %v447 = vpop.f32.mrf.mxu0
        %448 = vmatprep.mubr.bf16.mxu0 0
        %449 = vmatmul.mubr.bf16.gmra.mxu0 %v315
        %v450 = vpop.f32.mrf.mxu0
        %v451 = vadd.f32 %v246, %v450
        %v452 = vpop.f32.mrf.mxu0
        %v453 = vpop.f32.mrf.mxu0
        %v454 = vadd.f32 %v246, %v453
        %v455 = vpop.f32.mrf.mxu0
        %456 = vmatprep.mubr.bf16.mxu0 0
        %457 = vmatmul.mubr.bf16.gmra.mxu0 %v316
        %v458 = vpop.f32.mrf.mxu0
        %v459 = vadd.f32 %v246, %v458
        %v460 = vpop.f32.mrf.mxu0
        %v461 = vpop.f32.mrf.mxu0
        %v462 = vadd.f32 %v246, %v461
        %v463 = vpop.f32.mrf.mxu0
        %464 = vmatprep.mubr.bf16.mxu0 0
        %465 = vmatmul.mubr.bf16.gmra.mxu0 %v317
        %v466 = vpop.f32.mrf.mxu0
        %v467 = vadd.f32 %v246, %v466
        %v468 = vpop.f32.mrf.mxu0
        %v469 = vpop.f32.mrf.mxu0
        %v470 = vadd.f32 %v246, %v469
        %v471 = vpop.f32.mrf.mxu0
        %472 = vmatprep.mubr.bf16.mxu0 0
        %473 = vmatmul.mubr.bf16.gmra.mxu0 %v318
        %v474 = vpop.f32.mrf.mxu0
        %v475 = vadd.f32 %v246, %v474
        %v476 = vpop.f32.mrf.mxu0
        %v477 = vpop.f32.mrf.mxu0
        %v478 = vadd.f32 %v246, %v477
        %v479 = vpop.f32.mrf.mxu0
        %480 = vmatprep.mubr.bf16.mxu0 0
        %481 = vmatmul.mubr.bf16.gmra.mxu0 %v319
        %v482 = vpop.f32.mrf.mxu0
        %v483 = vadd.f32 %v246, %v482
        %v484 = vpop.f32.mrf.mxu0
        %v485 = vpop.f32.mrf.mxu0
        %v486 = vadd.f32 %v246, %v485
        %v487 = vpop.f32.mrf.mxu0
        %488 = vmatprep.mubr.bf16.mxu0 0
        %489 = vmatmul.mubr.bf16.gmra.mxu0 %v320
        %v490 = vpop.f32.mrf.mxu0
        %v491 = vadd.f32 %v246, %v490
        %v492 = vpop.f32.mrf.mxu0
        %v493 = vpop.f32.mrf.mxu0
        %v494 = vadd.f32 %v246, %v493
        %v495 = vpop.f32.mrf.mxu0
        %496 = vmatprep.mubr.bf16.mxu0 0
        %497 = vmatmul.mubr.bf16.gmra.mxu0 %v321
        %v498 = vpop.f32.mrf.mxu0
        %v499 = vadd.f32 %v246, %v498
        %v500 = vpop.f32.mrf.mxu0
        %v501 = vpop.f32.mrf.mxu0
        %v502 = vadd.f32 %v246, %v501
        %v503 = vpop.f32.mrf.mxu0
        %504 = vmatprep.mubr.bf16.mxu0 0
        %505 = vmatmul.mubr.bf16.gmra.mxu0 %v322
        %v506 = vpop.f32.mrf.mxu0
        %v507 = vadd.f32 %v246, %v506
        %v508 = vpop.f32.mrf.mxu0
        %v509 = vpop.f32.mrf.mxu0
        %v510 = vadd.f32 %v246, %v509
        %v511 = vpop.f32.mrf.mxu0
        %512 = vmatprep.mubr.bf16.mxu0 0
        %513 = vmatmul.mubr.bf16.gmra.mxu0 %v323
        %v514 = vpop.f32.mrf.mxu0
        %v515 = vadd.f32 %v246, %v514
        %v516 = vpop.f32.mrf.mxu0
        %v517 = vpop.f32.mrf.mxu0
        %v518 = vadd.f32 %v246, %v517
        %v519 = vpop.f32.mrf.mxu0
        %520 = vmatprep.mubr.bf16.mxu0 0
        %521 = vmatmul.mubr.bf16.gmra.mxu0 %v324
        %v522 = vpop.f32.mrf.mxu0
        %v523 = vadd.f32 %v246, %v522
        %v524 = vpop.f32.mrf.mxu0
        %v525 = vpop.f32.mrf.mxu0
        %v526 = vadd.f32 %v246, %v525
        %v527 = vpop.f32.mrf.mxu0
        %528 = vmatprep.mubr.bf16.mxu0 0
        %529 = vmatmul.mubr.bf16.gmra.mxu0 %v325
        %v530 = vpop.f32.mrf.mxu0
        %v531 = vadd.f32 %v246, %v530
        %v532 = vpop.f32.mrf.mxu0
        %v533 = vpop.f32.mrf.mxu0
        %v534 = vadd.f32 %v246, %v533
        %v535 = vpop.f32.mrf.mxu0
        %536 = vmatprep.mubr.bf16.mxu0 0
        %537 = vmatmul.mubr.bf16.gmra.mxu0 %v326
        %v538 = vpop.f32.mrf.mxu0
        %v539 = vadd.f32 %v246, %v538
        %v540 = vpop.f32.mrf.mxu0
        %v541 = vpop.f32.mrf.mxu0
        %v542 = vadd.f32 %v246, %v541
        %v543 = vpop.f32.mrf.mxu0
        %544 = vmatprep.mubr.bf16.mxu0 0
        %545 = vmatmul.mubr.bf16.gmra.mxu0 %v327
        %v546 = vpop.f32.mrf.mxu0
        %v547 = vadd.f32 %v246, %v546
        %v548 = vpop.f32.mrf.mxu0
        %v549 = vpop.f32.mrf.mxu0
        %v550 = vadd.f32 %v246, %v549
        %v551 = vpop.f32.mrf.mxu0
        %552 = vdwg.mxu0
        %v553 = vmax.f32 %v427, 0.0
        %v554 = vmax.f32 %v430, 0.0
        %v555 = vmax.f32 %v435, 0.0
        %v556 = vmax.f32 %v438, 0.0
        %v557 = vmax.f32 %v443, 0.0
        %v558 = vmax.f32 %v446, 0.0
        %v559 = vmax.f32 %v451, 0.0
        %v560 = vmax.f32 %v454, 0.0
        %v561 = vmax.f32 %v459, 0.0
        %v562 = vmax.f32 %v462, 0.0
        %v563 = vmax.f32 %v467, 0.0
        %v564 = vmax.f32 %v470, 0.0
        %v565 = vmax.f32 %v475, 0.0
        %v566 = vmax.f32 %v478, 0.0
        %v567 = vmax.f32 %v483, 0.0
        %v568 = vmax.f32 %v486, 0.0
        %v569 = vmax.f32 %v491, 0.0
        %v570 = vmax.f32 %v494, 0.0
        %v571 = vmax.f32 %v499, 0.0
        %v572 = vmax.f32 %v502, 0.0
        %v573 = vmax.f32 %v507, 0.0
        %v574 = vmax.f32 %v510, 0.0
        %v575 = vmax.f32 %v515, 0.0
        %v576 = vmax.f32 %v518, 0.0
        %v577 = vmax.f32 %v523, 0.0
        %v578 = vmax.f32 %v526, 0.0
        %v579 = vmax.f32 %v531, 0.0
        %v580 = vmax.f32 %v534, 0.0
        %v581 = vmax.f32 %v539, 0.0
        %v582 = vmax.f32 %v542, 0.0
        %v583 = vmax.f32 %v547, 0.0
        %v584 = vmax.f32 %v550, 0.0
        %v585 = vpack.c.bf16 %v554, %v553
        %v586 = vpack.c.bf16 %v556, %v555
        %v587 = vpack.c.bf16 %v558, %v557
        %v588 = vpack.c.bf16 %v560, %v559
        %v589 = vpack.c.bf16 %v562, %v561
        %v590 = vpack.c.bf16 %v564, %v563
        %v591 = vpack.c.bf16 %v566, %v565
        %v592 = vpack.c.bf16 %v568, %v567
        %v593 = vpack.c.bf16 %v570, %v569
        %v594 = vpack.c.bf16 %v572, %v571
        %v595 = vpack.c.bf16 %v574, %v573
        %v596 = vpack.c.bf16 %v576, %v575
        %v597 = vpack.c.bf16 %v578, %v577
        %v598 = vpack.c.bf16 %v580, %v579
        %v599 = vpack.c.bf16 %v582, %v581
        %v600 = vpack.c.bf16 %v584, %v583
        %v617 = vunpack.c.l.b16 %v585
        %v618 = vunpack.c.h.b16 %v585
        %v619 = vunpack.c.l.b16 %v586
        %v620 = vunpack.c.h.b16 %v586
        %v621 = vunpack.c.l.b16 %v587
        %v622 = vunpack.c.h.b16 %v587
        %v623 = vunpack.c.l.b16 %v588
        %v624 = vunpack.c.h.b16 %v588
        %v625 = vunpack.c.l.b16 %v589
        %v626 = vunpack.c.h.b16 %v589
        %v627 = vunpack.c.l.b16 %v590
        %v628 = vunpack.c.h.b16 %v590
        %v629 = vunpack.c.l.b16 %v591
        %v630 = vunpack.c.h.b16 %v591
        %v631 = vunpack.c.l.b16 %v592
        %v632 = vunpack.c.h.b16 %v592
        %v633 = vunpack.c.l.b16 %v593
        %v634 = vunpack.c.h.b16 %v593
        %v635 = vunpack.c.l.b16 %v594
        %v636 = vunpack.c.h.b16 %v594
        %v637 = vunpack.c.l.b16 %v595
        %v638 = vunpack.c.h.b16 %v595
        %v639 = vunpack.c.l.b16 %v596
        %v640 = vunpack.c.h.b16 %v596
        %v641 = vunpack.c.l.b16 %v597
        %v642 = vunpack.c.h.b16 %v597
        %v643 = vunpack.c.l.b16 %v598
        %v644 = vunpack.c.h.b16 %v598
        %v645 = vunpack.c.l.b16 %v599
        %v646 = vunpack.c.h.b16 %v599
        %v647 = vunpack.c.l.b16 %v600
        %v648 = vunpack.c.h.b16 %v600
        %v649 = vpack.c.b16 %v617, %v617
        %v650 = vpack.c.b16 %v618, %v618
        %v651 = vpack.c.b16 %v619, %v619
        %v652 = vpack.c.b16 %v620, %v620
        %v653 = vpack.c.b16 %v621, %v621
        %v654 = vpack.c.b16 %v622, %v622
        %v655 = vpack.c.b16 %v623, %v623
        %v656 = vpack.c.b16 %v624, %v624
        %v657 = vpack.c.b16 %v625, %v625
        %v658 = vpack.c.b16 %v626, %v626
        %v659 = vpack.c.b16 %v627, %v627
        %v660 = vpack.c.b16 %v628, %v628
        %v661 = vpack.c.b16 %v629, %v629
        %v662 = vpack.c.b16 %v630, %v630
        %v663 = vpack.c.b16 %v631, %v631
        %v664 = vpack.c.b16 %v632, %v632
        %v665 = vpack.c.b16 %v633, %v633
        %v666 = vpack.c.b16 %v634, %v634
        %v667 = vpack.c.b16 %v635, %v635
        %v668 = vpack.c.b16 %v636, %v636
        %v669 = vpack.c.b16 %v637, %v637
        %v670 = vpack.c.b16 %v638, %v638
        %v671 = vpack.c.b16 %v639, %v639
        %v672 = vpack.c.b16 %v640, %v640
        %v673 = vpack.c.b16 %v641, %v641
        %v674 = vpack.c.b16 %v642, %v642
        %v675 = vpack.c.b16 %v643, %v643
        %v676 = vpack.c.b16 %v644, %v644
        %v677 = vpack.c.b16 %v645, %v645
        %v678 = vpack.c.b16 %v646, %v646
        %v679 = vpack.c.b16 %v647, %v647
        %v680 = vpack.c.b16 %v648, %v648
        %vm713 = vcmask 125952
        %714 = vst.msk [vmem:[%s172] sm:$0xf] %vm713, %v649
        %715 = vst.msk [vmem:[%s172 + $0x4] sm:$0xf] %vm713, %v650
        %716 = vst.msk [vmem:[%s172 + $0x8] sm:$0xf] %vm713, %v651
        %717 = vst.msk [vmem:[%s172 + $0xc] sm:$0xf] %vm713, %v652
        %718 = vst.msk [vmem:[%s172 + $0x10] sm:$0xf] %vm713, %v653
        %719 = vst.msk [vmem:[%s172 + $0x14] sm:$0xf] %vm713, %v654
        %720 = vst.msk [vmem:[%s172 + $0x18] sm:$0xf] %vm713, %v655
        %721 = vst.msk [vmem:[%s172 + $0x1c] sm:$0xf] %vm713, %v656
        %722 = vst.msk [vmem:[%s172 + $0x20] sm:$0xf] %vm713, %v657
        %723 = vst.msk [vmem:[%s172 + $0x24] sm:$0xf] %vm713, %v658
        %724 = vst.msk [vmem:[%s172 + $0x28] sm:$0xf] %vm713, %v659
        %725 = vst.msk [vmem:[%s172 + $0x2c] sm:$0xf] %vm713, %v660
        %726 = vst.msk [vmem:[%s172 + $0x30] sm:$0xf] %vm713, %v661
        %727 = vst.msk [vmem:[%s172 + $0x34] sm:$0xf] %vm713, %v662
        %728 = vst.msk [vmem:[%s172 + $0x38] sm:$0xf] %vm713, %v663
        %729 = vst.msk [vmem:[%s172 + $0x3c] sm:$0xf] %vm713, %v664
        %730 = vst.msk [vmem:[%s172 + $0x40] sm:$0xf] %vm713, %v665
        %731 = vst.msk [vmem:[%s172 + $0x44] sm:$0xf] %vm713, %v666
        %732 = vst.msk [vmem:[%s172 + $0x48] sm:$0xf] %vm713, %v667
        %733 = vst.msk [vmem:[%s172 + $0x4c] sm:$0xf] %vm713, %v668
        %734 = vst.msk [vmem:[%s172 + $0x50] sm:$0xf] %vm713, %v669
        %735 = vst.msk [vmem:[%s172 + $0x54] sm:$0xf] %vm713, %v670
        %736 = vst.msk [vmem:[%s172 + $0x58] sm:$0xf] %vm713, %v671
        %737 = vst.msk [vmem:[%s172 + $0x5c] sm:$0xf] %vm713, %v672
        %738 = vst.msk [vmem:[%s172 + $0x60] sm:$0xf] %vm713, %v673
        %739 = vst.msk [vmem:[%s172 + $0x64] sm:$0xf] %vm713, %v674
        %740 = vst.msk [vmem:[%s172 + $0x68] sm:$0xf] %vm713, %v675
        %741 = vst.msk [vmem:[%s172 + $0x6c] sm:$0xf] %vm713, %v676
        %742 = vst.msk [vmem:[%s172 + $0x70] sm:$0xf] %vm713, %v677
        %743 = vst.msk [vmem:[%s172 + $0x74] sm:$0xf] %vm713, %v678
        %744 = vst.msk [vmem:[%s172 + $0x78] sm:$0xf] %vm713, %v679
        %745 = vst.msk [vmem:[%s172 + $0x7c] sm:$0xf] %vm713, %v680
        %s746 = sand.u32 %s90, 1
        %s747 = sand.u32 %s90, 1
        %s748 = smul.addr %s747, 128
        %s749 = scalar_lea.vmem [#allocation2], %s748
        // Predicated region
        $region33: #{actor_impala_forward.6} parent=31 // pred_check
          %p750 = pneg %p100
        $region34: #{actor_impala_forward.6} parent=31 // pred_check_branch
          %752 = sbr.rel (%p750) target = $region36
        $region35: #{actor_impala_forward.6} parent=31 // pred_region
          %s753 = smul.u32 32, %s14
          %s754 = ssub.s32 50, %s753
          %p755 = scmp.lt.s32.totalorder %s754, 32
          %s756 = scalar_select %p755, %s754, 32
          %s757 = smul.u32 64, %s756
          %p758 = scmp.ne.s32.totalorder 0, %s757
          %s759 = smul.addr %s753, 4
          %s760 = scalar_lea.vmem %s3, %s759
          // Predicated region
          $region37: #{actor_impala_forward.6} parent=35 // pred_check
            %p761 = pneg %p758
          $region38: #{actor_impala_forward.6} parent=35 // pred_check_branch
            %763 = sbr.rel (%p761) target = $region40
          $region39: #{actor_impala_forward.6} parent=35 // pred_region
            // Predicated region
            $region41: #{actor_impala_forward.6} parent=39 // pred_check
              _
            $region42: #{actor_impala_forward.6} parent=39 // pred_check_branch
              %765 = sbr.rel target = $region44
            $region43: #{actor_impala_forward.6} parent=39 // pred_region
              // Predicated region
              $region63: #{actor_impala_forward.6} parent=43 // pred_check
                _
              $region64: #{actor_impala_forward.6} parent=43 // pred_check_branch
                %877 = sbr.rel (0) target = $region66
              $region65: #{actor_impala_forward.6} parent=43 // pred_region
                %s879 = ssub.s32 16, 1
                %s880 = sshrl.u32 %s756, 5
                // While loop
                $region67: #{actor_impala_forward.6} parent=65 // loop_pre_header
                  _
                $region68: #{actor_impala_forward.6} parent=65 // loop_header
                  %s882 = sphi 0, %s884
                  %p883 = scmp.ge.s32.totalorder %s882, %s880
                  %s887 = sphi 0, %s956
                  %s888 = sphi %s749, %s959
                  %s889 = sphi %s760, %s960
                $region69: #{actor_impala_forward.6} parent=65 // loop_header_branch
                  %886 = sbr.rel (%p883) target = $region73
                $region70: #{actor_impala_forward.6} parent=65 // loop_body
                  %v890 = vld [vmem:[%s888] sm:%s879]
                  %891 = vst [vmem:[%s889] sm:%s879] %v890
                  %v892 = vld [vmem:[%s888 + $0x4] sm:%s879]
                  %893 = vst [vmem:[%s889 + $0x4] sm:%s879] %v892
                  %v894 = vld [vmem:[%s888 + $0x8] sm:%s879]
                  %895 = vst [vmem:[%s889 + $0x8] sm:%s879] %v894
                  %v896 = vld [vmem:[%s888 + $0xc] sm:%s879]
                  %897 = vst [vmem:[%s889 + $0xc] sm:%s879] %v896
                  %v898 = vld [vmem:[%s888 + $0x10] sm:%s879]
                  %899 = vst [vmem:[%s889 + $0x10] sm:%s879] %v898
                  %v900 = vld [vmem:[%s888 + $0x14] sm:%s879]
                  %901 = vst [vmem:[%s889 + $0x14] sm:%s879] %v900
                  %v902 = vld [vmem:[%s888 + $0x18] sm:%s879]
                  %903 = vst [vmem:[%s889 + $0x18] sm:%s879] %v902
                  %v904 = vld [vmem:[%s888 + $0x1c] sm:%s879]
                  %905 = vst [vmem:[%s889 + $0x1c] sm:%s879] %v904
                  %v906 = vld [vmem:[%s888 + $0x20] sm:%s879]
                  %907 = vst [vmem:[%s889 + $0x20] sm:%s879] %v906
                  %v908 = vld [vmem:[%s888 + $0x24] sm:%s879]
                  %909 = vst [vmem:[%s889 + $0x24] sm:%s879] %v908
                  %v910 = vld [vmem:[%s888 + $0x28] sm:%s879]
                  %911 = vst [vmem:[%s889 + $0x28] sm:%s879] %v910
                  %v912 = vld [vmem:[%s888 + $0x2c] sm:%s879]
                  %913 = vst [vmem:[%s889 + $0x2c] sm:%s879] %v912
                  %v914 = vld [vmem:[%s888 + $0x30] sm:%s879]
                  %915 = vst [vmem:[%s889 + $0x30] sm:%s879] %v914
                  %v916 = vld [vmem:[%s888 + $0x34] sm:%s879]
                  %917 = vst [vmem:[%s889 + $0x34] sm:%s879] %v916
                  %v918 = vld [vmem:[%s888 + $0x38] sm:%s879]
                  %919 = vst [vmem:[%s889 + $0x38] sm:%s879] %v918
                  %v920 = vld [vmem:[%s888 + $0x3c] sm:%s879]
                  %921 = vst [vmem:[%s889 + $0x3c] sm:%s879] %v920
                  %v922 = vld [vmem:[%s888 + $0x40] sm:%s879]
                  %923 = vst [vmem:[%s889 + $0x40] sm:%s879] %v922
                  %v924 = vld [vmem:[%s888 + $0x44] sm:%s879]
                  %925 = vst [vmem:[%s889 + $0x44] sm:%s879] %v924
                  %v926 = vld [vmem:[%s888 + $0x48] sm:%s879]
                  %927 = vst [vmem:[%s889 + $0x48] sm:%s879] %v926
                  %v928 = vld [vmem:[%s888 + $0x4c] sm:%s879]
                  %929 = vst [vmem:[%s889 + $0x4c] sm:%s879] %v928
                  %v930 = vld [vmem:[%s888 + $0x50] sm:%s879]
                  %931 = vst [vmem:[%s889 + $0x50] sm:%s879] %v930
                  %v932 = vld [vmem:[%s888 + $0x54] sm:%s879]
                  %933 = vst [vmem:[%s889 + $0x54] sm:%s879] %v932
                  %v934 = vld [vmem:[%s888 + $0x58] sm:%s879]
                  %935 = vst [vmem:[%s889 + $0x58] sm:%s879] %v934
                  %v936 = vld [vmem:[%s888 + $0x5c] sm:%s879]
                  %937 = vst [vmem:[%s889 + $0x5c] sm:%s879] %v936
                  %v938 = vld [vmem:[%s888 + $0x60] sm:%s879]
                  %939 = vst [vmem:[%s889 + $0x60] sm:%s879] %v938
                  %v940 = vld [vmem:[%s888 + $0x64] sm:%s879]
                  %941 = vst [vmem:[%s889 + $0x64] sm:%s879] %v940
                  %v942 = vld [vmem:[%s888 + $0x68] sm:%s879]
                  %943 = vst [vmem:[%s889 + $0x68] sm:%s879] %v942
                  %v944 = vld [vmem:[%s888 + $0x6c] sm:%s879]
                  %945 = vst [vmem:[%s889 + $0x6c] sm:%s879] %v944
                  %v946 = vld [vmem:[%s888 + $0x70] sm:%s879]
                  %947 = vst [vmem:[%s889 + $0x70] sm:%s879] %v946
                  %v948 = vld [vmem:[%s888 + $0x74] sm:%s879]
                  %949 = vst [vmem:[%s889 + $0x74] sm:%s879] %v948
                  %v950 = vld [vmem:[%s888 + $0x78] sm:%s879]
                  %951 = vst [vmem:[%s889 + $0x78] sm:%s879] %v950
                  %v952 = vld [vmem:[%s888 + $0x7c] sm:%s879]
                  %953 = vst [vmem:[%s889 + $0x7c] sm:%s879] %v952
                  %s954 = sadd.s32 1, %s887
                  %p955 = scmp.ge.s32.totalorder %s954, %s880
                  %s956 = scalar_select %p955, 0, %s954
                  %s957 = smul.u32 %s956, 128
                  %s958 = smul.u32 %s956, 128
                  %s959 = scalar_lea.vmem %s749, %s957 [#allocation2]
                  %s960 = scalar_lea.vmem %s760, %s958
                $region71: #{actor_impala_forward.6} parent=65 // loop_footer
                  %s884 = sadd.s32 %s882, 1
                $region72: #{actor_impala_forward.6} parent=65 // loop_footer_branch
                  %881 = sbr.rel target = $region68
                $region73: #{actor_impala_forward.6} parent=65 // loop_exit
                  _
                %s961 = sshrl.u32 %s756, 5
                %s962 = sand.u32 %s756, 31
                %s963 = smul.u32 %s961, 32
                %s964 = smul.u32 4, %s963
                %s965 = scalar_lea.vmem %s749, %s964 [#allocation2]
                %s966 = smul.u32 4, %s963
                %s967 = scalar_lea.vmem %s760, %s966
                // While loop
                $region74: #{actor_impala_forward.6} parent=65 // loop_pre_header
                  _
                $region75: #{actor_impala_forward.6} parent=65 // loop_header
                  %s969 = sphi 0, %s971
                  %p970 = scmp.ge.s32.totalorder %s969, %s962
                  %s974 = sphi 0, %s981
                  %s975 = sphi %s965, %s984
                  %s976 = sphi %s967, %s985
                $region76: #{actor_impala_forward.6} parent=65 // loop_header_branch
                  %973 = sbr.rel (%p970) target = $region80
                $region77: #{actor_impala_forward.6} parent=65 // loop_body
                  %v977 = vld [vmem:[%s975] sm:%s879]
                  %978 = vst [vmem:[%s976] sm:%s879] %v977
                  %s979 = sadd.s32 1, %s974
                  %p980 = scmp.ge.s32.totalorder %s979, %s962
                  %s981 = scalar_select %p980, 0, %s979
                  %s982 = smul.u32 %s981, 4
                  %s983 = smul.u32 %s981, 4
                  %s984 = scalar_lea.vmem %s965, %s982 [#allocation2]
                  %s985 = scalar_lea.vmem %s967, %s983
                $region78: #{actor_impala_forward.6} parent=65 // loop_footer
                  %s971 = sadd.s32 %s969, 1
                $region79: #{actor_impala_forward.6} parent=65 // loop_footer_branch
                  %968 = sbr.rel target = $region75
                $region80: #{actor_impala_forward.6} parent=65 // loop_exit
                  _
              $region66: #{actor_impala_forward.6} parent=43 // pred_fallthru
                _
            $region44: #{actor_impala_forward.6} parent=39 // pred_fallthru
              _
            // Predicated region
            $region45: #{actor_impala_forward.6} parent=39 // pred_check
              _
            $region46: #{actor_impala_forward.6} parent=39 // pred_check_branch
              %767 = sbr.rel (0) target = $region48
            $region47: #{actor_impala_forward.6} parent=39 // pred_region
              %s769 = ssub.s32 16, 1
              %s770 = sshrl.u32 %s756, 5
              // While loop
              $region49: #{actor_impala_forward.6} parent=47 // loop_pre_header
                _
              $region50: #{actor_impala_forward.6} parent=47 // loop_header
                %s772 = sphi 0, %s774
                %p773 = scmp.ge.s32.totalorder %s772, %s770
                %s777 = sphi 0, %s846
                %s778 = sphi %s749, %s849
                %s779 = sphi %s760, %s850
              $region51: #{actor_impala_forward.6} parent=47 // loop_header_branch
                %776 = sbr.rel (%p773) target = $region55
              $region52: #{actor_impala_forward.6} parent=47 // loop_body
                %v780 = vld [vmem:[%s778] sm:%s769]
                %781 = vst [vmem:[%s779] sm:%s769] %v780
                %v782 = vld [vmem:[%s778 + $0x4] sm:%s769]
                %783 = vst [vmem:[%s779 + $0x4] sm:%s769] %v782
                %v784 = vld [vmem:[%s778 + $0x8] sm:%s769]
                %785 = vst [vmem:[%s779 + $0x8] sm:%s769] %v784
                %v786 = vld [vmem:[%s778 + $0xc] sm:%s769]
                %787 = vst [vmem:[%s779 + $0xc] sm:%s769] %v786
                %v788 = vld [vmem:[%s778 + $0x10] sm:%s769]
                %789 = vst [vmem:[%s779 + $0x10] sm:%s769] %v788
                %v790 = vld [vmem:[%s778 + $0x14] sm:%s769]
                %791 = vst [vmem:[%s779 + $0x14] sm:%s769] %v790
                %v792 = vld [vmem:[%s778 + $0x18] sm:%s769]
                %793 = vst [vmem:[%s779 + $0x18] sm:%s769] %v792
                %v794 = vld [vmem:[%s778 + $0x1c] sm:%s769]
                %795 = vst [vmem:[%s779 + $0x1c] sm:%s769] %v794
                %v796 = vld [vmem:[%s778 + $0x20] sm:%s769]
                %797 = vst [vmem:[%s779 + $0x20] sm:%s769] %v796
                %v798 = vld [vmem:[%s778 + $0x24] sm:%s769]
                %799 = vst [vmem:[%s779 + $0x24] sm:%s769] %v798
                %v800 = vld [vmem:[%s778 + $0x28] sm:%s769]
                %801 = vst [vmem:[%s779 + $0x28] sm:%s769] %v800
                %v802 = vld [vmem:[%s778 + $0x2c] sm:%s769]
                %803 = vst [vmem:[%s779 + $0x2c] sm:%s769] %v802
                %v804 = vld [vmem:[%s778 + $0x30] sm:%s769]
                %805 = vst [vmem:[%s779 + $0x30] sm:%s769] %v804
                %v806 = vld [vmem:[%s778 + $0x34] sm:%s769]
                %807 = vst [vmem:[%s779 + $0x34] sm:%s769] %v806
                %v808 = vld [vmem:[%s778 + $0x38] sm:%s769]
                %809 = vst [vmem:[%s779 + $0x38] sm:%s769] %v808
                %v810 = vld [vmem:[%s778 + $0x3c] sm:%s769]
                %811 = vst [vmem:[%s779 + $0x3c] sm:%s769] %v810
                %v812 = vld [vmem:[%s778 + $0x40] sm:%s769]
                %813 = vst [vmem:[%s779 + $0x40] sm:%s769] %v812
                %v814 = vld [vmem:[%s778 + $0x44] sm:%s769]
                %815 = vst [vmem:[%s779 + $0x44] sm:%s769] %v814
                %v816 = vld [vmem:[%s778 + $0x48] sm:%s769]
                %817 = vst [vmem:[%s779 + $0x48] sm:%s769] %v816
                %v818 = vld [vmem:[%s778 + $0x4c] sm:%s769]
                %819 = vst [vmem:[%s779 + $0x4c] sm:%s769] %v818
                %v820 = vld [vmem:[%s778 + $0x50] sm:%s769]
                %821 = vst [vmem:[%s779 + $0x50] sm:%s769] %v820
                %v822 = vld [vmem:[%s778 + $0x54] sm:%s769]
                %823 = vst [vmem:[%s779 + $0x54] sm:%s769] %v822
                %v824 = vld [vmem:[%s778 + $0x58] sm:%s769]
                %825 = vst [vmem:[%s779 + $0x58] sm:%s769] %v824
                %v826 = vld [vmem:[%s778 + $0x5c] sm:%s769]
                %827 = vst [vmem:[%s779 + $0x5c] sm:%s769] %v826
                %v828 = vld [vmem:[%s778 + $0x60] sm:%s769]
                %829 = vst [vmem:[%s779 + $0x60] sm:%s769] %v828
                %v830 = vld [vmem:[%s778 + $0x64] sm:%s769]
                %831 = vst [vmem:[%s779 + $0x64] sm:%s769] %v830
                %v832 = vld [vmem:[%s778 + $0x68] sm:%s769]
                %833 = vst [vmem:[%s779 + $0x68] sm:%s769] %v832
                %v834 = vld [vmem:[%s778 + $0x6c] sm:%s769]
                %835 = vst [vmem:[%s779 + $0x6c] sm:%s769] %v834
                %v836 = vld [vmem:[%s778 + $0x70] sm:%s769]
                %837 = vst [vmem:[%s779 + $0x70] sm:%s769] %v836
                %v838 = vld [vmem:[%s778 + $0x74] sm:%s769]
                %839 = vst [vmem:[%s779 + $0x74] sm:%s769] %v838
                %v840 = vld [vmem:[%s778 + $0x78] sm:%s769]
                %841 = vst [vmem:[%s779 + $0x78] sm:%s769] %v840
                %v842 = vld [vmem:[%s778 + $0x7c] sm:%s769]
                %843 = vst [vmem:[%s779 + $0x7c] sm:%s769] %v842
                %s844 = sadd.s32 1, %s777
                %p845 = scmp.ge.s32.totalorder %s844, %s770
                %s846 = scalar_select %p845, 0, %s844
                %s847 = smul.u32 %s846, 128
                %s848 = smul.u32 %s846, 128
                %s849 = scalar_lea.vmem %s749, %s847 [#allocation2]
                %s850 = scalar_lea.vmem %s760, %s848
              $region53: #{actor_impala_forward.6} parent=47 // loop_footer
                %s774 = sadd.s32 %s772, 1
              $region54: #{actor_impala_forward.6} parent=47 // loop_footer_branch
                %771 = sbr.rel target = $region50
              $region55: #{actor_impala_forward.6} parent=47 // loop_exit
                _
              %s851 = sshrl.u32 %s756, 5
              %s852 = sand.u32 %s756, 31
              %s853 = smul.u32 %s851, 32
              %s854 = smul.u32 4, %s853
              %s855 = scalar_lea.vmem %s749, %s854 [#allocation2]
              %s856 = smul.u32 4, %s853
              %s857 = scalar_lea.vmem %s760, %s856
              // While loop
              $region56: #{actor_impala_forward.6} parent=47 // loop_pre_header
                _
              $region57: #{actor_impala_forward.6} parent=47 // loop_header
                %s859 = sphi 0, %s861
                %p860 = scmp.ge.s32.totalorder %s859, %s852
                %s864 = sphi 0, %s871
                %s865 = sphi %s855, %s874
                %s866 = sphi %s857, %s875
              $region58: #{actor_impala_forward.6} parent=47 // loop_header_branch
                %863 = sbr.rel (%p860) target = $region62
              $region59: #{actor_impala_forward.6} parent=47 // loop_body
                %v867 = vld [vmem:[%s865] sm:%s769]
                %868 = vst [vmem:[%s866] sm:%s769] %v867
                %s869 = sadd.s32 1, %s864
                %p870 = scmp.ge.s32.totalorder %s869, %s852
                %s871 = scalar_select %p870, 0, %s869
                %s872 = smul.u32 %s871, 4
                %s873 = smul.u32 %s871, 4
                %s874 = scalar_lea.vmem %s855, %s872 [#allocation2]
                %s875 = scalar_lea.vmem %s857, %s873
              $region60: #{actor_impala_forward.6} parent=47 // loop_footer
                %s861 = sadd.s32 %s859, 1
              $region61: #{actor_impala_forward.6} parent=47 // loop_footer_branch
                %858 = sbr.rel target = $region57
              $region62: #{actor_impala_forward.6} parent=47 // loop_exit
                _
            $region48: #{actor_impala_forward.6} parent=39 // pred_fallthru
              _
          $region40: #{actor_impala_forward.6} parent=35 // pred_fallthru
            _
          %986 = vnop
        $region36: #{actor_impala_forward.6} parent=31 // pred_fallthru
          _
      $region32: #{actor_impala_forward.6} parent=5 // pred_fallthru
        _
      %p987 = scmp.le.s32.totalorder 2, %s9
      // Predicated region
      $region81: #{actor_impala_forward.6} parent=5 // pred_check
        %p988 = pneg %p987
      $region82: #{actor_impala_forward.6} parent=5 // pred_check_branch
        %990 = sbr.rel (%p988) target = $region84
      $region83: #{actor_impala_forward.6} parent=5 // pred_region
        %s991 = ssub.s32 %s9, 2
        // Predicated region
        $region85: #{actor_impala_forward.6} parent=83 // pred_check
          %p992 = pneg %p106
        $region86: #{actor_impala_forward.6} parent=83 // pred_check_branch
          %994 = sbr.rel (%p992) target = $region88
        $region87: #{actor_impala_forward.6} parent=83 // pred_region
          %s995 = sand.u32 %s91, 1
          %s996 = sand.u32 %s91, 1
          %s997 = smul.addr %s996, 128
          %s998 = scalar_lea.vmem [#allocation2], %s997
        $region88: #{actor_impala_forward.6} parent=83 // pred_fallthru
          _
      $region84: #{actor_impala_forward.6} parent=5 // pred_fallthru
        _
    $region6: #{actor_impala_forward.6} parent=1 // loop_footer
      %s13 = sadd.s32 1, %s9
    $region7: #{actor_impala_forward.6} parent=1 // loop_footer_branch
      %8 = sbr.rel target = $region3
    $region8: #{actor_impala_forward.6} parent=1 // loop_exit
      _

// kernel: actor_impala_forward.8
$region0: #{actor_impala_forward.8}
  #allocation0 [shape = 'u32[]', space=smem, size = 0x4, offset = 0x4, fixed_abs, tag = 'smem constant byte address 0x4 - core index']
  #allocation1 [shape = 'u32[144,128]{1,0:T(1,128)}', space=vmem, size = 0x12000, scoped, tag = 'internal scratch']
  %s0 = inlined_call_operand.vmem [shape: f32[2,2,128], index: 0, kind: input, shape index: {}]
  %s1 = inlined_call_operand.vmem [shape: f32[32,96], index: 1, kind: input, shape index: {}]
  %s2 = inlined_call_operand.vmem [shape: f32[1,96], index: 2, kind: input, shape index: {}]
  %s3 = inlined_call_operand.vmem [shape: f32[2,2,32], index: 3, kind: output, shape index: {}]
  %s4 = sld [smem:[#allocation0]]
  $region29: #{actor_impala_forward.8} parent=0
    _
  %s6 = ssub.s32 1, %s4
  %s7 = scalar_select 0, %s6, %s4
  // Predicated region
  $region2: #{actor_impala_forward.8} parent=0 // pred_check
    _
  $region3: #{actor_impala_forward.8} parent=0 // pred_check_branch
    %9 = sbr.rel (0) target = $region5
  $region4: #{actor_impala_forward.8} parent=0 // pred_region
    _
  $region5: #{actor_impala_forward.8} parent=0 // pred_fallthru
    _
  // Predicated region
  $region6: #{actor_impala_forward.8} parent=0 // pred_check
    _
  $region7: #{actor_impala_forward.8} parent=0 // pred_check_branch
    %11 = sbr.rel (0) target = $region9
  $region8: #{actor_impala_forward.8} parent=0 // pred_region
    _
  $region9: #{actor_impala_forward.8} parent=0 // pred_fallthru
    _
  // Predicated region
  $region10: #{actor_impala_forward.8} parent=0 // pred_check
    _
  $region11: #{actor_impala_forward.8} parent=0 // pred_check_branch
    %13 = sbr.rel (0) target = $region13
  $region12: #{actor_impala_forward.8} parent=0 // pred_region
    _
  $region13: #{actor_impala_forward.8} parent=0 // pred_fallthru
    _
  loop: start=0, step=1, limit=2
  $region14: #{actor_impala_forward.8} parent=0 // loop_pre_header
    _
  $region15: #{actor_impala_forward.8} parent=0 // loop_header
    %s15 = sphi 0, %s19
    %p16 = scmp.ge.s32.totalorder %s15, 2
    %v20 = vphi 0.0, %v136
  $region16: #{actor_impala_forward.8} parent=0 // loop_header_branch
    %18 = sbr.rel (%p16) target = $region20
  $region17: #{actor_impala_forward.8} parent=0 // loop_body
    %s21 = smul.u32 %s15, 2
    %s22 = scalar_lea.vmem %s0, %s21
    %v23 = vld [vmem:[%s22] sm:$0x3]
    %v24 = vld [vmem:[%s1] sm:$0xff]
    %v25 = vld [vmem:[%s1 + $0x8] sm:$0xff]
    %v26 = vld [vmem:[%s1 + $0x10] sm:$0xff]
    %v27 = vld [vmem:[%s1 + $0x18] sm:$0xff]
    %v28 = vld [vmem:[%s2] sm:$0x1]
    %v30 = vlaneseq
    %v31 = vshrl.u32 %v30, 7
    %v32 = vsub.s32 0, %v31
    %v33 = vrot.slane %v28, %v32
    %36 = vrot.lane.b32.xlu0 %v20, 96
    %v37 = vpop.permute.xlu0 %36
    %vm38 = vcmask 261120
    %v39 = vsel %vm38, %v37, 0
    %41 = vmatprep.subr.mxu0 0.0
    %42 = vmatpush1.msra.mxu0 0.0
    %43 = vmatprep.subr.mxu0 0.0
    %44 = vmatpush1.msra.mxu0 0.0
    %45 = vmatprep.subr.mxu0 0.0
    %46 = vmatpush1.msra.mxu0 0.0
    %47 = vmatprep.subr.mxu0 0.0
    %48 = vmatpush1.msra.mxu0 0.0
    %49 = vmatprep.subr.mxu0 0.0
    %50 = vmatpush1.msra.mxu0 0.0
    %51 = vmatprep.subr.mxu0 0.0
    %52 = vmatpush1.msra.mxu0 0.0
    %53 = vmatprep.subr.mxu0 0.0
    %54 = vmatpush1.msra.mxu0 0.0
    %55 = vmatprep.subr.mxu0 0.0
    %56 = vmatpush1.msra.mxu0 0.0
    %57 = vmatprep.subr.mxu0 0.0
    %58 = vmatpush1.msra.mxu0 0.0
    %59 = vmatprep.subr.mxu0 0.0
    %60 = vmatpush1.msra.mxu0 0.0
    %61 = vmatprep.subr.mxu0 0.0
    %62 = vmatpush1.msra.mxu0 0.0
    %63 = vmatprep.subr.mxu0 0.0
    %64 = vmatpush1.msra.mxu0 0.0
    %65 = vmatprep.subr.mxu0 0.0
    %66 = vmatpush1.msra.mxu0 %v27
    %67 = vmatprep.subr.mxu0 0.0
    %68 = vmatpush1.msra.mxu0 %v26
    %69 = vmatprep.subr.mxu0 0.0
    %70 = vmatpush1.msra.mxu0 %v25
    %71 = vmatprep.subr.mxu0 0.0
    %72 = vmatpush1.msra.mxu0 %v24
    %73 = vmatprep.subr.mxu0 0.0
    %74 = vmatpush2.msra.mxu0 0.0
    %75 = vmatprep.subr.mxu0 0.0
    %76 = vmatpush2.msra.mxu0 0.0
    %77 = vmatprep.subr.mxu0 0.0
    %78 = vmatpush2.msra.mxu0 0.0
    %79 = vmatprep.subr.mxu0 0.0
    %80 = vmatpush2.msra.mxu0 0.0
    %81 = vmatprep.subr.mxu0 0.0
    %82 = vmatpush2.msra.mxu0 0.0
    %83 = vmatprep.subr.mxu0 0.0
    %84 = vmatpush2.msra.mxu0 0.0
    %85 = vmatprep.subr.mxu0 0.0
    %86 = vmatpush2.msra.mxu0 0.0
    %87 = vmatprep.subr.mxu0 0.0
    %88 = vmatpush2.msra.mxu0 0.0
    %89 = vmatprep.subr.mxu0 0.0
    %90 = vmatpush2.msra.mxu0 0.0
    %91 = vmatprep.subr.mxu0 0.0
    %92 = vmatpush2.msra.mxu0 0.0
    %93 = vmatprep.subr.mxu0 0.0
    %94 = vmatpush2.msra.mxu0 0.0
    %95 = vmatprep.subr.mxu0 0.0
    %96 = vmatpush2.msra.mxu0 0.0
    %97 = vmatprep.subr.mxu0 0.0
    %98 = vmatpush2.msra.mxu0 0.0
    %99 = vmatprep.subr.mxu0 0.0
    %100 = vmatpush2.msra.mxu0 0.0
    %101 = vmatprep.subr.mxu0 0.0
    %102 = vmatpush2.msra.mxu0 0.0
    %103 = vmatprep.subr.mxu0 0.0
    %104 = vmatpush2.msra.mxu0 0.0
    %105 = vmatprep.mubr.f32.mxu0 0.0
    %106 = vmatmul.mubr.f32.gmra.mxu0 %v39
    %v107 = vpop.f32.mrf.mxu0
    %v108 = vadd.f32 %v33, %v107
    %v109 = vpop.f32.mrf.mxu0
    %110 = vdwg.mxu0
    %v111 = vadd.f32 %v23, %v108
    %v112 = vxor.u32 %v111, 2147483648
    %v113 = vmul.f32 %v112, 1.442695
    %v114 = vpow.pop %v113
    %v115 = vadd.f32 %v114, 1.0
    %v116 = vrcp.pop %v115
    %v117 = vmul.f32 1.0, %v116
    %119 = vrot.lane.b32.xlu0 %v108, 64
    %v120 = vpop.permute.xlu0 %119
    %v122 = vmul.f32 %v117, %v120
    %124 = vrot.lane.b32.xlu0 %v122, 64
    %v125 = vpop.permute.xlu0 %124
    %v127 = vadd.f32 %v23, %v125
    %v128 = vtanh.pop %v127
    %v129 = vsub.f32 1.0, %v117
    %131 = vrot.lane.b32.xlu0 %v128, 96
    %v132 = vpop.permute.xlu0 %131
    %v134 = vmul.f32 %v129, %v132
    %v135 = vmul.f32 %v117, %v20
    %v136 = vadd.f32 %v134, %v135
    %138 = vrot.lane.b32.xlu0 %v136, 96
    %v139 = vpop.permute.xlu0 %138
    %s141 = scalar_lea.vmem %s3, %s21
    %vm142 = vcmask 254976
    %143 = vst.msk [vmem:[%s141] sm:$0x3] %vm142, %v139
  $region18: #{actor_impala_forward.8} parent=0 // loop_footer
    %s19 = sadd.s32 1, %s15
  $region19: #{actor_impala_forward.8} parent=0 // loop_footer_branch
    %14 = sbr.rel target = $region15
  $region20: #{actor_impala_forward.8} parent=0 // loop_exit
    _
  // Predicated region
  $region21: #{actor_impala_forward.8} parent=0 // pred_check
    _
  $region22: #{actor_impala_forward.8} parent=0 // pred_check_branch
    %145 = sbr.rel (0) target = $region24
  $region23: #{actor_impala_forward.8} parent=0 // pred_region
    _
  $region24: #{actor_impala_forward.8} parent=0 // pred_fallthru
    _
  // Predicated region
  $region25: #{actor_impala_forward.8} parent=0 // pred_check
    _
  $region26: #{actor_impala_forward.8} parent=0 // pred_check_branch
    %147 = sbr.rel (0) target = $region28
  $region27: #{actor_impala_forward.8} parent=0 // pred_region
    _
  $region28: #{actor_impala_forward.8} parent=0 // pred_fallthru
    _

// kernel: actor_impala_forward.7
$region0: #{actor_impala_forward.7}
  #allocation0 [shape = 'u32[]', space=smem, size = 0x4, offset = 0x4, fixed_abs, tag = 'smem constant byte address 0x4 - core index']
  #allocation1 [shape = 'u32[144,128]{1,0:T(1,128)}', space=vmem, size = 0x12000, scoped, tag = 'internal scratch']
  %s0 = inlined_call_operand.vmem [shape: bf16[4,400], index: 0, kind: input, shape index: {}]
  %s1 = inlined_call_operand.vmem [shape: bf16[400,32], index: 1, kind: input, shape index: {}]
  %s2 = inlined_call_operand.vmem [shape: f32[1,32], index: 2, kind: input, shape index: {}]
  %s3 = inlined_call_operand.vmem [shape: bf16[32,128], index: 3, kind: input, shape index: {}]
  %s4 = inlined_call_operand.vmem [shape: f32[1,128], index: 4, kind: input, shape index: {}]
  %s5 = inlined_call_operand.vmem [shape: f32[4,128], index: 5, kind: output, shape index: {}]
  %s6 = sld [smem:[#allocation0]]
  $region30: #{actor_impala_forward.7} parent=0
    _
  %s8 = ssub.s32 1, %s6
  %s9 = scalar_select 0, %s8, %s6
  // Predicated region
  $region2: #{actor_impala_forward.7} parent=0 // pred_check
    _
  $region3: #{actor_impala_forward.7} parent=0 // pred_check_branch
    %11 = sbr.rel (0) target = $region5
  $region4: #{actor_impala_forward.7} parent=0 // pred_region
    _
  $region5: #{actor_impala_forward.7} parent=0 // pred_fallthru
    _
  // Predicated region
  $region6: #{actor_impala_forward.7} parent=0 // pred_check
    _
  $region7: #{actor_impala_forward.7} parent=0 // pred_check_branch
    %13 = sbr.rel (0) target = $region9
  $region8: #{actor_impala_forward.7} parent=0 // pred_region
    _
  $region9: #{actor_impala_forward.7} parent=0 // pred_fallthru
    _
  // Predicated region
  $region10: #{actor_impala_forward.7} parent=0 // pred_check
    _
  $region11: #{actor_impala_forward.7} parent=0 // pred_check_branch
    %15 = sbr.rel (0) target = $region13
  $region12: #{actor_impala_forward.7} parent=0 // pred_region
    _
  $region13: #{actor_impala_forward.7} parent=0 // pred_fallthru
    _
  // Predicated region
  $region14: #{actor_impala_forward.7} parent=0 // pred_check
    _
  $region15: #{actor_impala_forward.7} parent=0 // pred_check_branch
    %17 = sbr.rel (0) target = $region17
  $region16: #{actor_impala_forward.7} parent=0 // pred_region
    _
  $region17: #{actor_impala_forward.7} parent=0 // pred_fallthru
    _
  // Predicated region
  $region18: #{actor_impala_forward.7} parent=0 // pred_check
    _
  $region19: #{actor_impala_forward.7} parent=0 // pred_check_branch
    %19 = sbr.rel (0) target = $region21
  $region20: #{actor_impala_forward.7} parent=0 // pred_region
    _
  $region21: #{actor_impala_forward.7} parent=0 // pred_fallthru
    _
  %v21 = vld [vmem:[%s0] sm:$0xff]
  %v22 = vld [vmem:[%s1] sm:$0xf]
  %v23 = vld [vmem:[%s1 + $0x4] sm:$0xf]
  %v24 = vld [vmem:[%s1 + $0x8] sm:$0xf]
  %v25 = vld [vmem:[%s1 + $0xc] sm:$0xf]
  %v26 = vld [vmem:[%s1 + $0x10] sm:$0xf]
  %v27 = vld [vmem:[%s1 + $0x14] sm:$0xf]
  %v28 = vld [vmem:[%s1 + $0x18] sm:$0xf]
  %v29 = vld [vmem:[%s1 + $0x1c] sm:$0xf]
  %v30 = vld [vmem:[%s1 + $0x20] sm:$0xf]
  %v31 = vld [vmem:[%s1 + $0x24] sm:$0xf]
  %v32 = vld [vmem:[%s1 + $0x28] sm:$0xf]
  %v33 = vld [vmem:[%s1 + $0x2c] sm:$0xf]
  %v34 = vld [vmem:[%s1 + $0x30] sm:$0xf]
  %v35 = vld [vmem:[%s1 + $0x34] sm:$0xf]
  %v36 = vld [vmem:[%s1 + $0x38] sm:$0xf]
  %v37 = vld [vmem:[%s1 + $0x3c] sm:$0xf]
  %v38 = vld [vmem:[%s1 + $0x40] sm:$0xf]
  %v39 = vld [vmem:[%s1 + $0x44] sm:$0xf]
  %v40 = vld [vmem:[%s1 + $0x48] sm:$0xf]
  %v41 = vld [vmem:[%s1 + $0x4c] sm:$0xf]
  %v42 = vld [vmem:[%s1 + $0x50] sm:$0xf]
  %v43 = vld [vmem:[%s1 + $0x54] sm:$0xf]
  %v44 = vld [vmem:[%s1 + $0x58] sm:$0xf]
  %v45 = vld [vmem:[%s1 + $0x5c] sm:$0xf]
  %v46 = vld [vmem:[%s1 + $0x60] sm:$0xf]
  %v47 = vld [vmem:[%s1 + $0x64] sm:$0xf]
  %v48 = vld [vmem:[%s1 + $0x68] sm:$0xf]
  %v49 = vld [vmem:[%s1 + $0x6c] sm:$0xf]
  %v50 = vld [vmem:[%s1 + $0x70] sm:$0xf]
  %v51 = vld [vmem:[%s1 + $0x74] sm:$0xf]
  %v52 = vld [vmem:[%s1 + $0x78] sm:$0xf]
  %v53 = vld [vmem:[%s1 + $0x7c] sm:$0xf]
  %v54 = vld [vmem:[%s1 + $0x80] sm:$0xf]
  %v55 = vld [vmem:[%s1 + $0x84] sm:$0xf]
  %v56 = vld [vmem:[%s1 + $0x88] sm:$0xf]
  %v57 = vld [vmem:[%s1 + $0x8c] sm:$0xf]
  %v58 = vld [vmem:[%s1 + $0x90] sm:$0xf]
  %v59 = vld [vmem:[%s1 + $0x94] sm:$0xf]
  %v60 = vld [vmem:[%s1 + $0x98] sm:$0xf]
  %v61 = vld [vmem:[%s1 + $0x9c] sm:$0xf]
  %v62 = vld [vmem:[%s1 + $0xa0] sm:$0xf]
  %v63 = vld [vmem:[%s1 + $0xa4] sm:$0xf]
  %v64 = vld [vmem:[%s1 + $0xa8] sm:$0xf]
  %v65 = vld [vmem:[%s1 + $0xac] sm:$0xf]
  %v66 = vld [vmem:[%s1 + $0xb0] sm:$0xf]
  %v67 = vld [vmem:[%s1 + $0xb4] sm:$0xf]
  %v68 = vld [vmem:[%s1 + $0xb8] sm:$0xf]
  %v69 = vld [vmem:[%s1 + $0xbc] sm:$0xf]
  %v70 = vld [vmem:[%s1 + $0xc0] sm:$0xf]
  %v71 = vld [vmem:[%s1 + $0xc4] sm:$0xf]
  %v72 = vld [vmem:[%s2] sm:$0x1]
  %v74 = vlaneseq
  %v75 = vshrl.u32 %v74, 7
  %v76 = vsub.s32 0, %v75
  %v77 = vrot.slane %v72, %v76
  %v80 = vcombine.high %v21, %v21
  %v82 = vunpack.c.l.s4 1983009808
  %v83 = vunpack.c.0.s8 %v82
  %v84 = vlaneseq
  %v85 = vshrl.u32 %v84, 7
  %v86 = vsub.s32 %v83, %v85
  %v87 = vrot.slane %v21, %v86
  %v89 = vunpack.c.l.s4 1983009808
  %v90 = vunpack.c.0.s8 %v89
  %v91 = vlaneseq
  %v92 = vshrl.u32 %v91, 7
  %v93 = vsub.s32 %v90, %v92
  %v94 = vrot.slane %v80, %v93
  %v95 = vcombine.high %v87, %v87
  %v96 = vcombine.high %v94, %v94
  %v150 = vunpack.c.l.b16 %v22
  %v151 = vunpack.c.l.b16 %v23
  %v152 = vunpack.c.l.b16 %v24
  %v153 = vunpack.c.l.b16 %v25
  %v154 = vunpack.c.l.b16 %v26
  %v155 = vunpack.c.l.b16 %v27
  %v156 = vunpack.c.l.b16 %v28
  %v157 = vunpack.c.l.b16 %v29
  %v158 = vunpack.c.l.b16 %v30
  %v159 = vunpack.c.l.b16 %v31
  %v160 = vunpack.c.l.b16 %v32
  %v161 = vunpack.c.l.b16 %v33
  %v162 = vunpack.c.l.b16 %v34
  %v163 = vunpack.c.l.b16 %v35
  %v164 = vunpack.c.l.b16 %v36
  %v165 = vunpack.c.l.b16 %v37
  %v166 = vunpack.c.l.b16 %v38
  %v167 = vunpack.c.l.b16 %v39
  %v168 = vunpack.c.l.b16 %v40
  %v169 = vunpack.c.l.b16 %v41
  %v170 = vunpack.c.l.b16 %v42
  %v171 = vunpack.c.l.b16 %v43
  %v172 = vunpack.c.l.b16 %v44
  %v173 = vunpack.c.l.b16 %v45
  %v174 = vunpack.c.l.b16 %v46
  %v175 = vunpack.c.l.b16 %v47
  %v176 = vunpack.c.l.b16 %v48
  %v177 = vunpack.c.l.b16 %v49
  %v178 = vunpack.c.l.b16 %v50
  %v179 = vunpack.c.l.b16 %v51
  %v180 = vunpack.c.l.b16 %v52
  %v181 = vunpack.c.l.b16 %v53
  %v182 = vunpack.c.l.b16 %v54
  %v183 = vunpack.c.l.b16 %v55
  %v184 = vunpack.c.l.b16 %v56
  %v185 = vunpack.c.l.b16 %v57
  %v186 = vunpack.c.l.b16 %v58
  %v187 = vunpack.c.l.b16 %v59
  %v188 = vunpack.c.l.b16 %v60
  %v189 = vunpack.c.l.b16 %v61
  %v190 = vunpack.c.l.b16 %v62
  %v191 = vunpack.c.l.b16 %v63
  %v192 = vunpack.c.l.b16 %v64
  %v193 = vunpack.c.l.b16 %v65
  %v194 = vunpack.c.l.b16 %v66
  %v195 = vunpack.c.l.b16 %v67
  %v196 = vunpack.c.l.b16 %v68
  %v197 = vunpack.c.l.b16 %v69
  %v198 = vunpack.c.l.b16 %v70
  %v199 = vunpack.c.l.b16 %v71
  %v200 = vpack.c.b16 %v151, %v150
  %v201 = vpack.c.b16 %v153, %v152
  %v202 = vpack.c.b16 %v155, %v154
  %v203 = vpack.c.b16 %v157, %v156
  %v204 = vpack.c.b16 %v159, %v158
  %v205 = vpack.c.b16 %v161, %v160
  %v206 = vpack.c.b16 %v163, %v162
  %v207 = vpack.c.b16 %v165, %v164
  %v208 = vpack.c.b16 %v167, %v166
  %v209 = vpack.c.b16 %v169, %v168
  %v210 = vpack.c.b16 %v171, %v170
  %v211 = vpack.c.b16 %v173, %v172
  %v212 = vpack.c.b16 %v175, %v174
  %v213 = vpack.c.b16 %v177, %v176
  %v214 = vpack.c.b16 %v179, %v178
  %v215 = vpack.c.b16 %v181, %v180
  %v216 = vpack.c.b16 %v183, %v182
  %v217 = vpack.c.b16 %v185, %v184
  %v218 = vpack.c.b16 %v187, %v186
  %v219 = vpack.c.b16 %v189, %v188
  %v220 = vpack.c.b16 %v191, %v190
  %v221 = vpack.c.b16 %v193, %v192
  %v222 = vpack.c.b16 %v195, %v194
  %v223 = vpack.c.b16 %v197, %v196
  %v224 = vpack.c.b16 %v199, %v198
  %vm250 = vcmask 130048
  %v252 = vsel %vm250, %v96, 0
  %254 = vmatprep.subr.bf16.mxu0 0
  %255 = vmatpush1.bf16.msra.mxu0 %v207
  %256 = vmatprep.subr.bf16.mxu0 0
  %257 = vmatpush1.bf16.msra.mxu0 %v206
  %258 = vmatprep.subr.bf16.mxu0 0
  %259 = vmatpush1.bf16.msra.mxu0 %v205
  %260 = vmatprep.subr.bf16.mxu0 0
  %261 = vmatpush1.bf16.msra.mxu0 %v204
  %262 = vmatprep.subr.bf16.mxu0 0
  %263 = vmatpush1.bf16.msra.mxu0 %v203
  %264 = vmatprep.subr.bf16.mxu0 0
  %265 = vmatpush1.bf16.msra.mxu0 %v202
  %266 = vmatprep.subr.bf16.mxu0 0
  %267 = vmatpush1.bf16.msra.mxu0 %v201
  %268 = vmatprep.subr.bf16.mxu0 0
  %269 = vmatpush1.bf16.msra.mxu0 %v200
  %270 = vmatprep.subr.bf16.mxu0 0
  %271 = vmatpush2.bf16.msra.mxu0 %v215
  %272 = vmatprep.subr.bf16.mxu0 0
  %273 = vmatpush2.bf16.msra.mxu0 %v214
  %274 = vmatprep.subr.bf16.mxu0 0
  %275 = vmatpush2.bf16.msra.mxu0 %v213
  %276 = vmatprep.subr.bf16.mxu0 0
  %277 = vmatpush2.bf16.msra.mxu0 %v212
  %278 = vmatprep.subr.bf16.mxu0 0
  %279 = vmatpush2.bf16.msra.mxu0 %v211
  %280 = vmatprep.subr.bf16.mxu0 0
  %281 = vmatpush2.bf16.msra.mxu0 %v210
  %282 = vmatprep.subr.bf16.mxu0 0
  %283 = vmatpush2.bf16.msra.mxu0 %v209
  %284 = vmatprep.subr.bf16.mxu0 0
  %285 = vmatpush2.bf16.msra.mxu0 %v208
  %286 = vmatprep.mubr.bf16.mxu0 %v95
  %287 = vmatmul.mubr.bf16.gmra.mxu0 %v87
  %v288 = vpop.f32.mrf.mxu0
  %v289 = vadd.f32 %v77, %v288
  %v290 = vpop.f32.mrf.mxu0
  %v291 = vpop.f32.mrf.mxu0
  %v292 = vpop.f32.mrf.mxu0
  %293 = vdwg.mxu0
  %294 = vmatprep.subr.bf16.mxu0 0
  %295 = vmatpush1.bf16.msra.mxu0 %v223
  %296 = vmatprep.subr.bf16.mxu0 0
  %297 = vmatpush1.bf16.msra.mxu0 %v222
  %298 = vmatprep.subr.bf16.mxu0 0
  %299 = vmatpush1.bf16.msra.mxu0 %v221
  %300 = vmatprep.subr.bf16.mxu0 0
  %301 = vmatpush1.bf16.msra.mxu0 %v220
  %302 = vmatprep.subr.bf16.mxu0 0
  %303 = vmatpush1.bf16.msra.mxu0 %v219
  %304 = vmatprep.subr.bf16.mxu0 0
  %305 = vmatpush1.bf16.msra.mxu0 %v218
  %306 = vmatprep.subr.bf16.mxu0 0
  %307 = vmatpush1.bf16.msra.mxu0 %v217
  %308 = vmatprep.subr.bf16.mxu0 0
  %309 = vmatpush1.bf16.msra.mxu0 %v216
  %310 = vmatprep.subr.bf16.mxu0 0
  %311 = vmatpush2.bf16.msra.mxu0 0
  %312 = vmatprep.subr.bf16.mxu0 0
  %313 = vmatpush2.bf16.msra.mxu0 0
  %314 = vmatprep.subr.bf16.mxu0 0
  %315 = vmatpush2.bf16.msra.mxu0 0
  %316 = vmatprep.subr.bf16.mxu0 0
  %317 = vmatpush2.bf16.msra.mxu0 0
  %318 = vmatprep.subr.bf16.mxu0 0
  %319 = vmatpush2.bf16.msra.mxu0 0
  %320 = vmatprep.subr.bf16.mxu0 0
  %321 = vmatpush2.bf16.msra.mxu0 0
  %322 = vmatprep.subr.bf16.mxu0 0
  %323 = vmatpush2.bf16.msra.mxu0 0
  %324 = vmatprep.subr.bf16.mxu0 0
  %325 = vmatpush2.bf16.msra.mxu0 %v224
  %326 = vmatprep.mubr.bf16.mxu0 %v252
  %327 = vmatmul.mubr.bf16.gmra.mxu0 %v94
  %v328 = vpop.f32.mrf.mxu0
  %v329 = vadd.f32 %v289, %v328
  %v330 = vpop.f32.mrf.mxu0
  %v331 = vpop.f32.mrf.mxu0
  %v332 = vpop.f32.mrf.mxu0
  %333 = vdwg.mxu0
  %v334 = vmax.f32 %v329, 0.0
  %v335 = vld [vmem:[%s3] sm:$0xf]
  %v336 = vld [vmem:[%s3 + $0x4] sm:$0xf]
  %v337 = vld [vmem:[%s3 + $0x8] sm:$0xf]
  %v338 = vld [vmem:[%s3 + $0xc] sm:$0xf]
  %v339 = vld [vmem:[%s4] sm:$0x1]
  %v340 = vpack.c.bf16 %v334, %v334
  %v342 = vlaneseq
  %v343 = vshrl.u32 %v342, 7
  %v344 = vsub.s32 0, %v343
  %v345 = vrot.slane %v339, %v344
  %v351 = vunpack.c.l.b16 %v335
  %v352 = vunpack.c.l.b16 %v336
  %v353 = vunpack.c.l.b16 %v337
  %v354 = vunpack.c.l.b16 %v338
  %v355 = vpack.c.b16 %v352, %v351
  %v356 = vpack.c.b16 %v354, %v353
  %vm359 = vcmask 261120
  %v361 = vsel %vm359, %v340, 0
  %363 = vmatprep.subr.bf16.mxu0 0
  %364 = vmatpush1.bf16.msra.mxu0 0
  %365 = vmatprep.subr.bf16.mxu0 0
  %366 = vmatpush1.bf16.msra.mxu0 0
  %367 = vmatprep.subr.bf16.mxu0 0
  %368 = vmatpush1.bf16.msra.mxu0 0
  %369 = vmatprep.subr.bf16.mxu0 0
  %370 = vmatpush1.bf16.msra.mxu0 0
  %371 = vmatprep.subr.bf16.mxu0 0
  %372 = vmatpush1.bf16.msra.mxu0 0
  %373 = vmatprep.subr.bf16.mxu0 0
  %374 = vmatpush1.bf16.msra.mxu0 0
  %375 = vmatprep.subr.bf16.mxu0 0
  %376 = vmatpush1.bf16.msra.mxu0 %v356
  %377 = vmatprep.subr.bf16.mxu0 0
  %378 = vmatpush1.bf16.msra.mxu0 %v355
  %379 = vmatprep.subr.bf16.mxu0 0
  %380 = vmatpush2.bf16.msra.mxu0 0
  %381 = vmatprep.subr.bf16.mxu0 0
  %382 = vmatpush2.bf16.msra.mxu0 0
  %383 = vmatprep.subr.bf16.mxu0 0
  %384 = vmatpush2.bf16.msra.mxu0 0
  %385 = vmatprep.subr.bf16.mxu0 0
  %386 = vmatpush2.bf16.msra.mxu0 0
  %387 = vmatprep.subr.bf16.mxu0 0
  %388 = vmatpush2.bf16.msra.mxu0 0
  %389 = vmatprep.subr.bf16.mxu0 0
  %390 = vmatpush2.bf16.msra.mxu0 0
  %391 = vmatprep.subr.bf16.mxu0 0
  %392 = vmatpush2.bf16.msra.mxu0 0
  %393 = vmatprep.subr.bf16.mxu0 0
  %394 = vmatpush2.bf16.msra.mxu0 0
  %395 = vmatprep.mubr.bf16.mxu0 0
  %396 = vmatmul.mubr.bf16.gmra.mxu0 %v361
  %v397 = vpop.f32.mrf.mxu0
  %v398 = vadd.f32 %v345, %v397
  %v399 = vpop.f32.mrf.mxu0
  %v400 = vpop.f32.mrf.mxu0
  %v401 = vpop.f32.mrf.mxu0
  %402 = vdwg.mxu0
  %403 = vst [vmem:[%s5] sm:$0xf] %v398
  // Predicated region
  $region22: #{actor_impala_forward.7} parent=0 // pred_check
    _
  $region23: #{actor_impala_forward.7} parent=0 // pred_check_branch
    %405 = sbr.rel (0) target = $region25
  $region24: #{actor_impala_forward.7} parent=0 // pred_region
    _
  $region25: #{actor_impala_forward.7} parent=0 // pred_fallthru
    _
  // Predicated region
  $region26: #{actor_impala_forward.7} parent=0 // pred_check
    _
  $region27: #{actor_impala_forward.7} parent=0 // pred_check_branch
    %407 = sbr.rel (0) target = $region29
  $region28: #{actor_impala_forward.7} parent=0 // pred_region
    _
  $region29: #{actor_impala_forward.7} parent=0 // pred_fallthru
    _

// kernel: actor_impala_forward.9
$region0: #{actor_impala_forward.9}
  #allocation0 [shape = 'u32[]', space=smem, size = 0x4, offset = 0x4, fixed_abs, tag = 'smem constant byte address 0x4 - core index']
  #allocation1 [shape = 'u32[144,128]{1,0:T(1,128)}', space=vmem, size = 0x12000, scoped, tag = 'internal scratch']
  %s0 = inlined_call_operand.vmem [shape: bf16[4,32], index: 0, kind: input, shape index: {}]
  %s1 = inlined_call_operand.vmem [shape: bf16[32,128], index: 1, kind: input, shape index: {}]
  %s2 = inlined_call_operand.vmem [shape: f32[1,128], index: 2, kind: input, shape index: {}]
  %s3 = inlined_call_operand.vmem [shape: bf16[128,64], index: 3, kind: input, shape index: {}]
  %s4 = inlined_call_operand.vmem [shape: f32[1,64], index: 4, kind: input, shape index: {}]
  %s5 = inlined_call_operand.vmem [shape: bf16[64,128], index: 5, kind: input, shape index: {}]
  %s6 = inlined_call_operand.vmem [shape: f32[1,128], index: 6, kind: input, shape index: {}]
  %s7 = inlined_call_operand.hbm [shape: f32[4,128], index: 7, kind: output, shape index: {}]
  %s8 = sld [smem:[#allocation0]]
  $region38: #{actor_impala_forward.9} parent=0
    _
  %s10 = ssub.s32 1, %s8
  %s11 = scalar_select 0, %s10, %s8
  $region1: #{actor_impala_forward.9} parent=0
    #allocation2 [shape = 'u8[2048]{0}', space=vmem, size = 0x800, scoped, tag = 'output window, operand 0, single buffered']
    #allocation3 [shape = 's32[1]{0}', space=sflag, size = 0x4, scoped, tag = 'scoped memory for actor_impala_forward.9']
    %12 = vsyncpa [#allocation3], 0
    // Predicated region
    $region2: #{actor_impala_forward.9} parent=1 // pred_check
      _
    $region3: #{actor_impala_forward.9} parent=1 // pred_check_branch
      %14 = sbr.rel (0) target = $region5
    $region4: #{actor_impala_forward.9} parent=1 // pred_region
      _
    $region5: #{actor_impala_forward.9} parent=1 // pred_fallthru
      _
    // Predicated region
    $region6: #{actor_impala_forward.9} parent=1 // pred_check
      _
    $region7: #{actor_impala_forward.9} parent=1 // pred_check_branch
      %16 = sbr.rel (0) target = $region9
    $region8: #{actor_impala_forward.9} parent=1 // pred_region
      _
    $region9: #{actor_impala_forward.9} parent=1 // pred_fallthru
      _
    // Predicated region
    $region10: #{actor_impala_forward.9} parent=1 // pred_check
      _
    $region11: #{actor_impala_forward.9} parent=1 // pred_check_branch
      %18 = sbr.rel (0) target = $region13
    $region12: #{actor_impala_forward.9} parent=1 // pred_region
      _
    $region13: #{actor_impala_forward.9} parent=1 // pred_fallthru
      _
    // Predicated region
    $region14: #{actor_impala_forward.9} parent=1 // pred_check
      _
    $region15: #{actor_impala_forward.9} parent=1 // pred_check_branch
      %20 = sbr.rel (0) target = $region17
    $region16: #{actor_impala_forward.9} parent=1 // pred_region
      _
    $region17: #{actor_impala_forward.9} parent=1 // pred_fallthru
      _
    // Predicated region
    $region18: #{actor_impala_forward.9} parent=1 // pred_check
      _
    $region19: #{actor_impala_forward.9} parent=1 // pred_check_branch
      %22 = sbr.rel (0) target = $region21
    $region20: #{actor_impala_forward.9} parent=1 // pred_region
      _
    $region21: #{actor_impala_forward.9} parent=1 // pred_fallthru
      _
    // Predicated region
    $region22: #{actor_impala_forward.9} parent=1 // pred_check
      _
    $region23: #{actor_impala_forward.9} parent=1 // pred_check_branch
      %24 = sbr.rel (0) target = $region25
    $region24: #{actor_impala_forward.9} parent=1 // pred_region
      _
    $region25: #{actor_impala_forward.9} parent=1 // pred_fallthru
      _
    // Predicated region
    $region26: #{actor_impala_forward.9} parent=1 // pred_check
      _
    $region27: #{actor_impala_forward.9} parent=1 // pred_check_branch
      %26 = sbr.rel (0) target = $region29
    $region28: #{actor_impala_forward.9} parent=1 // pred_region
      _
    $region29: #{actor_impala_forward.9} parent=1 // pred_fallthru
      _
    %v28 = vld [vmem:[%s0] sm:$0x3]
    %v29 = vld [vmem:[%s1] sm:$0xf]
    %v30 = vld [vmem:[%s1 + $0x4] sm:$0xf]
    %v31 = vld [vmem:[%s1 + $0x8] sm:$0xf]
    %v32 = vld [vmem:[%s1 + $0xc] sm:$0xf]
    %v33 = vld [vmem:[%s2] sm:$0x1]
    %v35 = vlaneseq
    %v36 = vshrl.u32 %v35, 7
    %v37 = vsub.s32 0, %v36
    %v38 = vrot.slane %v33, %v37
    %v44 = vunpack.c.l.b16 %v29
    %v45 = vunpack.c.l.b16 %v30
    %v46 = vunpack.c.l.b16 %v31
    %v47 = vunpack.c.l.b16 %v32
    %v48 = vpack.c.b16 %v45, %v44
    %v49 = vpack.c.b16 %v47, %v46
    %vm52 = vcmask 261120
    %v54 = vsel %vm52, %v28, 0
    %56 = vmatprep.subr.bf16.mxu0 0
    %57 = vmatpush1.bf16.msra.mxu0 0
    %58 = vmatprep.subr.bf16.mxu0 0
    %59 = vmatpush1.bf16.msra.mxu0 0
    %60 = vmatprep.subr.bf16.mxu0 0
    %61 = vmatpush1.bf16.msra.mxu0 0
    %62 = vmatprep.subr.bf16.mxu0 0
    %63 = vmatpush1.bf16.msra.mxu0 0
    %64 = vmatprep.subr.bf16.mxu0 0
    %65 = vmatpush1.bf16.msra.mxu0 0
    %66 = vmatprep.subr.bf16.mxu0 0
    %67 = vmatpush1.bf16.msra.mxu0 0
    %68 = vmatprep.subr.bf16.mxu0 0
    %69 = vmatpush1.bf16.msra.mxu0 %v49
    %70 = vmatprep.subr.bf16.mxu0 0
    %71 = vmatpush1.bf16.msra.mxu0 %v48
    %72 = vmatprep.subr.bf16.mxu0 0
    %73 = vmatpush2.bf16.msra.mxu0 0
    %74 = vmatprep.subr.bf16.mxu0 0
    %75 = vmatpush2.bf16.msra.mxu0 0
    %76 = vmatprep.subr.bf16.mxu0 0
    %77 = vmatpush2.bf16.msra.mxu0 0
    %78 = vmatprep.subr.bf16.mxu0 0
    %79 = vmatpush2.bf16.msra.mxu0 0
    %80 = vmatprep.subr.bf16.mxu0 0
    %81 = vmatpush2.bf16.msra.mxu0 0
    %82 = vmatprep.subr.bf16.mxu0 0
    %83 = vmatpush2.bf16.msra.mxu0 0
    %84 = vmatprep.subr.bf16.mxu0 0
    %85 = vmatpush2.bf16.msra.mxu0 0
    %86 = vmatprep.subr.bf16.mxu0 0
    %87 = vmatpush2.bf16.msra.mxu0 0
    %88 = vmatprep.mubr.bf16.mxu0 0
    %89 = vmatmul.mubr.bf16.gmra.mxu0 %v54
    %v90 = vpop.f32.mrf.mxu0
    %v91 = vadd.f32 %v38, %v90
    %v92 = vpop.f32.mrf.mxu0
    %v93 = vpop.f32.mrf.mxu0
    %v94 = vpop.f32.mrf.mxu0
    %95 = vdwg.mxu0
    %v96 = vmax.f32 %v91, 0.0
    %v97 = vld [vmem:[%s3] sm:$0xf]
    %v98 = vld [vmem:[%s3 + $0x4] sm:$0xf]
    %v99 = vld [vmem:[%s3 + $0x8] sm:$0xf]
    %v100 = vld [vmem:[%s3 + $0xc] sm:$0xf]
    %v101 = vld [vmem:[%s3 + $0x10] sm:$0xf]
    %v102 = vld [vmem:[%s3 + $0x14] sm:$0xf]
    %v103 = vld [vmem:[%s3 + $0x18] sm:$0xf]
    %v104 = vld [vmem:[%s3 + $0x1c] sm:$0xf]
    %v105 = vld [vmem:[%s3 + $0x20] sm:$0xf]
    %v106 = vld [vmem:[%s3 + $0x24] sm:$0xf]
    %v107 = vld [vmem:[%s3 + $0x28] sm:$0xf]
    %v108 = vld [vmem:[%s3 + $0x2c] sm:$0xf]
    %v109 = vld [vmem:[%s3 + $0x30] sm:$0xf]
    %v110 = vld [vmem:[%s3 + $0x34] sm:$0xf]
    %v111 = vld [vmem:[%s3 + $0x38] sm:$0xf]
    %v112 = vld [vmem:[%s3 + $0x3c] sm:$0xf]
    %v113 = vld [vmem:[%s4] sm:$0x1]
    %v114 = vpack.c.bf16 %v96, %v96
    %v116 = vlaneseq
    %v117 = vshrl.u32 %v116, 7
    %v118 = vsub.s32 0, %v117
    %v119 = vrot.slane %v113, %v118
    %v137 = vunpack.c.l.b16 %v97
    %v138 = vunpack.c.l.b16 %v98
    %v139 = vunpack.c.l.b16 %v99
    %v140 = vunpack.c.l.b16 %v100
    %v141 = vunpack.c.l.b16 %v101
    %v142 = vunpack.c.l.b16 %v102
    %v143 = vunpack.c.l.b16 %v103
    %v144 = vunpack.c.l.b16 %v104
    %v145 = vunpack.c.l.b16 %v105
    %v146 = vunpack.c.l.b16 %v106
    %v147 = vunpack.c.l.b16 %v107
    %v148 = vunpack.c.l.b16 %v108
    %v149 = vunpack.c.l.b16 %v109
    %v150 = vunpack.c.l.b16 %v110
    %v151 = vunpack.c.l.b16 %v111
    %v152 = vunpack.c.l.b16 %v112
    %v153 = vpack.c.b16 %v138, %v137
    %v154 = vpack.c.b16 %v140, %v139
    %v155 = vpack.c.b16 %v142, %v141
    %v156 = vpack.c.b16 %v144, %v143
    %v157 = vpack.c.b16 %v146, %v145
    %v158 = vpack.c.b16 %v148, %v147
    %v159 = vpack.c.b16 %v150, %v149
    %v160 = vpack.c.b16 %v152, %v151
    %169 = vmatprep.subr.bf16.mxu0 0
    %170 = vmatpush1.bf16.msra.mxu0 %v160
    %171 = vmatprep.subr.bf16.mxu0 0
    %172 = vmatpush1.bf16.msra.mxu0 %v159
    %173 = vmatprep.subr.bf16.mxu0 0
    %174 = vmatpush1.bf16.msra.mxu0 %v158
    %175 = vmatprep.subr.bf16.mxu0 0
    %176 = vmatpush1.bf16.msra.mxu0 %v157
    %177 = vmatprep.subr.bf16.mxu0 0
    %178 = vmatpush1.bf16.msra.mxu0 %v156
    %179 = vmatprep.subr.bf16.mxu0 0
    %180 = vmatpush1.bf16.msra.mxu0 %v155
    %181 = vmatprep.subr.bf16.mxu0 0
    %182 = vmatpush1.bf16.msra.mxu0 %v154
    %183 = vmatprep.subr.bf16.mxu0 0
    %184 = vmatpush1.bf16.msra.mxu0 %v153
    %185 = vmatprep.subr.bf16.mxu0 0
    %186 = vmatpush2.bf16.msra.mxu0 0
    %187 = vmatprep.subr.bf16.mxu0 0
    %188 = vmatpush2.bf16.msra.mxu0 0
    %189 = vmatprep.subr.bf16.mxu0 0
    %190 = vmatpush2.bf16.msra.mxu0 0
    %191 = vmatprep.subr.bf16.mxu0 0
    %192 = vmatpush2.bf16.msra.mxu0 0
    %193 = vmatprep.subr.bf16.mxu0 0
    %194 = vmatpush2.bf16.msra.mxu0 0
    %195 = vmatprep.subr.bf16.mxu0 0
    %196 = vmatpush2.bf16.msra.mxu0 0
    %197 = vmatprep.subr.bf16.mxu0 0
    %198 = vmatpush2.bf16.msra.mxu0 0
    %199 = vmatprep.subr.bf16.mxu0 0
    %200 = vmatpush2.bf16.msra.mxu0 0
    %201 = vmatprep.mubr.bf16.mxu0 0
    %202 = vmatmul.mubr.bf16.gmra.mxu0 %v114
    %v203 = vpop.f32.mrf.mxu0
    %v204 = vadd.f32 %v119, %v203
    %v205 = vpop.f32.mrf.mxu0
    %v206 = vpop.f32.mrf.mxu0
    %v207 = vpop.f32.mrf.mxu0
    %208 = vdwg.mxu0
    %v209 = vmax.f32 %v204, 0.0
    %v210 = vld [vmem:[%s5] sm:$0xf]
    %v211 = vld [vmem:[%s5 + $0x4] sm:$0xf]
    %v212 = vld [vmem:[%s5 + $0x8] sm:$0xf]
    %v213 = vld [vmem:[%s5 + $0xc] sm:$0xf]
    %v214 = vld [vmem:[%s5 + $0x10] sm:$0xf]
    %v215 = vld [vmem:[%s5 + $0x14] sm:$0xf]
    %v216 = vld [vmem:[%s5 + $0x18] sm:$0xf]
    %v217 = vld [vmem:[%s5 + $0x1c] sm:$0xf]
    %v218 = vld [vmem:[%s6] sm:$0x1]
    %v219 = vpack.c.bf16 %v209, %v209
    %v221 = vlaneseq
    %v222 = vshrl.u32 %v221, 7
    %v223 = vsub.s32 0, %v222
    %v224 = vrot.slane %v218, %v223
    %v234 = vunpack.c.l.b16 %v210
    %v235 = vunpack.c.l.b16 %v211
    %v236 = vunpack.c.l.b16 %v212
    %v237 = vunpack.c.l.b16 %v213
    %v238 = vunpack.c.l.b16 %v214
    %v239 = vunpack.c.l.b16 %v215
    %v240 = vunpack.c.l.b16 %v216
    %v241 = vunpack.c.l.b16 %v217
    %v242 = vpack.c.b16 %v235, %v234
    %v243 = vpack.c.b16 %v237, %v236
    %v244 = vpack.c.b16 %v239, %v238
    %v245 = vpack.c.b16 %v241, %v240
    %vm250 = vcmask 523264
    %v252 = vsel %vm250, %v219, 0
    %254 = vmatprep.subr.bf16.mxu0 0
    %255 = vmatpush1.bf16.msra.mxu0 0
    %256 = vmatprep.subr.bf16.mxu0 0
    %257 = vmatpush1.bf16.msra.mxu0 0
    %258 = vmatprep.subr.bf16.mxu0 0
    %259 = vmatpush1.bf16.msra.mxu0 0
    %260 = vmatprep.subr.bf16.mxu0 0
    %261 = vmatpush1.bf16.msra.mxu0 0
    %262 = vmatprep.subr.bf16.mxu0 0
    %263 = vmatpush1.bf16.msra.mxu0 %v245
    %264 = vmatprep.subr.bf16.mxu0 0
    %265 = vmatpush1.bf16.msra.mxu0 %v244
    %266 = vmatprep.subr.bf16.mxu0 0
    %267 = vmatpush1.bf16.msra.mxu0 %v243
    %268 = vmatprep.subr.bf16.mxu0 0
    %269 = vmatpush1.bf16.msra.mxu0 %v242
    %270 = vmatprep.subr.bf16.mxu0 0
    %271 = vmatpush2.bf16.msra.mxu0 0
    %272 = vmatprep.subr.bf16.mxu0 0
    %273 = vmatpush2.bf16.msra.mxu0 0
    %274 = vmatprep.subr.bf16.mxu0 0
    %275 = vmatpush2.bf16.msra.mxu0 0
    %276 = vmatprep.subr.bf16.mxu0 0
    %277 = vmatpush2.bf16.msra.mxu0 0
    %278 = vmatprep.subr.bf16.mxu0 0
    %279 = vmatpush2.bf16.msra.mxu0 0
    %280 = vmatprep.subr.bf16.mxu0 0
    %281 = vmatpush2.bf16.msra.mxu0 0
    %282 = vmatprep.subr.bf16.mxu0 0
    %283 = vmatpush2.bf16.msra.mxu0 0
    %284 = vmatprep.subr.bf16.mxu0 0
    %285 = vmatpush2.bf16.msra.mxu0 0
    %286 = vmatprep.mubr.bf16.mxu0 0
    %287 = vmatmul.mubr.bf16.gmra.mxu0 %v252
    %v288 = vpop.f32.mrf.mxu0
    %v289 = vadd.f32 %v224, %v288
    %v290 = vpop.f32.mrf.mxu0
    %v291 = vpop.f32.mrf.mxu0
    %v292 = vpop.f32.mrf.mxu0
    %293 = vdwg.mxu0
    %294 = vst [vmem:[#allocation2] sm:$0xf] %v289
    // Predicated region
    $region30: #{actor_impala_forward.9} parent=1 // pred_check
      _
    $region31: #{actor_impala_forward.9} parent=1 // pred_check_branch
      %296 = sbr.rel (0) target = $region33
    $region32: #{actor_impala_forward.9} parent=1 // pred_region
      %s298 = ssub.s32 64, 64
      %299 = vsyncadd [#allocation3], %s298
      %s301 = sshll.u32 [#allocation2], 4
      %s302 = int_to_ptr.vmem [resolvable:$true] %s301
      %304 = dma.vmem_to_hbm [thread:$0]  %s302, 64, %s7, [#allocation3]
    $region33: #{actor_impala_forward.9} parent=1 // pred_fallthru
      _
    // Predicated region
    $region34: #{actor_impala_forward.9} parent=1 // pred_check
      _
    $region35: #{actor_impala_forward.9} parent=1 // pred_check_branch
      %306 = sbr.rel (0) target = $region37
    $region36: #{actor_impala_forward.9} parent=1 // pred_region
      %307 = dma.done [#allocation3], 64
    $region37: #{actor_impala_forward.9} parent=1 // pred_fallthru
      _
    %308 = vsyncpa [#allocation3], 1

</llo_original>
